<compile_context>
chip_gen: v5e
topology: v5e:2x2
jax: 0.10.0
libtpu: 0.0.40
codegen_flags: <defaults>
</compile_context>

<pallas_src>
import functools

import jax
import jax.numpy as jnp
from jax.experimental import pallas as pl
from jax.experimental.pallas import tpu as pltpu


def _round_up(x, m):
    return (x + m - 1) // m * m


# ----------------------------------------------------------------------------
# Pallas kernel: fused GEMM + bias + activation (the conv hot path)
#   p_ref : (TM, K) bf16  streamed patch tile (double-buffered by the pipeline)
#   w_ref : (K,  N) bf16  resident weight (index_map constant -> loaded once)
#   b_ref : (1,  N) f32   resident bias
#   o_ref : (TM, N) f32   output tile
# ----------------------------------------------------------------------------
def _gemm_bias_act_kernel(p_ref, w_ref, b_ref, o_ref, *, act):
    acc = jnp.dot(p_ref[...], w_ref[...], preferred_element_type=jnp.float32)
    acc = acc + b_ref[...]                      # (1, N) broadcasts over rows
    if act == "relu":
        acc = jnp.maximum(acc, 0.0)             # VPU
    elif act == "tanh":
        acc = jnp.tanh(acc)                     # EUP
    o_ref[...] = acc.astype(o_ref.dtype)


def gemm_bias_act(p, w_t, b, act, *, tm=256):
    """act(p @ w_t + b).  p: (M, K) f32, w_t: (K, N) f32, b: (N,) -> (M, N) f32."""
    M, K = p.shape
    N = w_t.shape[1]

    # bf16 operands pack 16 rows per sublane tile; round tiny K (enc1: K=27)
    # up to 16.  Zero K-padding contributes nothing to the contraction.
    Kp = _round_up(K, 16)
    # Lane-dense output stores: narrow N (enc1: 64, dec3: 12) would emit
    # masked partial `vst.msk`s.  Pad to 128 with zero weight/bias columns;
    # MXU work is identical and the post-kernel column slice fuses into the
    # caller's reshape / depth-to-space transpose.
    Np = _round_up(N, 128) if N < 128 else N

    if Kp != K:
        p = jnp.pad(p, ((0, 0), (0, Kp - K)))
        w_t = jnp.pad(w_t, ((0, Kp - K), (0, 0)))
    if Np != N:
        w_t = jnp.pad(w_t, ((0, 0), (0, Np - N)))
        b = jnp.pad(b, (0, Np - N))

    p_bf = p.astype(jnp.bfloat16)
    w_bf = w_t.astype(jnp.bfloat16)
    b2 = b.reshape(1, Np).astype(jnp.float32)

    tm = min(tm, _round_up(M, 8))
    grid = (pl.cdiv(M, tm),)

    cost = pl.CostEstimate(
        flops=2 * M * Kp * Np,
        transcendentals=(M * Np) if act == "tanh" else 0,
        bytes_accessed=2 * (M * Kp + Kp * Np) + 4 * (M * Np + Np),
    )

    out = pl.pallas_call(
        functools.partial(_gemm_bias_act_kernel, act=act),
        out_shape=jax.ShapeDtypeStruct((M, Np), jnp.float32),
        grid=grid,
        in_specs=[
            pl.BlockSpec((tm, Kp), lambda i: (i, 0)),   # streamed over M
            pl.BlockSpec((Kp, Np), lambda i: (0, 0)),   # resident weight
            pl.BlockSpec((1, Np), lambda i: (0, 0)),    # resident bias
        ],
        out_specs=pl.BlockSpec((tm, Np), lambda i: (i, 0)),
        compiler_params=pltpu.CompilerParams(
            dimension_semantics=("parallel",),
        ),
        cost_estimate=cost,
    )(p_bf, w_bf, b2)

    if Np != N:
        out = out[:, :N]
    return out


# ----------------------------------------------------------------------------
# Plain-JAX glue (NHWC): im2col for the strided encoder convs
# ----------------------------------------------------------------------------
def _im2col_nhwc(x, k, stride, pad):
    """x: (N, H, W, C) -> patches (N*Ho*Wo, k*k*C), row layout (kh, kw, c)."""
    N, H, W, C = x.shape
    xp = jnp.pad(x, ((0, 0), (pad, pad), (pad, pad), (0, 0)))
    Ho = (H + 2 * pad - k) // stride + 1
    Wo = (W + 2 * pad - k) // stride + 1
    cols = []
    for i in range(k):
        for j in range(k):
            cols.append(
                xp[:, i:i + stride * (Ho - 1) + 1:stride,
                      j:j + stride * (Wo - 1) + 1:stride, :])  # (N, Ho, Wo, C)
    p = jnp.stack(cols, axis=3)                  # (N, Ho, Wo, k*k, C)
    p = p.reshape(N * Ho * Wo, k * k * C)
    return p, Ho, Wo


def conv2d_nhwc(x, w, b, stride, pad, act):
    """PyTorch-semantics Conv2d on NHWC input.  w: (Cout, Cin, k, k)."""
    N = x.shape[0]
    Cout, Cin, k, _ = w.shape
    p, Ho, Wo = _im2col_nhwc(x, k, stride, pad)
    # (Cout, Cin, kh, kw) -> (kh, kw, Cin, Cout) -> (k*k*Cin, Cout): matches
    # the (kh, kw, c) patch ordering.
    w_t = w.transpose(2, 3, 1, 0).reshape(k * k * Cin, Cout)
    out = gemm_bias_act(p, w_t, b, act)          # (N*Ho*Wo, Cout)
    return out.reshape(N, Ho, Wo, Cout)


# ----------------------------------------------------------------------------
# Decoder: ConvTranspose2d(k=3, s=2, p=1, output_padding=1) as sub-pixel conv
# ----------------------------------------------------------------------------
def _subpixel_weight_bias(w, b):
    """Build the combined sub-pixel GEMM weight/bias.

    w: (Cin, Cout, 3, 3), b: (Cout,).
    Output pixel y[2i+r, 2j+s, co] = sum_{di,dj,ci} x[i+di, j+dj, ci] *
    w[ci, co, kh(r,di), kw(s,dj)] + b[co], with kh/kw from the transposed-conv
    geometry (stride 2, pad 1); unused (r, d) pairs get zero weight.
    Returns w_comb: (4*Cin, 4*Cout) rows (di, dj, ci), cols (r, s, co);
            b_comb: (4*Cout,).
    """
    Cin, Cout = w.shape[0], w.shape[1]
    kmap = {(0, 0): 1, (1, 0): 2, (1, 1): 0}     # (sub-pixel r, tap d) -> k idx
    w_comb = jnp.zeros((2, 2, Cin, 2, 2, Cout), w.dtype)
    for r in range(2):
        for s in range(2):
            for di in range(2):
                for dj in range(2):
                    kh = kmap.get((r, di))
                    kw = kmap.get((s, dj))
                    if kh is None or kw is None:
                        continue
                    w_comb = w_comb.at[di, dj, :, r, s, :].set(w[:, :, kh, kw])
    w_comb = w_comb.reshape(4 * Cin, 4 * Cout)
    b_comb = jnp.tile(b, 4)                      # (r, s, co) with co fastest
    return w_comb, b_comb


def conv_transpose2d_nhwc(x, w, b, act):
    """PyTorch ConvTranspose2d(3, s=2, p=1, op=1) on NHWC, sub-pixel form."""
    N, H, W, Cin = x.shape
    Cout = w.shape[1]
    # One zero row/col on bottom/right covers the i+1 / j+1 taps at the edge.
    xp = jnp.pad(x, ((0, 0), (0, 1), (0, 1), (0, 0)))
    taps = [xp[:, di:di + H, dj:dj + W, :] for di in range(2) for dj in range(2)]
    p = jnp.stack(taps, axis=3).reshape(N * H * W, 4 * Cin)   # (di, dj, ci)
    w_comb, b_comb = _subpixel_weight_bias(w, b)
    out = gemm_bias_act(p, w_comb, b_comb, act)               # (N*H*W, 4*Cout)
    # depth-to-space: (N, i, j, r, s, co) -> (N, 2H, 2W, Cout)
    out = out.reshape(N, H, W, 2, 2, Cout)
    out = out.transpose(0, 1, 3, 2, 4, 5).reshape(N, 2 * H, 2 * W, Cout)
    return out


# ----------------------------------------------------------------------------
# Model: deterministic parameters + forward pass
# ----------------------------------------------------------------------------
def init_params(key):
    def conv_init(key, cout, cin, k):
        k1, k2 = jax.random.split(key)
        scale = 1.0 / jnp.sqrt(cin * k * k)
        w = jax.random.uniform(k1, (cout, cin, k, k), jnp.float32, -scale, scale)
        b = jax.random.uniform(k2, (cout,), jnp.float32, -scale, scale)
        return w, b

    def convt_init(key, cin, cout, k):
        k1, k2 = jax.random.split(key)
        scale = 1.0 / jnp.sqrt(cout * k * k)
        w = jax.random.uniform(k1, (cin, cout, k, k), jnp.float32, -scale, scale)
        b = jax.random.uniform(k2, (cout,), jnp.float32, -scale, scale)
        return w, b

    keys = jax.random.split(key, 6)
    return {
        "enc1": conv_init(keys[0], 64, 3, 3),
        "enc2": conv_init(keys[1], 128, 64, 3),
        "enc3": conv_init(keys[2], 256, 128, 3),
        "dec1": convt_init(keys[3], 256, 128, 3),
        "dec2": convt_init(keys[4], 128, 64, 3),
        "dec3": convt_init(keys[5], 64, 3, 3),
    }


def autoencoder_forward(params, x_nchw):
    # NCHW only at the external (PyTorch) boundary; NHWC inside.
    x = x_nchw.transpose(0, 2, 3, 1)
    # encoder: Conv2d(k=3, s=2, p=1) + ReLU   (H, W halve each layer)
    x = conv2d_nhwc(x, *params["enc1"], stride=2, pad=1, act="relu")
    x = conv2d_nhwc(x, *params["enc2"], stride=2, pad=1, act="relu")
    x = conv2d_nhwc(x, *params["enc3"], stride=2, pad=1, act="relu")
    # decoder: ConvTranspose2d(k=3, s=2, p=1, op=1) + ReLU / tanh (sub-pixel)
    x = conv_transpose2d_nhwc(x, *params["dec1"], act="relu")
    x = conv_transpose2d_nhwc(x, *params["dec2"], act="relu")
    x = conv_transpose2d_nhwc(x, *params["dec3"], act="tanh")
    return x.transpose(0, 3, 1, 2)


if __name__ == "__main__":
    key = jax.random.PRNGKey(0)
    pkey, xkey = jax.random.split(key)
    params = init_params(pkey)
    x = jax.random.normal(xkey, (2, 3, 16, 16), dtype=jnp.float32)  # NCHW

    fwd = jax.jit(autoencoder_forward)
    y = jax.block_until_ready(fwd(params, x))

    assert y.shape == x.shape, y.shape
    assert y.dtype == jnp.float32
    assert bool(jnp.all(jnp.abs(y) <= 1.0 + 1e-6))  # tanh output range
    print("KERNEL_OK")
</pallas_src>

<mosaic_0001>
module attributes {stable_mosaic.version = 11 : i64} {
  func.func @_gemm_bias_act_kernel(%arg0: i32, %arg1: memref<128x32xbf16, #tpu.memory_space<vmem>>, %arg2: memref<32x128xbf16, #tpu.memory_space<vmem>>, %arg3: memref<1x128xf32, #tpu.memory_space<vmem>>, %arg4: memref<128x128xf32, #tpu.memory_space<vmem>>) attributes {dimension_semantics = [#tpu.dimension_semantics<parallel>], iteration_bounds = array<i64: 1>, scalar_prefetch = 0 : i64, scratch_operands = 0 : i64, tpu.core_type = #tpu.core_type<tc>, window_params = [{transform_indices = @transform_0, window_bounds = array<i64: 128, 32>}, {pipeline_mode = #tpu.pipeline_mode<synchronous>, transform_indices = @transform_1, window_bounds = array<i64: 32, 128>}, {pipeline_mode = #tpu.pipeline_mode<synchronous>, transform_indices = @transform_2, window_bounds = array<i64: 1, 128>}, {transform_indices = @transform_3, window_bounds = array<i64: 128, 128>}]} {
    %c0 = arith.constant 0 : index
    %c0_0 = arith.constant 0 : index
    %0 = vector.load %arg1[%c0, %c0_0] : memref<128x32xbf16, #tpu.memory_space<vmem>>, vector<128x32xbf16>
    %c0_1 = arith.constant 0 : index
    %c0_2 = arith.constant 0 : index
    %1 = vector.load %arg2[%c0_1, %c0_2] : memref<32x128xbf16, #tpu.memory_space<vmem>>, vector<32x128xbf16>
    %cst = arith.constant dense<0.000000e+00> : vector<128x128xf32>
    %2 = tpu.matmul %0, %1, %cst {dimension_numbers = #tpu.dot_dimension_numbers<[1], [0], [0], [1], [0, 0, 1, 1], [], []>} : vector<128x32xbf16>, vector<32x128xbf16>, vector<128x128xf32> -> vector<128x128xf32>
    %c0_3 = arith.constant 0 : index
    %c0_4 = arith.constant 0 : index
    %3 = vector.load %arg3[%c0_3, %c0_4] : memref<1x128xf32, #tpu.memory_space<vmem>>, vector<1x128xf32>
    %4 = vector.broadcast %3 : vector<1x128xf32> to vector<128x128xf32>
    %5 = arith.addf %2, %4 : vector<128x128xf32>
    %cst_5 = arith.constant 0.000000e+00 : f32
    %6 = vector.broadcast %cst_5 : f32 to vector<128x128xf32>
    %7 = arith.maximumf %5, %6 : vector<128x128xf32>
    %c0_6 = arith.constant 0 : index
    %c0_7 = arith.constant 0 : index
    %8 = vector.load %arg4[%c0_6, %c0_7] : memref<128x128xf32, #tpu.memory_space<vmem>>, vector<128x128xf32>
    tpu.vector_store %arg4[%c0_6, %c0_7], %7 {strides = array<i32>} : memref<128x128xf32, #tpu.memory_space<vmem>>, vector<128x128xf32>,
    return
  }
  func.func @transform_0(%arg0: i32) -> (i32, i32) {
    %c0_i32 = arith.constant 0 : i32
    %c0_i32_0 = arith.constant 0 : i32
    return %arg0, %c0_i32 : i32, i32
  }
  func.func @transform_1(%arg0: i32) -> (i32, i32) {
    %c0_i32 = arith.constant 0 : i32
    %c0_i32_0 = arith.constant 0 : i32
    %c0_i32_1 = arith.constant 0 : i32
    return %c0_i32, %c0_i32_0 : i32, i32
  }
  func.func @transform_2(%arg0: i32) -> (i32, i32) {
    %c0_i32 = arith.constant 0 : i32
    %c0_i32_0 = arith.constant 0 : i32
    %c0_i32_1 = arith.constant 0 : i32
    return %c0_i32, %c0_i32_0 : i32, i32
  }
  func.func @transform_3(%arg0: i32) -> (i32, i32) {
    %c0_i32 = arith.constant 0 : i32
    %c0_i32_0 = arith.constant 0 : i32
    return %arg0, %c0_i32 : i32, i32
  }
}

module attributes {stable_mosaic.version = 11 : i64} {
  func.func @_gemm_bias_act_kernel(%arg0: i32, %arg1: memref<32x576xbf16, #tpu.memory_space<vmem>>, %arg2: memref<576x128xbf16, #tpu.memory_space<vmem>>, %arg3: memref<1x128xf32, #tpu.memory_space<vmem>>, %arg4: memref<32x128xf32, #tpu.memory_space<vmem>>) attributes {dimension_semantics = [#tpu.dimension_semantics<parallel>], iteration_bounds = array<i64: 1>, scalar_prefetch = 0 : i64, scratch_operands = 0 : i64, tpu.core_type = #tpu.core_type<tc>, window_params = [{transform_indices = @transform_0, window_bounds = array<i64: 32, 576>}, {pipeline_mode = #tpu.pipeline_mode<synchronous>, transform_indices = @transform_1, window_bounds = array<i64: 576, 128>}, {pipeline_mode = #tpu.pipeline_mode<synchronous>, transform_indices = @transform_2, window_bounds = array<i64: 1, 128>}, {transform_indices = @transform_3, window_bounds = array<i64: 32, 128>}]} {
    %c0 = arith.constant 0 : index
    %c0_0 = arith.constant 0 : index
    %0 = vector.load %arg1[%c0, %c0_0] : memref<32x576xbf16, #tpu.memory_space<vmem>>, vector<32x576xbf16>
    %c0_1 = arith.constant 0 : index
    %c0_2 = arith.constant 0 : index
    %1 = vector.load %arg2[%c0_1, %c0_2] : memref<576x128xbf16, #tpu.memory_space<vmem>>, vector<576x128xbf16>
    %cst = arith.constant dense<0.000000e+00> : vector<32x128xf32>
    %2 = tpu.matmul %0, %1, %cst {dimension_numbers = #tpu.dot_dimension_numbers<[1], [0], [0], [1], [0, 0, 1, 1], [], []>} : vector<32x576xbf16>, vector<576x128xbf16>, vector<32x128xf32> -> vector<32x128xf32>
    %c0_3 = arith.constant 0 : index
    %c0_4 = arith.constant 0 : index
    %3 = vector.load %arg3[%c0_3, %c0_4] : memref<1x128xf32, #tpu.memory_space<vmem>>, vector<1x128xf32>
    %4 = vector.broadcast %3 : vector<1x128xf32> to vector<32x128xf32>
    %5 = arith.addf %2, %4 : vector<32x128xf32>
    %cst_5 = arith.constant 0.000000e+00 : f32
    %6 = vector.broadcast %cst_5 : f32 to vector<32x128xf32>
    %7 = arith.maximumf %5, %6 : vector<32x128xf32>
    %c0_6 = arith.constant 0 : index
    %c0_7 = arith.constant 0 : index
    %8 = vector.load %arg4[%c0_6, %c0_7] : memref<32x128xf32, #tpu.memory_space<vmem>>, vector<32x128xf32>
    tpu.vector_store %arg4[%c0_6, %c0_7], %7 {strides = array<i32>} : memref<32x128xf32, #tpu.memory_space<vmem>>, vector<32x128xf32>,
    return
  }
  func.func @transform_0(%arg0: i32) -> (i32, i32) {
    %c0_i32 = arith.constant 0 : i32
    %c0_i32_0 = arith.constant 0 : i32
    return %arg0, %c0_i32 : i32, i32
  }
  func.func @transform_1(%arg0: i32) -> (i32, i32) {
    %c0_i32 = arith.constant 0 : i32
    %c0_i32_0 = arith.constant 0 : i32
    %c0_i32_1 = arith.constant 0 : i32
    return %c0_i32, %c0_i32_0 : i32, i32
  }
  func.func @transform_2(%arg0: i32) -> (i32, i32) {
    %c0_i32 = arith.constant 0 : i32
    %c0_i32_0 = arith.constant 0 : i32
    %c0_i32_1 = arith.constant 0 : i32
    return %c0_i32, %c0_i32_0 : i32, i32
  }
  func.func @transform_3(%arg0: i32) -> (i32, i32) {
    %c0_i32 = arith.constant 0 : i32
    %c0_i32_0 = arith.constant 0 : i32
    return %arg0, %c0_i32 : i32, i32
  }
}

module attributes {stable_mosaic.version = 11 : i64} {
  func.func @_gemm_bias_act_kernel(%arg0: i32, %arg1: memref<8x1152xbf16, #tpu.memory_space<vmem>>, %arg2: memref<1152x256xbf16, #tpu.memory_space<vmem>>, %arg3: memref<1x256xf32, #tpu.memory_space<vmem>>, %arg4: memref<8x256xf32, #tpu.memory_space<vmem>>) attributes {dimension_semantics = [#tpu.dimension_semantics<parallel>], iteration_bounds = array<i64: 1>, scalar_prefetch = 0 : i64, scratch_operands = 0 : i64, tpu.core_type = #tpu.core_type<tc>, window_params = [{transform_indices = @transform_0, window_bounds = array<i64: 8, 1152>}, {pipeline_mode = #tpu.pipeline_mode<synchronous>, transform_indices = @transform_1, window_bounds = array<i64: 1152, 256>}, {pipeline_mode = #tpu.pipeline_mode<synchronous>, transform_indices = @transform_2, window_bounds = array<i64: 1, 256>}, {transform_indices = @transform_3, window_bounds = array<i64: 8, 256>}]} {
    %c0 = arith.constant 0 : index
    %c0_0 = arith.constant 0 : index
    %0 = vector.load %arg1[%c0, %c0_0] : memref<8x1152xbf16, #tpu.memory_space<vmem>>, vector<8x1152xbf16>
    %c0_1 = arith.constant 0 : index
    %c0_2 = arith.constant 0 : index
    %1 = vector.load %arg2[%c0_1, %c0_2] : memref<1152x256xbf16, #tpu.memory_space<vmem>>, vector<1152x256xbf16>
    %cst = arith.constant dense<0.000000e+00> : vector<8x256xf32>
    %2 = tpu.matmul %0, %1, %cst {dimension_numbers = #tpu.dot_dimension_numbers<[1], [0], [0], [1], [0, 0, 1, 1], [], []>} : vector<8x1152xbf16>, vector<1152x256xbf16>, vector<8x256xf32> -> vector<8x256xf32>
    %c0_3 = arith.constant 0 : index
    %c0_4 = arith.constant 0 : index
    %3 = vector.load %arg3[%c0_3, %c0_4] : memref<1x256xf32, #tpu.memory_space<vmem>>, vector<1x256xf32>
    %4 = vector.broadcast %3 : vector<1x256xf32> to vector<8x256xf32>
    %5 = arith.addf %2, %4 : vector<8x256xf32>
    %cst_5 = arith.constant 0.000000e+00 : f32
    %6 = vector.broadcast %cst_5 : f32 to vector<8x256xf32>
    %7 = arith.maximumf %5, %6 : vector<8x256xf32>
    %c0_6 = arith.constant 0 : index
    %c0_7 = arith.constant 0 : index
    %8 = vector.load %arg4[%c0_6, %c0_7] : memref<8x256xf32, #tpu.memory_space<vmem>>, vector<8x256xf32>
    tpu.vector_store %arg4[%c0_6, %c0_7], %7 {strides = array<i32>} : memref<8x256xf32, #tpu.memory_space<vmem>>, vector<8x256xf32>,
    return
  }
  func.func @transform_0(%arg0: i32) -> (i32, i32) {
    %c0_i32 = arith.constant 0 : i32
    %c0_i32_0 = arith.constant 0 : i32
    return %arg0, %c0_i32 : i32, i32
  }
  func.func @transform_1(%arg0: i32) -> (i32, i32) {
    %c0_i32 = arith.constant 0 : i32
    %c0_i32_0 = arith.constant 0 : i32
    %c0_i32_1 = arith.constant 0 : i32
    return %c0_i32, %c0_i32_0 : i32, i32
  }
  func.func @transform_2(%arg0: i32) -> (i32, i32) {
    %c0_i32 = arith.constant 0 : i32
    %c0_i32_0 = arith.constant 0 : i32
    %c0_i32_1 = arith.constant 0 : i32
    return %c0_i32, %c0_i32_0 : i32, i32
  }
  func.func @transform_3(%arg0: i32) -> (i32, i32) {
    %c0_i32 = arith.constant 0 : i32
    %c0_i32_0 = arith.constant 0 : i32
    return %arg0, %c0_i32 : i32, i32
  }
}

module attributes {stable_mosaic.version = 11 : i64} {
  func.func @_gemm_bias_act_kernel(%arg0: i32, %arg1: memref<8x1024xbf16, #tpu.memory_space<vmem>>, %arg2: memref<1024x512xbf16, #tpu.memory_space<vmem>>, %arg3: memref<1x512xf32, #tpu.memory_space<vmem>>, %arg4: memref<8x512xf32, #tpu.memory_space<vmem>>) attributes {dimension_semantics = [#tpu.dimension_semantics<parallel>], iteration_bounds = array<i64: 1>, scalar_prefetch = 0 : i64, scratch_operands = 0 : i64, tpu.core_type = #tpu.core_type<tc>, window_params = [{transform_indices = @transform_0, window_bounds = array<i64: 8, 1024>}, {pipeline_mode = #tpu.pipeline_mode<synchronous>, transform_indices = @transform_1, window_bounds = array<i64: 1024, 512>}, {pipeline_mode = #tpu.pipeline_mode<synchronous>, transform_indices = @transform_2, window_bounds = array<i64: 1, 512>}, {transform_indices = @transform_3, window_bounds = array<i64: 8, 512>}]} {
    %c0 = arith.constant 0 : index
    %c0_0 = arith.constant 0 : index
    %0 = vector.load %arg1[%c0, %c0_0] : memref<8x1024xbf16, #tpu.memory_space<vmem>>, vector<8x1024xbf16>
    %c0_1 = arith.constant 0 : index
    %c0_2 = arith.constant 0 : index
    %1 = vector.load %arg2[%c0_1, %c0_2] : memref<1024x512xbf16, #tpu.memory_space<vmem>>, vector<1024x512xbf16>
    %cst = arith.constant dense<0.000000e+00> : vector<8x512xf32>
    %2 = tpu.matmul %0, %1, %cst {dimension_numbers = #tpu.dot_dimension_numbers<[1], [0], [0], [1], [0, 0, 1, 1], [], []>} : vector<8x1024xbf16>, vector<1024x512xbf16>, vector<8x512xf32> -> vector<8x512xf32>
    %c0_3 = arith.constant 0 : index
    %c0_4 = arith.constant 0 : index
    %3 = vector.load %arg3[%c0_3, %c0_4] : memref<1x512xf32, #tpu.memory_space<vmem>>, vector<1x512xf32>
    %4 = vector.broadcast %3 : vector<1x512xf32> to vector<8x512xf32>
    %5 = arith.addf %2, %4 : vector<8x512xf32>
    %cst_5 = arith.constant 0.000000e+00 : f32
    %6 = vector.broadcast %cst_5 : f32 to vector<8x512xf32>
    %7 = arith.maximumf %5, %6 : vector<8x512xf32>
    %c0_6 = arith.constant 0 : index
    %c0_7 = arith.constant 0 : index
    %8 = vector.load %arg4[%c0_6, %c0_7] : memref<8x512xf32, #tpu.memory_space<vmem>>, vector<8x512xf32>
    tpu.vector_store %arg4[%c0_6, %c0_7], %7 {strides = array<i32>} : memref<8x512xf32, #tpu.memory_space<vmem>>, vector<8x512xf32>,
    return
  }
  func.func @transform_0(%arg0: i32) -> (i32, i32) {
    %c0_i32 = arith.constant 0 : i32
    %c0_i32_0 = arith.constant 0 : i32
    return %arg0, %c0_i32 : i32, i32
  }
  func.func @transform_1(%arg0: i32) -> (i32, i32) {
    %c0_i32 = arith.constant 0 : i32
    %c0_i32_0 = arith.constant 0 : i32
    %c0_i32_1 = arith.constant 0 : i32
    return %c0_i32, %c0_i32_0 : i32, i32
  }
  func.func @transform_2(%arg0: i32) -> (i32, i32) {
    %c0_i32 = arith.constant 0 : i32
    %c0_i32_0 = arith.constant 0 : i32
    %c0_i32_1 = arith.constant 0 : i32
    return %c0_i32, %c0_i32_0 : i32, i32
  }
  func.func @transform_3(%arg0: i32) -> (i32, i32) {
    %c0_i32 = arith.constant 0 : i32
    %c0_i32_0 = arith.constant 0 : i32
    return %arg0, %c0_i32 : i32, i32
  }
}

module attributes {stable_mosaic.version = 11 : i64} {
  func.func @_gemm_bias_act_kernel(%arg0: i32, %arg1: memref<32x512xbf16, #tpu.memory_space<vmem>>, %arg2: memref<512x256xbf16, #tpu.memory_space<vmem>>, %arg3: memref<1x256xf32, #tpu.memory_space<vmem>>, %arg4: memref<32x256xf32, #tpu.memory_space<vmem>>) attributes {dimension_semantics = [#tpu.dimension_semantics<parallel>], iteration_bounds = array<i64: 1>, scalar_prefetch = 0 : i64, scratch_operands = 0 : i64, tpu.core_type = #tpu.core_type<tc>, window_params = [{transform_indices = @transform_0, window_bounds = array<i64: 32, 512>}, {pipeline_mode = #tpu.pipeline_mode<synchronous>, transform_indices = @transform_1, window_bounds = array<i64: 512, 256>}, {pipeline_mode = #tpu.pipeline_mode<synchronous>, transform_indices = @transform_2, window_bounds = array<i64: 1, 256>}, {transform_indices = @transform_3, window_bounds = array<i64: 32, 256>}]} {
    %c0 = arith.constant 0 : index
    %c0_0 = arith.constant 0 : index
    %0 = vector.load %arg1[%c0, %c0_0] : memref<32x512xbf16, #tpu.memory_space<vmem>>, vector<32x512xbf16>
    %c0_1 = arith.constant 0 : index
    %c0_2 = arith.constant 0 : index
    %1 = vector.load %arg2[%c0_1, %c0_2] : memref<512x256xbf16, #tpu.memory_space<vmem>>, vector<512x256xbf16>
    %cst = arith.constant dense<0.000000e+00> : vector<32x256xf32>
    %2 = tpu.matmul %0, %1, %cst {dimension_numbers = #tpu.dot_dimension_numbers<[1], [0], [0], [1], [0, 0, 1, 1], [], []>} : vector<32x512xbf16>, vector<512x256xbf16>, vector<32x256xf32> -> vector<32x256xf32>
    %c0_3 = arith.constant 0 : index
    %c0_4 = arith.constant 0 : index
    %3 = vector.load %arg3[%c0_3, %c0_4] : memref<1x256xf32, #tpu.memory_space<vmem>>, vector<1x256xf32>
    %4 = vector.broadcast %3 : vector<1x256xf32> to vector<32x256xf32>
    %5 = arith.addf %2, %4 : vector<32x256xf32>
    %cst_5 = arith.constant 0.000000e+00 : f32
    %6 = vector.broadcast %cst_5 : f32 to vector<32x256xf32>
    %7 = arith.maximumf %5, %6 : vector<32x256xf32>
    %c0_6 = arith.constant 0 : index
    %c0_7 = arith.constant 0 : index
    %8 = vector.load %arg4[%c0_6, %c0_7] : memref<32x256xf32, #tpu.memory_space<vmem>>, vector<32x256xf32>
    tpu.vector_store %arg4[%c0_6, %c0_7], %7 {strides = array<i32>} : memref<32x256xf32, #tpu.memory_space<vmem>>, vector<32x256xf32>,
    return
  }
  func.func @transform_0(%arg0: i32) -> (i32, i32) {
    %c0_i32 = arith.constant 0 : i32
    %c0_i32_0 = arith.constant 0 : i32
    return %arg0, %c0_i32 : i32, i32
  }
  func.func @transform_1(%arg0: i32) -> (i32, i32) {
    %c0_i32 = arith.constant 0 : i32
    %c0_i32_0 = arith.constant 0 : i32
    %c0_i32_1 = arith.constant 0 : i32
    return %c0_i32, %c0_i32_0 : i32, i32
  }
  func.func @transform_2(%arg0: i32) -> (i32, i32) {
    %c0_i32 = arith.constant 0 : i32
    %c0_i32_0 = arith.constant 0 : i32
    %c0_i32_1 = arith.constant 0 : i32
    return %c0_i32, %c0_i32_0 : i32, i32
  }
  func.func @transform_3(%arg0: i32) -> (i32, i32) {
    %c0_i32 = arith.constant 0 : i32
    %c0_i32_0 = arith.constant 0 : i32
    return %arg0, %c0_i32 : i32, i32
  }
}

module attributes {stable_mosaic.version = 11 : i64} {
  func.func @_gemm_bias_act_kernel(%arg0: i32, %arg1: memref<128x256xbf16, #tpu.memory_space<vmem>>, %arg2: memref<256x128xbf16, #tpu.memory_space<vmem>>, %arg3: memref<1x128xf32, #tpu.memory_space<vmem>>, %arg4: memref<128x128xf32, #tpu.memory_space<vmem>>) attributes {dimension_semantics = [#tpu.dimension_semantics<parallel>], iteration_bounds = array<i64: 1>, scalar_prefetch = 0 : i64, scratch_operands = 0 : i64, tpu.core_type = #tpu.core_type<tc>, window_params = [{transform_indices = @transform_0, window_bounds = array<i64: 128, 256>}, {pipeline_mode = #tpu.pipeline_mode<synchronous>, transform_indices = @transform_1, window_bounds = array<i64: 256, 128>}, {pipeline_mode = #tpu.pipeline_mode<synchronous>, transform_indices = @transform_2, window_bounds = array<i64: 1, 128>}, {transform_indices = @transform_3, window_bounds = array<i64: 128, 128>}]} {
    %c0 = arith.constant 0 : index
    %c0_0 = arith.constant 0 : index
    %0 = vector.load %arg1[%c0, %c0_0] : memref<128x256xbf16, #tpu.memory_space<vmem>>, vector<128x256xbf16>
    %c0_1 = arith.constant 0 : index
    %c0_2 = arith.constant 0 : index
    %1 = vector.load %arg2[%c0_1, %c0_2] : memref<256x128xbf16, #tpu.memory_space<vmem>>, vector<256x128xbf16>
    %cst = arith.constant dense<0.000000e+00> : vector<128x128xf32>
    %2 = tpu.matmul %0, %1, %cst {dimension_numbers = #tpu.dot_dimension_numbers<[1], [0], [0], [1], [0, 0, 1, 1], [], []>} : vector<128x256xbf16>, vector<256x128xbf16>, vector<128x128xf32> -> vector<128x128xf32>
    %c0_3 = arith.constant 0 : index
    %c0_4 = arith.constant 0 : index
    %3 = vector.load %arg3[%c0_3, %c0_4] : memref<1x128xf32, #tpu.memory_space<vmem>>, vector<1x128xf32>
    %4 = vector.broadcast %3 : vector<1x128xf32> to vector<128x128xf32>
    %5 = arith.addf %2, %4 : vector<128x128xf32>
    %6 = math.tanh %5 : vector<128x128xf32>
    %c0_5 = arith.constant 0 : index
    %c0_6 = arith.constant 0 : index
    %7 = vector.load %arg4[%c0_5, %c0_6] : memref<128x128xf32, #tpu.memory_space<vmem>>, vector<128x128xf32>
    tpu.vector_store %arg4[%c0_5, %c0_6], %6 {strides = array<i32>} : memref<128x128xf32, #tpu.memory_space<vmem>>, vector<128x128xf32>,
    return
  }
  func.func @transform_0(%arg0: i32) -> (i32, i32) {
    %c0_i32 = arith.constant 0 : i32
    %c0_i32_0 = arith.constant 0 : i32
    return %arg0, %c0_i32 : i32, i32
  }
  func.func @transform_1(%arg0: i32) -> (i32, i32) {
    %c0_i32 = arith.constant 0 : i32
    %c0_i32_0 = arith.constant 0 : i32
    %c0_i32_1 = arith.constant 0 : i32
    return %c0_i32, %c0_i32_0 : i32, i32
  }
  func.func @transform_2(%arg0: i32) -> (i32, i32) {
    %c0_i32 = arith.constant 0 : i32
    %c0_i32_0 = arith.constant 0 : i32
    %c0_i32_1 = arith.constant 0 : i32
    return %c0_i32, %c0_i32_0 : i32, i32
  }
  func.func @transform_3(%arg0: i32) -> (i32, i32) {
    %c0_i32 = arith.constant 0 : i32
    %c0_i32_0 = arith.constant 0 : i32
    return %arg0, %c0_i32 : i32, i32
  }
}

</mosaic_0001>

<llo_original>
// kernel: autoencoder_forward.6
$region0: #{autoencoder_forward.6}
  #allocation0 [shape = 'u32[]', space=smem, size = 0x4, offset = 0x4, fixed_abs, tag = 'smem constant byte address 0x4 - core index']
  #allocation1 [shape = 'u32[72,128]{1,0:T(1,128)}', space=vmem, size = 0x9000, scoped, tag = 'internal scratch']
  %s0 = inlined_call_operand.vmem [shape: bf16[128,32], index: 0, kind: input, shape index: {}]
  %s1 = inlined_call_operand.vmem [shape: bf16[32,128], index: 1, kind: input, shape index: {}]
  %s2 = inlined_call_operand.vmem [shape: f32[1,128], index: 2, kind: input, shape index: {}]
  %s3 = inlined_call_operand.vmem [shape: f32[128,128], index: 3, kind: output, shape index: {}]
  %s4 = sld [smem:[#allocation0]]
  $region22: #{autoencoder_forward.6} parent=0
    _
  %s6 = ssub.s32 1, %s4
  %s7 = scalar_select 0, %s6, %s4
  // Predicated region
  $region2: #{autoencoder_forward.6} parent=0 // pred_check
    _
  $region3: #{autoencoder_forward.6} parent=0 // pred_check_branch
    %9 = sbr.rel (0) target = $region5
  $region4: #{autoencoder_forward.6} parent=0 // pred_region
    _
  $region5: #{autoencoder_forward.6} parent=0 // pred_fallthru
    _
  // Predicated region
  $region6: #{autoencoder_forward.6} parent=0 // pred_check
    _
  $region7: #{autoencoder_forward.6} parent=0 // pred_check_branch
    %11 = sbr.rel (0) target = $region9
  $region8: #{autoencoder_forward.6} parent=0 // pred_region
    _
  $region9: #{autoencoder_forward.6} parent=0 // pred_fallthru
    _
  // Predicated region
  $region10: #{autoencoder_forward.6} parent=0 // pred_check
    _
  $region11: #{autoencoder_forward.6} parent=0 // pred_check_branch
    %13 = sbr.rel (0) target = $region13
  $region12: #{autoencoder_forward.6} parent=0 // pred_region
    _
  $region13: #{autoencoder_forward.6} parent=0 // pred_fallthru
    _
  %v15 = vld [vmem:[%s0] sm:$0xf]
  %v16 = vld [vmem:[%s0 + $0x4] sm:$0xf]
  %v17 = vld [vmem:[%s0 + $0x8] sm:$0xf]
  %v18 = vld [vmem:[%s0 + $0xc] sm:$0xf]
  %v19 = vld [vmem:[%s0 + $0x10] sm:$0xf]
  %v20 = vld [vmem:[%s0 + $0x14] sm:$0xf]
  %v21 = vld [vmem:[%s0 + $0x18] sm:$0xf]
  %v22 = vld [vmem:[%s0 + $0x1c] sm:$0xf]
  %v23 = vld [vmem:[%s0 + $0x20] sm:$0xf]
  %v24 = vld [vmem:[%s0 + $0x24] sm:$0xf]
  %v25 = vld [vmem:[%s0 + $0x28] sm:$0xf]
  %v26 = vld [vmem:[%s0 + $0x2c] sm:$0xf]
  %v27 = vld [vmem:[%s0 + $0x30] sm:$0xf]
  %v28 = vld [vmem:[%s0 + $0x34] sm:$0xf]
  %v29 = vld [vmem:[%s0 + $0x38] sm:$0xf]
  %v30 = vld [vmem:[%s0 + $0x3c] sm:$0xf]
  %v31 = vld [vmem:[%s1] sm:$0xf]
  %v32 = vld [vmem:[%s1 + $0x4] sm:$0xf]
  %v33 = vld [vmem:[%s1 + $0x8] sm:$0xf]
  %v34 = vld [vmem:[%s1 + $0xc] sm:$0xf]
  %v35 = vld [vmem:[%s2] sm:$0x1]
  %v37 = vperm.slane %v35, 0
  %v55 = vunpack.c.l.b16 %v15
  %v56 = vunpack.c.l.b16 %v16
  %v57 = vunpack.c.l.b16 %v17
  %v58 = vunpack.c.l.b16 %v18
  %v59 = vunpack.c.l.b16 %v19
  %v60 = vunpack.c.l.b16 %v20
  %v61 = vunpack.c.l.b16 %v21
  %v62 = vunpack.c.l.b16 %v22
  %v63 = vunpack.c.l.b16 %v23
  %v64 = vunpack.c.l.b16 %v24
  %v65 = vunpack.c.l.b16 %v25
  %v66 = vunpack.c.l.b16 %v26
  %v67 = vunpack.c.l.b16 %v27
  %v68 = vunpack.c.l.b16 %v28
  %v69 = vunpack.c.l.b16 %v29
  %v70 = vunpack.c.l.b16 %v30
  %v71 = vpack.c.b16 %v56, %v55
  %v72 = vpack.c.b16 %v58, %v57
  %v73 = vpack.c.b16 %v60, %v59
  %v74 = vpack.c.b16 %v62, %v61
  %v75 = vpack.c.b16 %v64, %v63
  %v76 = vpack.c.b16 %v66, %v65
  %v77 = vpack.c.b16 %v68, %v67
  %v78 = vpack.c.b16 %v70, %v69
  %v83 = vunpack.c.l.b16 %v31
  %v84 = vunpack.c.l.b16 %v32
  %v85 = vunpack.c.l.b16 %v33
  %v86 = vunpack.c.l.b16 %v34
  %v87 = vpack.c.b16 %v84, %v83
  %v88 = vpack.c.b16 %v86, %v85
  %vm91 = vcmask 261120
  %v93 = vsel %vm91, %v71, 0
  %v96 = vsel %vm91, %v72, 0
  %v99 = vsel %vm91, %v73, 0
  %v102 = vsel %vm91, %v74, 0
  %v105 = vsel %vm91, %v75, 0
  %v108 = vsel %vm91, %v76, 0
  %v111 = vsel %vm91, %v77, 0
  %v114 = vsel %vm91, %v78, 0
  %116 = vmatpush.bf16.msra.mxu0 0
  %117 = vmatpush.bf16.msra.mxu0 0
  %118 = vmatpush.bf16.msra.mxu0 0
  %119 = vmatpush.bf16.msra.mxu0 0
  %120 = vmatpush.bf16.msra.mxu0 0
  %121 = vmatpush.bf16.msra.mxu0 0
  %122 = vmatpush.bf16.msra.mxu0 %v88
  %123 = vmatpush.bf16.msra.mxu0 %v87
  %124 = vmatmul.bf16.gmra.mxu0 %v93
  %v125 = vpop.f32.mrf.mxu0
  %v126 = vadd.f32 %v37, %v125
  %v127 = vpop.f32.mrf.mxu0
  %v128 = vadd.f32 %v37, %v127
  %129 = vmatmul.bf16.gmra.mxu0 %v96
  %v130 = vpop.f32.mrf.mxu0
  %v131 = vadd.f32 %v37, %v130
  %v132 = vpop.f32.mrf.mxu0
  %v133 = vadd.f32 %v37, %v132
  %134 = vmatmul.bf16.gmra.mxu0 %v99
  %v135 = vpop.f32.mrf.mxu0
  %v136 = vadd.f32 %v37, %v135
  %v137 = vpop.f32.mrf.mxu0
  %v138 = vadd.f32 %v37, %v137
  %139 = vmatmul.bf16.gmra.mxu0 %v102
  %v140 = vpop.f32.mrf.mxu0
  %v141 = vadd.f32 %v37, %v140
  %v142 = vpop.f32.mrf.mxu0
  %v143 = vadd.f32 %v37, %v142
  %144 = vmatmul.bf16.gmra.mxu0 %v105
  %v145 = vpop.f32.mrf.mxu0
  %v146 = vadd.f32 %v37, %v145
  %v147 = vpop.f32.mrf.mxu0
  %v148 = vadd.f32 %v37, %v147
  %149 = vmatmul.bf16.gmra.mxu0 %v108
  %v150 = vpop.f32.mrf.mxu0
  %v151 = vadd.f32 %v37, %v150
  %v152 = vpop.f32.mrf.mxu0
  %v153 = vadd.f32 %v37, %v152
  %154 = vmatmul.bf16.gmra.mxu0 %v111
  %v155 = vpop.f32.mrf.mxu0
  %v156 = vadd.f32 %v37, %v155
  %v157 = vpop.f32.mrf.mxu0
  %v158 = vadd.f32 %v37, %v157
  %159 = vmatmul.bf16.gmra.mxu0 %v114
  %v160 = vpop.f32.mrf.mxu0
  %v161 = vadd.f32 %v37, %v160
  %v162 = vpop.f32.mrf.mxu0
  %v163 = vadd.f32 %v37, %v162
  %164 = vdwg.mxu0
  %v165 = vmax.f32 %v126, 0.0
  %v166 = vmax.f32 %v128, 0.0
  %v167 = vmax.f32 %v131, 0.0
  %v168 = vmax.f32 %v133, 0.0
  %v169 = vmax.f32 %v136, 0.0
  %v170 = vmax.f32 %v138, 0.0
  %v171 = vmax.f32 %v141, 0.0
  %v172 = vmax.f32 %v143, 0.0
  %v173 = vmax.f32 %v146, 0.0
  %v174 = vmax.f32 %v148, 0.0
  %v175 = vmax.f32 %v151, 0.0
  %v176 = vmax.f32 %v153, 0.0
  %v177 = vmax.f32 %v156, 0.0
  %v178 = vmax.f32 %v158, 0.0
  %v179 = vmax.f32 %v161, 0.0
  %v180 = vmax.f32 %v163, 0.0
  %181 = vst [vmem:[%s3] sm:$0xff] %v165
  %182 = vst [vmem:[%s3 + $0x8] sm:$0xff] %v166
  %183 = vst [vmem:[%s3 + $0x10] sm:$0xff] %v167
  %184 = vst [vmem:[%s3 + $0x18] sm:$0xff] %v168
  %185 = vst [vmem:[%s3 + $0x20] sm:$0xff] %v169
  %186 = vst [vmem:[%s3 + $0x28] sm:$0xff] %v170
  %187 = vst [vmem:[%s3 + $0x30] sm:$0xff] %v171
  %188 = vst [vmem:[%s3 + $0x38] sm:$0xff] %v172
  %189 = vst [vmem:[%s3 + $0x40] sm:$0xff] %v173
  %190 = vst [vmem:[%s3 + $0x48] sm:$0xff] %v174
  %191 = vst [vmem:[%s3 + $0x50] sm:$0xff] %v175
  %192 = vst [vmem:[%s3 + $0x58] sm:$0xff] %v176
  %193 = vst [vmem:[%s3 + $0x60] sm:$0xff] %v177
  %194 = vst [vmem:[%s3 + $0x68] sm:$0xff] %v178
  %195 = vst [vmem:[%s3 + $0x70] sm:$0xff] %v179
  %196 = vst [vmem:[%s3 + $0x78] sm:$0xff] %v180
  // Predicated region
  $region14: #{autoencoder_forward.6} parent=0 // pred_check
    _
  $region15: #{autoencoder_forward.6} parent=0 // pred_check_branch
    %198 = sbr.rel (0) target = $region17
  $region16: #{autoencoder_forward.6} parent=0 // pred_region
    _
  $region17: #{autoencoder_forward.6} parent=0 // pred_fallthru
    _
  // Predicated region
  $region18: #{autoencoder_forward.6} parent=0 // pred_check
    _
  $region19: #{autoencoder_forward.6} parent=0 // pred_check_branch
    %200 = sbr.rel (0) target = $region21
  $region20: #{autoencoder_forward.6} parent=0 // pred_region
    _
  $region21: #{autoencoder_forward.6} parent=0 // pred_fallthru
    _

// kernel: autoencoder_forward.7
$region0: #{autoencoder_forward.7}
  #allocation0 [shape = 'u32[]', space=smem, size = 0x4, offset = 0x4, fixed_abs, tag = 'smem constant byte address 0x4 - core index']
  #allocation1 [shape = 'u32[72,128]{1,0:T(1,128)}', space=vmem, size = 0x9000, scoped, tag = 'internal scratch']
  %s0 = inlined_call_operand.vmem [shape: bf16[32,576], index: 0, kind: input, shape index: {}]
  %s1 = inlined_call_operand.vmem [shape: bf16[576,128], index: 1, kind: input, shape index: {}]
  %s2 = inlined_call_operand.vmem [shape: f32[1,128], index: 2, kind: input, shape index: {}]
  %s3 = inlined_call_operand.vmem [shape: f32[32,128], index: 3, kind: output, shape index: {}]
  %s4 = sld [smem:[#allocation0]]
  $region22: #{autoencoder_forward.7} parent=0
    _
  %s6 = ssub.s32 1, %s4
  %s7 = scalar_select 0, %s6, %s4
  // Predicated region
  $region2: #{autoencoder_forward.7} parent=0 // pred_check
    _
  $region3: #{autoencoder_forward.7} parent=0 // pred_check_branch
    %9 = sbr.rel (0) target = $region5
  $region4: #{autoencoder_forward.7} parent=0 // pred_region
    _
  $region5: #{autoencoder_forward.7} parent=0 // pred_fallthru
    _
  // Predicated region
  $region6: #{autoencoder_forward.7} parent=0 // pred_check
    _
  $region7: #{autoencoder_forward.7} parent=0 // pred_check_branch
    %11 = sbr.rel (0) target = $region9
  $region8: #{autoencoder_forward.7} parent=0 // pred_region
    _
  $region9: #{autoencoder_forward.7} parent=0 // pred_fallthru
    _
  // Predicated region
  $region10: #{autoencoder_forward.7} parent=0 // pred_check
    _
  $region11: #{autoencoder_forward.7} parent=0 // pred_check_branch
    %13 = sbr.rel (0) target = $region13
  $region12: #{autoencoder_forward.7} parent=0 // pred_region
    _
  $region13: #{autoencoder_forward.7} parent=0 // pred_fallthru
    _
  %v15 = vld [vmem:[%s0] sm:$0xff]
  %v16 = vld [vmem:[%s0 + $0x8] sm:$0xff]
  %v17 = vld [vmem:[%s0 + $0x10] sm:$0xf]
  %v18 = vld [vmem:[%s0 + $0x14] sm:$0xff]
  %v19 = vld [vmem:[%s0 + $0x1c] sm:$0xff]
  %v20 = vld [vmem:[%s0 + $0x24] sm:$0xf]
  %v21 = vld [vmem:[%s0 + $0x28] sm:$0xff]
  %v22 = vld [vmem:[%s0 + $0x30] sm:$0xff]
  %v23 = vld [vmem:[%s0 + $0x38] sm:$0xf]
  %v24 = vld [vmem:[%s0 + $0x3c] sm:$0xff]
  %v25 = vld [vmem:[%s0 + $0x44] sm:$0xff]
  %v26 = vld [vmem:[%s0 + $0x4c] sm:$0xf]
  %v27 = vld [vmem:[%s1] sm:$0xf]
  %v28 = vld [vmem:[%s1 + $0x4] sm:$0xf]
  %v29 = vld [vmem:[%s1 + $0x8] sm:$0xf]
  %v30 = vld [vmem:[%s1 + $0xc] sm:$0xf]
  %v31 = vld [vmem:[%s1 + $0x10] sm:$0xf]
  %v32 = vld [vmem:[%s1 + $0x14] sm:$0xf]
  %v33 = vld [vmem:[%s1 + $0x18] sm:$0xf]
  %v34 = vld [vmem:[%s1 + $0x1c] sm:$0xf]
  %v35 = vld [vmem:[%s1 + $0x20] sm:$0xf]
  %v36 = vld [vmem:[%s1 + $0x24] sm:$0xf]
  %v37 = vld [vmem:[%s1 + $0x28] sm:$0xf]
  %v38 = vld [vmem:[%s1 + $0x2c] sm:$0xf]
  %v39 = vld [vmem:[%s1 + $0x30] sm:$0xf]
  %v40 = vld [vmem:[%s1 + $0x34] sm:$0xf]
  %v41 = vld [vmem:[%s1 + $0x38] sm:$0xf]
  %v42 = vld [vmem:[%s1 + $0x3c] sm:$0xf]
  %v43 = vld [vmem:[%s1 + $0x40] sm:$0xf]
  %v44 = vld [vmem:[%s1 + $0x44] sm:$0xf]
  %v45 = vld [vmem:[%s1 + $0x48] sm:$0xf]
  %v46 = vld [vmem:[%s1 + $0x4c] sm:$0xf]
  %v47 = vld [vmem:[%s1 + $0x50] sm:$0xf]
  %v48 = vld [vmem:[%s1 + $0x54] sm:$0xf]
  %v49 = vld [vmem:[%s1 + $0x58] sm:$0xf]
  %v50 = vld [vmem:[%s1 + $0x5c] sm:$0xf]
  %v51 = vld [vmem:[%s1 + $0x60] sm:$0xf]
  %v52 = vld [vmem:[%s1 + $0x64] sm:$0xf]
  %v53 = vld [vmem:[%s1 + $0x68] sm:$0xf]
  %v54 = vld [vmem:[%s1 + $0x6c] sm:$0xf]
  %v55 = vld [vmem:[%s1 + $0x70] sm:$0xf]
  %v56 = vld [vmem:[%s1 + $0x74] sm:$0xf]
  %v57 = vld [vmem:[%s1 + $0x78] sm:$0xf]
  %v58 = vld [vmem:[%s1 + $0x7c] sm:$0xf]
  %v59 = vld [vmem:[%s1 + $0x80] sm:$0xf]
  %v60 = vld [vmem:[%s1 + $0x84] sm:$0xf]
  %v61 = vld [vmem:[%s1 + $0x88] sm:$0xf]
  %v62 = vld [vmem:[%s1 + $0x8c] sm:$0xf]
  %v63 = vld [vmem:[%s1 + $0x90] sm:$0xf]
  %v64 = vld [vmem:[%s1 + $0x94] sm:$0xf]
  %v65 = vld [vmem:[%s1 + $0x98] sm:$0xf]
  %v66 = vld [vmem:[%s1 + $0x9c] sm:$0xf]
  %v67 = vld [vmem:[%s1 + $0xa0] sm:$0xf]
  %v68 = vld [vmem:[%s1 + $0xa4] sm:$0xf]
  %v69 = vld [vmem:[%s1 + $0xa8] sm:$0xf]
  %v70 = vld [vmem:[%s1 + $0xac] sm:$0xf]
  %v71 = vld [vmem:[%s1 + $0xb0] sm:$0xf]
  %v72 = vld [vmem:[%s1 + $0xb4] sm:$0xf]
  %v73 = vld [vmem:[%s1 + $0xb8] sm:$0xf]
  %v74 = vld [vmem:[%s1 + $0xbc] sm:$0xf]
  %v75 = vld [vmem:[%s1 + $0xc0] sm:$0xf]
  %v76 = vld [vmem:[%s1 + $0xc4] sm:$0xf]
  %v77 = vld [vmem:[%s1 + $0xc8] sm:$0xf]
  %v78 = vld [vmem:[%s1 + $0xcc] sm:$0xf]
  %v79 = vld [vmem:[%s1 + $0xd0] sm:$0xf]
  %v80 = vld [vmem:[%s1 + $0xd4] sm:$0xf]
  %v81 = vld [vmem:[%s1 + $0xd8] sm:$0xf]
  %v82 = vld [vmem:[%s1 + $0xdc] sm:$0xf]
  %v83 = vld [vmem:[%s1 + $0xe0] sm:$0xf]
  %v84 = vld [vmem:[%s1 + $0xe4] sm:$0xf]
  %v85 = vld [vmem:[%s1 + $0xe8] sm:$0xf]
  %v86 = vld [vmem:[%s1 + $0xec] sm:$0xf]
  %v87 = vld [vmem:[%s1 + $0xf0] sm:$0xf]
  %v88 = vld [vmem:[%s1 + $0xf4] sm:$0xf]
  %v89 = vld [vmem:[%s1 + $0xf8] sm:$0xf]
  %v90 = vld [vmem:[%s1 + $0xfc] sm:$0xf]
  %v91 = vld [vmem:[%s1 + $0x100] sm:$0xf]
  %v92 = vld [vmem:[%s1 + $0x104] sm:$0xf]
  %v93 = vld [vmem:[%s1 + $0x108] sm:$0xf]
  %v94 = vld [vmem:[%s1 + $0x10c] sm:$0xf]
  %v95 = vld [vmem:[%s1 + $0x110] sm:$0xf]
  %v96 = vld [vmem:[%s1 + $0x114] sm:$0xf]
  %v97 = vld [vmem:[%s1 + $0x118] sm:$0xf]
  %v98 = vld [vmem:[%s1 + $0x11c] sm:$0xf]
  %v99 = vld [vmem:[%s2] sm:$0x1]
  %v101 = vperm.slane %v99, 0
  %v115 = vunpack.c.l.b16 %v15
  %v116 = vunpack.c.h.b16 %v15
  %v117 = vunpack.c.l.b16 %v16
  %v118 = vunpack.c.h.b16 %v16
  %v119 = vunpack.c.l.b16 %v17
  %v120 = vunpack.c.l.b16 %v18
  %v121 = vunpack.c.h.b16 %v18
  %v122 = vunpack.c.l.b16 %v19
  %v123 = vunpack.c.h.b16 %v19
  %v124 = vunpack.c.l.b16 %v20
  %v125 = vunpack.c.l.b16 %v21
  %v126 = vunpack.c.h.b16 %v21
  %v127 = vunpack.c.l.b16 %v22
  %v128 = vunpack.c.h.b16 %v22
  %v129 = vunpack.c.l.b16 %v23
  %v130 = vunpack.c.l.b16 %v24
  %v131 = vunpack.c.h.b16 %v24
  %v132 = vunpack.c.l.b16 %v25
  %v133 = vunpack.c.h.b16 %v25
  %v134 = vunpack.c.l.b16 %v26
  %v135 = vpack.c.b16 %v120, %v115
  %v136 = vpack.c.b16 %v121, %v116
  %v137 = vpack.c.b16 %v122, %v117
  %v138 = vpack.c.b16 %v123, %v118
  %v139 = vpack.c.b16 %v124, %v119
  %v140 = vpack.c.b16 %v130, %v125
  %v141 = vpack.c.b16 %v131, %v126
  %v142 = vpack.c.b16 %v132, %v127
  %v143 = vpack.c.b16 %v133, %v128
  %v144 = vpack.c.b16 %v134, %v129
  %v225 = vunpack.c.l.b16 %v27
  %v226 = vunpack.c.l.b16 %v28
  %v227 = vunpack.c.l.b16 %v29
  %v228 = vunpack.c.l.b16 %v30
  %v229 = vunpack.c.l.b16 %v31
  %v230 = vunpack.c.l.b16 %v32
  %v231 = vunpack.c.l.b16 %v33
  %v232 = vunpack.c.l.b16 %v34
  %v233 = vunpack.c.l.b16 %v35
  %v234 = vunpack.c.l.b16 %v36
  %v235 = vunpack.c.l.b16 %v37
  %v236 = vunpack.c.l.b16 %v38
  %v237 = vunpack.c.l.b16 %v39
  %v238 = vunpack.c.l.b16 %v40
  %v239 = vunpack.c.l.b16 %v41
  %v240 = vunpack.c.l.b16 %v42
  %v241 = vunpack.c.l.b16 %v43
  %v242 = vunpack.c.l.b16 %v44
  %v243 = vunpack.c.l.b16 %v45
  %v244 = vunpack.c.l.b16 %v46
  %v245 = vunpack.c.l.b16 %v47
  %v246 = vunpack.c.l.b16 %v48
  %v247 = vunpack.c.l.b16 %v49
  %v248 = vunpack.c.l.b16 %v50
  %v249 = vunpack.c.l.b16 %v51
  %v250 = vunpack.c.l.b16 %v52
  %v251 = vunpack.c.l.b16 %v53
  %v252 = vunpack.c.l.b16 %v54
  %v253 = vunpack.c.l.b16 %v55
  %v254 = vunpack.c.l.b16 %v56
  %v255 = vunpack.c.l.b16 %v57
  %v256 = vunpack.c.l.b16 %v58
  %v257 = vunpack.c.l.b16 %v59
  %v258 = vunpack.c.l.b16 %v60
  %v259 = vunpack.c.l.b16 %v61
  %v260 = vunpack.c.l.b16 %v62
  %v261 = vunpack.c.l.b16 %v63
  %v262 = vunpack.c.l.b16 %v64
  %v263 = vunpack.c.l.b16 %v65
  %v264 = vunpack.c.l.b16 %v66
  %v265 = vunpack.c.l.b16 %v67
  %v266 = vunpack.c.l.b16 %v68
  %v267 = vunpack.c.l.b16 %v69
  %v268 = vunpack.c.l.b16 %v70
  %v269 = vunpack.c.l.b16 %v71
  %v270 = vunpack.c.l.b16 %v72
  %v271 = vunpack.c.l.b16 %v73
  %v272 = vunpack.c.l.b16 %v74
  %v273 = vunpack.c.l.b16 %v75
  %v274 = vunpack.c.l.b16 %v76
  %v275 = vunpack.c.l.b16 %v77
  %v276 = vunpack.c.l.b16 %v78
  %v277 = vunpack.c.l.b16 %v79
  %v278 = vunpack.c.l.b16 %v80
  %v279 = vunpack.c.l.b16 %v81
  %v280 = vunpack.c.l.b16 %v82
  %v281 = vunpack.c.l.b16 %v83
  %v282 = vunpack.c.l.b16 %v84
  %v283 = vunpack.c.l.b16 %v85
  %v284 = vunpack.c.l.b16 %v86
  %v285 = vunpack.c.l.b16 %v87
  %v286 = vunpack.c.l.b16 %v88
  %v287 = vunpack.c.l.b16 %v89
  %v288 = vunpack.c.l.b16 %v90
  %v289 = vunpack.c.l.b16 %v91
  %v290 = vunpack.c.l.b16 %v92
  %v291 = vunpack.c.l.b16 %v93
  %v292 = vunpack.c.l.b16 %v94
  %v293 = vunpack.c.l.b16 %v95
  %v294 = vunpack.c.l.b16 %v96
  %v295 = vunpack.c.l.b16 %v97
  %v296 = vunpack.c.l.b16 %v98
  %v297 = vpack.c.b16 %v226, %v225
  %v298 = vpack.c.b16 %v228, %v227
  %v299 = vpack.c.b16 %v230, %v229
  %v300 = vpack.c.b16 %v232, %v231
  %v301 = vpack.c.b16 %v234, %v233
  %v302 = vpack.c.b16 %v236, %v235
  %v303 = vpack.c.b16 %v238, %v237
  %v304 = vpack.c.b16 %v240, %v239
  %v305 = vpack.c.b16 %v242, %v241
  %v306 = vpack.c.b16 %v244, %v243
  %v307 = vpack.c.b16 %v246, %v245
  %v308 = vpack.c.b16 %v248, %v247
  %v309 = vpack.c.b16 %v250, %v249
  %v310 = vpack.c.b16 %v252, %v251
  %v311 = vpack.c.b16 %v254, %v253
  %v312 = vpack.c.b16 %v256, %v255
  %v313 = vpack.c.b16 %v258, %v257
  %v314 = vpack.c.b16 %v260, %v259
  %v315 = vpack.c.b16 %v262, %v261
  %v316 = vpack.c.b16 %v264, %v263
  %v317 = vpack.c.b16 %v266, %v265
  %v318 = vpack.c.b16 %v268, %v267
  %v319 = vpack.c.b16 %v270, %v269
  %v320 = vpack.c.b16 %v272, %v271
  %v321 = vpack.c.b16 %v274, %v273
  %v322 = vpack.c.b16 %v276, %v275
  %v323 = vpack.c.b16 %v278, %v277
  %v324 = vpack.c.b16 %v280, %v279
  %v325 = vpack.c.b16 %v282, %v281
  %v326 = vpack.c.b16 %v284, %v283
  %v327 = vpack.c.b16 %v286, %v285
  %v328 = vpack.c.b16 %v288, %v287
  %v329 = vpack.c.b16 %v290, %v289
  %v330 = vpack.c.b16 %v292, %v291
  %v331 = vpack.c.b16 %v294, %v293
  %v332 = vpack.c.b16 %v296, %v295
  %vm369 = vcmask 523264
  %v371 = vsel %vm369, %v139, 0
  %v374 = vsel %vm369, %v144, 0
  %376 = vmatpush.bf16.msra.mxu0 %v304
  %377 = vmatpush.bf16.msra.mxu0 %v303
  %378 = vmatpush.bf16.msra.mxu0 %v302
  %379 = vmatpush.bf16.msra.mxu0 %v301
  %380 = vmatpush.bf16.msra.mxu0 %v300
  %381 = vmatpush.bf16.msra.mxu0 %v299
  %382 = vmatpush.bf16.msra.mxu0 %v298
  %383 = vmatpush.bf16.msra.mxu0 %v297
  %384 = vmatmul.bf16.gmra.mxu0 %v135
  %v385 = vpop.f32.mrf.mxu0
  %v386 = vadd.f32 %v101, %v385
  %v387 = vpop.f32.mrf.mxu0
  %v388 = vadd.f32 %v101, %v387
  %389 = vmatmul.bf16.gmra.mxu0 %v140
  %v390 = vpop.f32.mrf.mxu0
  %v391 = vadd.f32 %v101, %v390
  %v392 = vpop.f32.mrf.mxu0
  %v393 = vadd.f32 %v101, %v392
  %394 = vdwg.mxu0
  %395 = vmatpush.bf16.msra.mxu0 %v312
  %396 = vmatpush.bf16.msra.mxu0 %v311
  %397 = vmatpush.bf16.msra.mxu0 %v310
  %398 = vmatpush.bf16.msra.mxu0 %v309
  %399 = vmatpush.bf16.msra.mxu0 %v308
  %400 = vmatpush.bf16.msra.mxu0 %v307
  %401 = vmatpush.bf16.msra.mxu0 %v306
  %402 = vmatpush.bf16.msra.mxu0 %v305
  %403 = vmatmul.bf16.gmra.mxu0 %v136
  %v404 = vpop.f32.mrf.mxu0
  %v405 = vadd.f32 %v386, %v404
  %v406 = vpop.f32.mrf.mxu0
  %v407 = vadd.f32 %v388, %v406
  %408 = vmatmul.bf16.gmra.mxu0 %v141
  %v409 = vpop.f32.mrf.mxu0
  %v410 = vadd.f32 %v391, %v409
  %v411 = vpop.f32.mrf.mxu0
  %v412 = vadd.f32 %v393, %v411
  %413 = vdwg.mxu0
  %414 = vmatpush.bf16.msra.mxu0 %v320
  %415 = vmatpush.bf16.msra.mxu0 %v319
  %416 = vmatpush.bf16.msra.mxu0 %v318
  %417 = vmatpush.bf16.msra.mxu0 %v317
  %418 = vmatpush.bf16.msra.mxu0 %v316
  %419 = vmatpush.bf16.msra.mxu0 %v315
  %420 = vmatpush.bf16.msra.mxu0 %v314
  %421 = vmatpush.bf16.msra.mxu0 %v313
  %422 = vmatmul.bf16.gmra.mxu0 %v137
  %v423 = vpop.f32.mrf.mxu0
  %v424 = vadd.f32 %v405, %v423
  %v425 = vpop.f32.mrf.mxu0
  %v426 = vadd.f32 %v407, %v425
  %427 = vmatmul.bf16.gmra.mxu0 %v142
  %v428 = vpop.f32.mrf.mxu0
  %v429 = vadd.f32 %v410, %v428
  %v430 = vpop.f32.mrf.mxu0
  %v431 = vadd.f32 %v412, %v430
  %432 = vdwg.mxu0
  %433 = vmatpush.bf16.msra.mxu0 %v328
  %434 = vmatpush.bf16.msra.mxu0 %v327
  %435 = vmatpush.bf16.msra.mxu0 %v326
  %436 = vmatpush.bf16.msra.mxu0 %v325
  %437 = vmatpush.bf16.msra.mxu0 %v324
  %438 = vmatpush.bf16.msra.mxu0 %v323
  %439 = vmatpush.bf16.msra.mxu0 %v322
  %440 = vmatpush.bf16.msra.mxu0 %v321
  %441 = vmatmul.bf16.gmra.mxu0 %v138
  %v442 = vpop.f32.mrf.mxu0
  %v443 = vadd.f32 %v424, %v442
  %v444 = vpop.f32.mrf.mxu0
  %v445 = vadd.f32 %v426, %v444
  %446 = vmatmul.bf16.gmra.mxu0 %v143
  %v447 = vpop.f32.mrf.mxu0
  %v448 = vadd.f32 %v429, %v447
  %v449 = vpop.f32.mrf.mxu0
  %v450 = vadd.f32 %v431, %v449
  %451 = vdwg.mxu0
  %452 = vmatpush.bf16.msra.mxu0 0
  %453 = vmatpush.bf16.msra.mxu0 0
  %454 = vmatpush.bf16.msra.mxu0 0
  %455 = vmatpush.bf16.msra.mxu0 0
  %456 = vmatpush.bf16.msra.mxu0 %v332
  %457 = vmatpush.bf16.msra.mxu0 %v331
  %458 = vmatpush.bf16.msra.mxu0 %v330
  %459 = vmatpush.bf16.msra.mxu0 %v329
  %460 = vmatmul.bf16.gmra.mxu0 %v371
  %v461 = vpop.f32.mrf.mxu0
  %v462 = vadd.f32 %v443, %v461
  %v463 = vpop.f32.mrf.mxu0
  %v464 = vadd.f32 %v445, %v463
  %465 = vmatmul.bf16.gmra.mxu0 %v374
  %v466 = vpop.f32.mrf.mxu0
  %v467 = vadd.f32 %v448, %v466
  %v468 = vpop.f32.mrf.mxu0
  %v469 = vadd.f32 %v450, %v468
  %470 = vdwg.mxu0
  %v471 = vmax.f32 %v462, 0.0
  %v472 = vmax.f32 %v464, 0.0
  %v473 = vmax.f32 %v467, 0.0
  %v474 = vmax.f32 %v469, 0.0
  %475 = vst [vmem:[%s3] sm:$0xff] %v471
  %476 = vst [vmem:[%s3 + $0x8] sm:$0xff] %v472
  %477 = vst [vmem:[%s3 + $0x10] sm:$0xff] %v473
  %478 = vst [vmem:[%s3 + $0x18] sm:$0xff] %v474
  // Predicated region
  $region14: #{autoencoder_forward.7} parent=0 // pred_check
    _
  $region15: #{autoencoder_forward.7} parent=0 // pred_check_branch
    %480 = sbr.rel (0) target = $region17
  $region16: #{autoencoder_forward.7} parent=0 // pred_region
    _
  $region17: #{autoencoder_forward.7} parent=0 // pred_fallthru
    _
  // Predicated region
  $region18: #{autoencoder_forward.7} parent=0 // pred_check
    _
  $region19: #{autoencoder_forward.7} parent=0 // pred_check_branch
    %482 = sbr.rel (0) target = $region21
  $region20: #{autoencoder_forward.7} parent=0 // pred_region
    _
  $region21: #{autoencoder_forward.7} parent=0 // pred_fallthru
    _

// kernel: autoencoder_forward.8
$region0: #{autoencoder_forward.8}
  #allocation0 [shape = 'u32[]', space=smem, size = 0x4, offset = 0x4, fixed_abs, tag = 'smem constant byte address 0x4 - core index']
  #allocation1 [shape = 'u32[72,128]{1,0:T(1,128)}', space=vmem, size = 0x9000, scoped, tag = 'internal scratch']
  %s0 = inlined_call_operand.vmem [shape: bf16[8,1152], index: 0, kind: input, shape index: {}]
  %s1 = inlined_call_operand.vmem [shape: bf16[1152,256], index: 1, kind: input, shape index: {}]
  %s2 = inlined_call_operand.vmem [shape: f32[1,256], index: 2, kind: input, shape index: {}]
  %s3 = inlined_call_operand.vmem [shape: f32[8,256], index: 3, kind: output, shape index: {}]
  %s4 = sld [smem:[#allocation0]]
  $region22: #{autoencoder_forward.8} parent=0
    _
  %s6 = ssub.s32 1, %s4
  %s7 = scalar_select 0, %s6, %s4
  // Predicated region
  $region2: #{autoencoder_forward.8} parent=0 // pred_check
    _
  $region3: #{autoencoder_forward.8} parent=0 // pred_check_branch
    %9 = sbr.rel (0) target = $region5
  $region4: #{autoencoder_forward.8} parent=0 // pred_region
    _
  $region5: #{autoencoder_forward.8} parent=0 // pred_fallthru
    _
  // Predicated region
  $region6: #{autoencoder_forward.8} parent=0 // pred_check
    _
  $region7: #{autoencoder_forward.8} parent=0 // pred_check_branch
    %11 = sbr.rel (0) target = $region9
  $region8: #{autoencoder_forward.8} parent=0 // pred_region
    _
  $region9: #{autoencoder_forward.8} parent=0 // pred_fallthru
    _
  // Predicated region
  $region10: #{autoencoder_forward.8} parent=0 // pred_check
    _
  $region11: #{autoencoder_forward.8} parent=0 // pred_check_branch
    %13 = sbr.rel (0) target = $region13
  $region12: #{autoencoder_forward.8} parent=0 // pred_region
    _
  $region13: #{autoencoder_forward.8} parent=0 // pred_fallthru
    _
  %v14 = vld [vmem:[%s0] sm:$0xff]
  %v15 = vld [vmem:[%s0 + $0x8] sm:$0xff]
  %v16 = vld [vmem:[%s0 + $0x10] sm:$0xff]
  %v17 = vld [vmem:[%s0 + $0x18] sm:$0xff]
  %v18 = vld [vmem:[%s0 + $0x20] sm:$0xf]
  %v19 = vld [vmem:[%s1] sm:$0xff]
  %v20 = vld [vmem:[%s1 + $0x8] sm:$0xff]
  %v21 = vld [vmem:[%s1 + $0x10] sm:$0xff]
  %v22 = vld [vmem:[%s1 + $0x18] sm:$0xff]
  %v23 = vld [vmem:[%s1 + $0x20] sm:$0xff]
  %v24 = vld [vmem:[%s1 + $0x28] sm:$0xff]
  %v25 = vld [vmem:[%s1 + $0x30] sm:$0xff]
  %v26 = vld [vmem:[%s1 + $0x38] sm:$0xff]
  %v27 = vld [vmem:[%s1 + $0x40] sm:$0xff]
  %v28 = vld [vmem:[%s1 + $0x48] sm:$0xff]
  %v29 = vld [vmem:[%s1 + $0x50] sm:$0xff]
  %v30 = vld [vmem:[%s1 + $0x58] sm:$0xff]
  %v31 = vld [vmem:[%s1 + $0x60] sm:$0xff]
  %v32 = vld [vmem:[%s1 + $0x68] sm:$0xff]
  %v33 = vld [vmem:[%s1 + $0x70] sm:$0xff]
  %v34 = vld [vmem:[%s1 + $0x78] sm:$0xff]
  %v35 = vld [vmem:[%s1 + $0x80] sm:$0xff]
  %v36 = vld [vmem:[%s1 + $0x88] sm:$0xff]
  %v37 = vld [vmem:[%s1 + $0x90] sm:$0xff]
  %v38 = vld [vmem:[%s1 + $0x98] sm:$0xff]
  %v39 = vld [vmem:[%s1 + $0xa0] sm:$0xff]
  %v40 = vld [vmem:[%s1 + $0xa8] sm:$0xff]
  %v41 = vld [vmem:[%s1 + $0xb0] sm:$0xff]
  %v42 = vld [vmem:[%s1 + $0xb8] sm:$0xff]
  %v43 = vld [vmem:[%s1 + $0xc0] sm:$0xff]
  %v44 = vld [vmem:[%s1 + $0xc8] sm:$0xff]
  %v45 = vld [vmem:[%s1 + $0xd0] sm:$0xff]
  %v46 = vld [vmem:[%s1 + $0xd8] sm:$0xff]
  %v47 = vld [vmem:[%s1 + $0xe0] sm:$0xff]
  %v48 = vld [vmem:[%s1 + $0xe8] sm:$0xff]
  %v49 = vld [vmem:[%s1 + $0xf0] sm:$0xff]
  %v50 = vld [vmem:[%s1 + $0xf8] sm:$0xff]
  %v51 = vld [vmem:[%s1 + $0x100] sm:$0xff]
  %v52 = vld [vmem:[%s1 + $0x108] sm:$0xff]
  %v53 = vld [vmem:[%s1 + $0x110] sm:$0xff]
  %v54 = vld [vmem:[%s1 + $0x118] sm:$0xff]
  %v55 = vld [vmem:[%s1 + $0x120] sm:$0xff]
  %v56 = vld [vmem:[%s1 + $0x128] sm:$0xff]
  %v57 = vld [vmem:[%s1 + $0x130] sm:$0xff]
  %v58 = vld [vmem:[%s1 + $0x138] sm:$0xff]
  %v59 = vld [vmem:[%s1 + $0x140] sm:$0xff]
  %v60 = vld [vmem:[%s1 + $0x148] sm:$0xff]
  %v61 = vld [vmem:[%s1 + $0x150] sm:$0xff]
  %v62 = vld [vmem:[%s1 + $0x158] sm:$0xff]
  %v63 = vld [vmem:[%s1 + $0x160] sm:$0xff]
  %v64 = vld [vmem:[%s1 + $0x168] sm:$0xff]
  %v65 = vld [vmem:[%s1 + $0x170] sm:$0xff]
  %v66 = vld [vmem:[%s1 + $0x178] sm:$0xff]
  %v67 = vld [vmem:[%s1 + $0x180] sm:$0xff]
  %v68 = vld [vmem:[%s1 + $0x188] sm:$0xff]
  %v69 = vld [vmem:[%s1 + $0x190] sm:$0xff]
  %v70 = vld [vmem:[%s1 + $0x198] sm:$0xff]
  %v71 = vld [vmem:[%s1 + $0x1a0] sm:$0xff]
  %v72 = vld [vmem:[%s1 + $0x1a8] sm:$0xff]
  %v73 = vld [vmem:[%s1 + $0x1b0] sm:$0xff]
  %v74 = vld [vmem:[%s1 + $0x1b8] sm:$0xff]
  %v75 = vld [vmem:[%s1 + $0x1c0] sm:$0xff]
  %v76 = vld [vmem:[%s1 + $0x1c8] sm:$0xff]
  %v77 = vld [vmem:[%s1 + $0x1d0] sm:$0xff]
  %v78 = vld [vmem:[%s1 + $0x1d8] sm:$0xff]
  %v79 = vld [vmem:[%s1 + $0x1e0] sm:$0xff]
  %v80 = vld [vmem:[%s1 + $0x1e8] sm:$0xff]
  %v81 = vld [vmem:[%s1 + $0x1f0] sm:$0xff]
  %v82 = vld [vmem:[%s1 + $0x1f8] sm:$0xff]
  %v83 = vld [vmem:[%s1 + $0x200] sm:$0xff]
  %v84 = vld [vmem:[%s1 + $0x208] sm:$0xff]
  %v85 = vld [vmem:[%s1 + $0x210] sm:$0xff]
  %v86 = vld [vmem:[%s1 + $0x218] sm:$0xff]
  %v87 = vld [vmem:[%s1 + $0x220] sm:$0xff]
  %v88 = vld [vmem:[%s1 + $0x228] sm:$0xff]
  %v89 = vld [vmem:[%s1 + $0x230] sm:$0xff]
  %v90 = vld [vmem:[%s1 + $0x238] sm:$0xff]
  %v91 = vld [vmem:[%s1 + $0x240] sm:$0xff]
  %v92 = vld [vmem:[%s1 + $0x248] sm:$0xff]
  %v93 = vld [vmem:[%s1 + $0x250] sm:$0xff]
  %v94 = vld [vmem:[%s1 + $0x258] sm:$0xff]
  %v95 = vld [vmem:[%s1 + $0x260] sm:$0xff]
  %v96 = vld [vmem:[%s1 + $0x268] sm:$0xff]
  %v97 = vld [vmem:[%s1 + $0x270] sm:$0xff]
  %v98 = vld [vmem:[%s1 + $0x278] sm:$0xff]
  %v99 = vld [vmem:[%s1 + $0x280] sm:$0xff]
  %v100 = vld [vmem:[%s1 + $0x288] sm:$0xff]
  %v101 = vld [vmem:[%s1 + $0x290] sm:$0xff]
  %v102 = vld [vmem:[%s1 + $0x298] sm:$0xff]
  %v103 = vld [vmem:[%s1 + $0x2a0] sm:$0xff]
  %v104 = vld [vmem:[%s1 + $0x2a8] sm:$0xff]
  %v105 = vld [vmem:[%s1 + $0x2b0] sm:$0xff]
  %v106 = vld [vmem:[%s1 + $0x2b8] sm:$0xff]
  %v107 = vld [vmem:[%s1 + $0x2c0] sm:$0xff]
  %v108 = vld [vmem:[%s1 + $0x2c8] sm:$0xff]
  %v109 = vld [vmem:[%s1 + $0x2d0] sm:$0xff]
  %v110 = vld [vmem:[%s1 + $0x2d8] sm:$0xff]
  %v111 = vld [vmem:[%s1 + $0x2e0] sm:$0xff]
  %v112 = vld [vmem:[%s1 + $0x2e8] sm:$0xff]
  %v113 = vld [vmem:[%s1 + $0x2f0] sm:$0xff]
  %v114 = vld [vmem:[%s1 + $0x2f8] sm:$0xff]
  %v115 = vld [vmem:[%s1 + $0x300] sm:$0xff]
  %v116 = vld [vmem:[%s1 + $0x308] sm:$0xff]
  %v117 = vld [vmem:[%s1 + $0x310] sm:$0xff]
  %v118 = vld [vmem:[%s1 + $0x318] sm:$0xff]
  %v119 = vld [vmem:[%s1 + $0x320] sm:$0xff]
  %v120 = vld [vmem:[%s1 + $0x328] sm:$0xff]
  %v121 = vld [vmem:[%s1 + $0x330] sm:$0xff]
  %v122 = vld [vmem:[%s1 + $0x338] sm:$0xff]
  %v123 = vld [vmem:[%s1 + $0x340] sm:$0xff]
  %v124 = vld [vmem:[%s1 + $0x348] sm:$0xff]
  %v125 = vld [vmem:[%s1 + $0x350] sm:$0xff]
  %v126 = vld [vmem:[%s1 + $0x358] sm:$0xff]
  %v127 = vld [vmem:[%s1 + $0x360] sm:$0xff]
  %v128 = vld [vmem:[%s1 + $0x368] sm:$0xff]
  %v129 = vld [vmem:[%s1 + $0x370] sm:$0xff]
  %v130 = vld [vmem:[%s1 + $0x378] sm:$0xff]
  %v131 = vld [vmem:[%s1 + $0x380] sm:$0xff]
  %v132 = vld [vmem:[%s1 + $0x388] sm:$0xff]
  %v133 = vld [vmem:[%s1 + $0x390] sm:$0xff]
  %v134 = vld [vmem:[%s1 + $0x398] sm:$0xff]
  %v135 = vld [vmem:[%s1 + $0x3a0] sm:$0xff]
  %v136 = vld [vmem:[%s1 + $0x3a8] sm:$0xff]
  %v137 = vld [vmem:[%s1 + $0x3b0] sm:$0xff]
  %v138 = vld [vmem:[%s1 + $0x3b8] sm:$0xff]
  %v139 = vld [vmem:[%s1 + $0x3c0] sm:$0xff]
  %v140 = vld [vmem:[%s1 + $0x3c8] sm:$0xff]
  %v141 = vld [vmem:[%s1 + $0x3d0] sm:$0xff]
  %v142 = vld [vmem:[%s1 + $0x3d8] sm:$0xff]
  %v143 = vld [vmem:[%s1 + $0x3e0] sm:$0xff]
  %v144 = vld [vmem:[%s1 + $0x3e8] sm:$0xff]
  %v145 = vld [vmem:[%s1 + $0x3f0] sm:$0xff]
  %v146 = vld [vmem:[%s1 + $0x3f8] sm:$0xff]
  %v147 = vld [vmem:[%s1 + $0x400] sm:$0xff]
  %v148 = vld [vmem:[%s1 + $0x408] sm:$0xff]
  %v149 = vld [vmem:[%s1 + $0x410] sm:$0xff]
  %v150 = vld [vmem:[%s1 + $0x418] sm:$0xff]
  %v151 = vld [vmem:[%s1 + $0x420] sm:$0xff]
  %v152 = vld [vmem:[%s1 + $0x428] sm:$0xff]
  %v153 = vld [vmem:[%s1 + $0x430] sm:$0xff]
  %v154 = vld [vmem:[%s1 + $0x438] sm:$0xff]
  %v155 = vld [vmem:[%s1 + $0x440] sm:$0xff]
  %v156 = vld [vmem:[%s1 + $0x448] sm:$0xff]
  %v157 = vld [vmem:[%s1 + $0x450] sm:$0xff]
  %v158 = vld [vmem:[%s1 + $0x458] sm:$0xff]
  %v159 = vld [vmem:[%s1 + $0x460] sm:$0xff]
  %v160 = vld [vmem:[%s1 + $0x468] sm:$0xff]
  %v161 = vld [vmem:[%s1 + $0x470] sm:$0xff]
  %v162 = vld [vmem:[%s1 + $0x478] sm:$0xff]
  %v163 = vld [vmem:[%s2] sm:$0x3]
  %v165 = vperm.slane %v163, 0
  %v166 = vperm.slane %v163, 1
  %v174 = vunpack.c.l.b16 %v14
  %v175 = vunpack.c.h.b16 %v14
  %v176 = vunpack.c.l.b16 %v15
  %v177 = vunpack.c.h.b16 %v15
  %v178 = vunpack.c.l.b16 %v16
  %v179 = vunpack.c.h.b16 %v16
  %v180 = vunpack.c.l.b16 %v17
  %v181 = vunpack.c.h.b16 %v17
  %v182 = vunpack.c.l.b16 %v18
  %v183 = vpack.c.b16 %v174, %v174
  %v184 = vpack.c.b16 %v175, %v175
  %v185 = vpack.c.b16 %v176, %v176
  %v186 = vpack.c.b16 %v177, %v177
  %v187 = vpack.c.b16 %v178, %v178
  %v188 = vpack.c.b16 %v179, %v179
  %v189 = vpack.c.b16 %v180, %v180
  %v190 = vpack.c.b16 %v181, %v181
  %v191 = vpack.c.b16 %v182, %v182
  %v345 = vunpack.c.l.b16 %v19
  %v346 = vunpack.c.h.b16 %v19
  %v347 = vunpack.c.l.b16 %v20
  %v348 = vunpack.c.h.b16 %v20
  %v349 = vunpack.c.l.b16 %v21
  %v350 = vunpack.c.h.b16 %v21
  %v351 = vunpack.c.l.b16 %v22
  %v352 = vunpack.c.h.b16 %v22
  %v353 = vunpack.c.l.b16 %v23
  %v354 = vunpack.c.h.b16 %v23
  %v355 = vunpack.c.l.b16 %v24
  %v356 = vunpack.c.h.b16 %v24
  %v357 = vunpack.c.l.b16 %v25
  %v358 = vunpack.c.h.b16 %v25
  %v359 = vunpack.c.l.b16 %v26
  %v360 = vunpack.c.h.b16 %v26
  %v361 = vunpack.c.l.b16 %v27
  %v362 = vunpack.c.h.b16 %v27
  %v363 = vunpack.c.l.b16 %v28
  %v364 = vunpack.c.h.b16 %v28
  %v365 = vunpack.c.l.b16 %v29
  %v366 = vunpack.c.h.b16 %v29
  %v367 = vunpack.c.l.b16 %v30
  %v368 = vunpack.c.h.b16 %v30
  %v369 = vunpack.c.l.b16 %v31
  %v370 = vunpack.c.h.b16 %v31
  %v371 = vunpack.c.l.b16 %v32
  %v372 = vunpack.c.h.b16 %v32
  %v373 = vunpack.c.l.b16 %v33
  %v374 = vunpack.c.h.b16 %v33
  %v375 = vunpack.c.l.b16 %v34
  %v376 = vunpack.c.h.b16 %v34
  %v377 = vunpack.c.l.b16 %v35
  %v378 = vunpack.c.h.b16 %v35
  %v379 = vunpack.c.l.b16 %v36
  %v380 = vunpack.c.h.b16 %v36
  %v381 = vunpack.c.l.b16 %v37
  %v382 = vunpack.c.h.b16 %v37
  %v383 = vunpack.c.l.b16 %v38
  %v384 = vunpack.c.h.b16 %v38
  %v385 = vunpack.c.l.b16 %v39
  %v386 = vunpack.c.h.b16 %v39
  %v387 = vunpack.c.l.b16 %v40
  %v388 = vunpack.c.h.b16 %v40
  %v389 = vunpack.c.l.b16 %v41
  %v390 = vunpack.c.h.b16 %v41
  %v391 = vunpack.c.l.b16 %v42
  %v392 = vunpack.c.h.b16 %v42
  %v393 = vunpack.c.l.b16 %v43
  %v394 = vunpack.c.h.b16 %v43
  %v395 = vunpack.c.l.b16 %v44
  %v396 = vunpack.c.h.b16 %v44
  %v397 = vunpack.c.l.b16 %v45
  %v398 = vunpack.c.h.b16 %v45
  %v399 = vunpack.c.l.b16 %v46
  %v400 = vunpack.c.h.b16 %v46
  %v401 = vunpack.c.l.b16 %v47
  %v402 = vunpack.c.h.b16 %v47
  %v403 = vunpack.c.l.b16 %v48
  %v404 = vunpack.c.h.b16 %v48
  %v405 = vunpack.c.l.b16 %v49
  %v406 = vunpack.c.h.b16 %v49
  %v407 = vunpack.c.l.b16 %v50
  %v408 = vunpack.c.h.b16 %v50
  %v409 = vunpack.c.l.b16 %v51
  %v410 = vunpack.c.h.b16 %v51
  %v411 = vunpack.c.l.b16 %v52
  %v412 = vunpack.c.h.b16 %v52
  %v413 = vunpack.c.l.b16 %v53
  %v414 = vunpack.c.h.b16 %v53
  %v415 = vunpack.c.l.b16 %v54
  %v416 = vunpack.c.h.b16 %v54
  %v417 = vunpack.c.l.b16 %v55
  %v418 = vunpack.c.h.b16 %v55
  %v419 = vunpack.c.l.b16 %v56
  %v420 = vunpack.c.h.b16 %v56
  %v421 = vunpack.c.l.b16 %v57
  %v422 = vunpack.c.h.b16 %v57
  %v423 = vunpack.c.l.b16 %v58
  %v424 = vunpack.c.h.b16 %v58
  %v425 = vunpack.c.l.b16 %v59
  %v426 = vunpack.c.h.b16 %v59
  %v427 = vunpack.c.l.b16 %v60
  %v428 = vunpack.c.h.b16 %v60
  %v429 = vunpack.c.l.b16 %v61
  %v430 = vunpack.c.h.b16 %v61
  %v431 = vunpack.c.l.b16 %v62
  %v432 = vunpack.c.h.b16 %v62
  %v433 = vunpack.c.l.b16 %v63
  %v434 = vunpack.c.h.b16 %v63
  %v435 = vunpack.c.l.b16 %v64
  %v436 = vunpack.c.h.b16 %v64
  %v437 = vunpack.c.l.b16 %v65
  %v438 = vunpack.c.h.b16 %v65
  %v439 = vunpack.c.l.b16 %v66
  %v440 = vunpack.c.h.b16 %v66
  %v441 = vunpack.c.l.b16 %v67
  %v442 = vunpack.c.h.b16 %v67
  %v443 = vunpack.c.l.b16 %v68
  %v444 = vunpack.c.h.b16 %v68
  %v445 = vunpack.c.l.b16 %v69
  %v446 = vunpack.c.h.b16 %v69
  %v447 = vunpack.c.l.b16 %v70
  %v448 = vunpack.c.h.b16 %v70
  %v449 = vunpack.c.l.b16 %v71
  %v450 = vunpack.c.h.b16 %v71
  %v451 = vunpack.c.l.b16 %v72
  %v452 = vunpack.c.h.b16 %v72
  %v453 = vunpack.c.l.b16 %v73
  %v454 = vunpack.c.h.b16 %v73
  %v455 = vunpack.c.l.b16 %v74
  %v456 = vunpack.c.h.b16 %v74
  %v457 = vunpack.c.l.b16 %v75
  %v458 = vunpack.c.h.b16 %v75
  %v459 = vunpack.c.l.b16 %v76
  %v460 = vunpack.c.h.b16 %v76
  %v461 = vunpack.c.l.b16 %v77
  %v462 = vunpack.c.h.b16 %v77
  %v463 = vunpack.c.l.b16 %v78
  %v464 = vunpack.c.h.b16 %v78
  %v465 = vunpack.c.l.b16 %v79
  %v466 = vunpack.c.h.b16 %v79
  %v467 = vunpack.c.l.b16 %v80
  %v468 = vunpack.c.h.b16 %v80
  %v469 = vunpack.c.l.b16 %v81
  %v470 = vunpack.c.h.b16 %v81
  %v471 = vunpack.c.l.b16 %v82
  %v472 = vunpack.c.h.b16 %v82
  %v473 = vunpack.c.l.b16 %v83
  %v474 = vunpack.c.h.b16 %v83
  %v475 = vunpack.c.l.b16 %v84
  %v476 = vunpack.c.h.b16 %v84
  %v477 = vunpack.c.l.b16 %v85
  %v478 = vunpack.c.h.b16 %v85
  %v479 = vunpack.c.l.b16 %v86
  %v480 = vunpack.c.h.b16 %v86
  %v481 = vunpack.c.l.b16 %v87
  %v482 = vunpack.c.h.b16 %v87
  %v483 = vunpack.c.l.b16 %v88
  %v484 = vunpack.c.h.b16 %v88
  %v485 = vunpack.c.l.b16 %v89
  %v486 = vunpack.c.h.b16 %v89
  %v487 = vunpack.c.l.b16 %v90
  %v488 = vunpack.c.h.b16 %v90
  %v489 = vunpack.c.l.b16 %v91
  %v490 = vunpack.c.h.b16 %v91
  %v491 = vunpack.c.l.b16 %v92
  %v492 = vunpack.c.h.b16 %v92
  %v493 = vunpack.c.l.b16 %v93
  %v494 = vunpack.c.h.b16 %v93
  %v495 = vunpack.c.l.b16 %v94
  %v496 = vunpack.c.h.b16 %v94
  %v497 = vunpack.c.l.b16 %v95
  %v498 = vunpack.c.h.b16 %v95
  %v499 = vunpack.c.l.b16 %v96
  %v500 = vunpack.c.h.b16 %v96
  %v501 = vunpack.c.l.b16 %v97
  %v502 = vunpack.c.h.b16 %v97
  %v503 = vunpack.c.l.b16 %v98
  %v504 = vunpack.c.h.b16 %v98
  %v505 = vunpack.c.l.b16 %v99
  %v506 = vunpack.c.h.b16 %v99
  %v507 = vunpack.c.l.b16 %v100
  %v508 = vunpack.c.h.b16 %v100
  %v509 = vunpack.c.l.b16 %v101
  %v510 = vunpack.c.h.b16 %v101
  %v511 = vunpack.c.l.b16 %v102
  %v512 = vunpack.c.h.b16 %v102
  %v513 = vunpack.c.l.b16 %v103
  %v514 = vunpack.c.h.b16 %v103
  %v515 = vunpack.c.l.b16 %v104
  %v516 = vunpack.c.h.b16 %v104
  %v517 = vunpack.c.l.b16 %v105
  %v518 = vunpack.c.h.b16 %v105
  %v519 = vunpack.c.l.b16 %v106
  %v520 = vunpack.c.h.b16 %v106
  %v521 = vunpack.c.l.b16 %v107
  %v522 = vunpack.c.h.b16 %v107
  %v523 = vunpack.c.l.b16 %v108
  %v524 = vunpack.c.h.b16 %v108
  %v525 = vunpack.c.l.b16 %v109
  %v526 = vunpack.c.h.b16 %v109
  %v527 = vunpack.c.l.b16 %v110
  %v528 = vunpack.c.h.b16 %v110
  %v529 = vunpack.c.l.b16 %v111
  %v530 = vunpack.c.h.b16 %v111
  %v531 = vunpack.c.l.b16 %v112
  %v532 = vunpack.c.h.b16 %v112
  %v533 = vunpack.c.l.b16 %v113
  %v534 = vunpack.c.h.b16 %v113
  %v535 = vunpack.c.l.b16 %v114
  %v536 = vunpack.c.h.b16 %v114
  %v537 = vunpack.c.l.b16 %v115
  %v538 = vunpack.c.h.b16 %v115
  %v539 = vunpack.c.l.b16 %v116
  %v540 = vunpack.c.h.b16 %v116
  %v541 = vunpack.c.l.b16 %v117
  %v542 = vunpack.c.h.b16 %v117
  %v543 = vunpack.c.l.b16 %v118
  %v544 = vunpack.c.h.b16 %v118
  %v545 = vunpack.c.l.b16 %v119
  %v546 = vunpack.c.h.b16 %v119
  %v547 = vunpack.c.l.b16 %v120
  %v548 = vunpack.c.h.b16 %v120
  %v549 = vunpack.c.l.b16 %v121
  %v550 = vunpack.c.h.b16 %v121
  %v551 = vunpack.c.l.b16 %v122
  %v552 = vunpack.c.h.b16 %v122
  %v553 = vunpack.c.l.b16 %v123
  %v554 = vunpack.c.h.b16 %v123
  %v555 = vunpack.c.l.b16 %v124
  %v556 = vunpack.c.h.b16 %v124
  %v557 = vunpack.c.l.b16 %v125
  %v558 = vunpack.c.h.b16 %v125
  %v559 = vunpack.c.l.b16 %v126
  %v560 = vunpack.c.h.b16 %v126
  %v561 = vunpack.c.l.b16 %v127
  %v562 = vunpack.c.h.b16 %v127
  %v563 = vunpack.c.l.b16 %v128
  %v564 = vunpack.c.h.b16 %v128
  %v565 = vunpack.c.l.b16 %v129
  %v566 = vunpack.c.h.b16 %v129
  %v567 = vunpack.c.l.b16 %v130
  %v568 = vunpack.c.h.b16 %v130
  %v569 = vunpack.c.l.b16 %v131
  %v570 = vunpack.c.h.b16 %v131
  %v571 = vunpack.c.l.b16 %v132
  %v572 = vunpack.c.h.b16 %v132
  %v573 = vunpack.c.l.b16 %v133
  %v574 = vunpack.c.h.b16 %v133
  %v575 = vunpack.c.l.b16 %v134
  %v576 = vunpack.c.h.b16 %v134
  %v577 = vunpack.c.l.b16 %v135
  %v578 = vunpack.c.h.b16 %v135
  %v579 = vunpack.c.l.b16 %v136
  %v580 = vunpack.c.h.b16 %v136
  %v581 = vunpack.c.l.b16 %v137
  %v582 = vunpack.c.h.b16 %v137
  %v583 = vunpack.c.l.b16 %v138
  %v584 = vunpack.c.h.b16 %v138
  %v585 = vunpack.c.l.b16 %v139
  %v586 = vunpack.c.h.b16 %v139
  %v587 = vunpack.c.l.b16 %v140
  %v588 = vunpack.c.h.b16 %v140
  %v589 = vunpack.c.l.b16 %v141
  %v590 = vunpack.c.h.b16 %v141
  %v591 = vunpack.c.l.b16 %v142
  %v592 = vunpack.c.h.b16 %v142
  %v593 = vunpack.c.l.b16 %v143
  %v594 = vunpack.c.h.b16 %v143
  %v595 = vunpack.c.l.b16 %v144
  %v596 = vunpack.c.h.b16 %v144
  %v597 = vunpack.c.l.b16 %v145
  %v598 = vunpack.c.h.b16 %v145
  %v599 = vunpack.c.l.b16 %v146
  %v600 = vunpack.c.h.b16 %v146
  %v601 = vunpack.c.l.b16 %v147
  %v602 = vunpack.c.h.b16 %v147
  %v603 = vunpack.c.l.b16 %v148
  %v604 = vunpack.c.h.b16 %v148
  %v605 = vunpack.c.l.b16 %v149
  %v606 = vunpack.c.h.b16 %v149
  %v607 = vunpack.c.l.b16 %v150
  %v608 = vunpack.c.h.b16 %v150
  %v609 = vunpack.c.l.b16 %v151
  %v610 = vunpack.c.h.b16 %v151
  %v611 = vunpack.c.l.b16 %v152
  %v612 = vunpack.c.h.b16 %v152
  %v613 = vunpack.c.l.b16 %v153
  %v614 = vunpack.c.h.b16 %v153
  %v615 = vunpack.c.l.b16 %v154
  %v616 = vunpack.c.h.b16 %v154
  %v617 = vunpack.c.l.b16 %v155
  %v618 = vunpack.c.h.b16 %v155
  %v619 = vunpack.c.l.b16 %v156
  %v620 = vunpack.c.h.b16 %v156
  %v621 = vunpack.c.l.b16 %v157
  %v622 = vunpack.c.h.b16 %v157
  %v623 = vunpack.c.l.b16 %v158
  %v624 = vunpack.c.h.b16 %v158
  %v625 = vunpack.c.l.b16 %v159
  %v626 = vunpack.c.h.b16 %v159
  %v627 = vunpack.c.l.b16 %v160
  %v628 = vunpack.c.h.b16 %v160
  %v629 = vunpack.c.l.b16 %v161
  %v630 = vunpack.c.h.b16 %v161
  %v631 = vunpack.c.l.b16 %v162
  %v632 = vunpack.c.h.b16 %v162
  %v633 = vpack.c.b16 %v347, %v345
  %v634 = vpack.c.b16 %v348, %v346
  %v635 = vpack.c.b16 %v351, %v349
  %v636 = vpack.c.b16 %v352, %v350
  %v637 = vpack.c.b16 %v355, %v353
  %v638 = vpack.c.b16 %v356, %v354
  %v639 = vpack.c.b16 %v359, %v357
  %v640 = vpack.c.b16 %v360, %v358
  %v641 = vpack.c.b16 %v363, %v361
  %v642 = vpack.c.b16 %v364, %v362
  %v643 = vpack.c.b16 %v367, %v365
  %v644 = vpack.c.b16 %v368, %v366
  %v645 = vpack.c.b16 %v371, %v369
  %v646 = vpack.c.b16 %v372, %v370
  %v647 = vpack.c.b16 %v375, %v373
  %v648 = vpack.c.b16 %v376, %v374
  %v649 = vpack.c.b16 %v379, %v377
  %v650 = vpack.c.b16 %v380, %v378
  %v651 = vpack.c.b16 %v383, %v381
  %v652 = vpack.c.b16 %v384, %v382
  %v653 = vpack.c.b16 %v387, %v385
  %v654 = vpack.c.b16 %v388, %v386
  %v655 = vpack.c.b16 %v391, %v389
  %v656 = vpack.c.b16 %v392, %v390
  %v657 = vpack.c.b16 %v395, %v393
  %v658 = vpack.c.b16 %v396, %v394
  %v659 = vpack.c.b16 %v399, %v397
  %v660 = vpack.c.b16 %v400, %v398
  %v661 = vpack.c.b16 %v403, %v401
  %v662 = vpack.c.b16 %v404, %v402
  %v663 = vpack.c.b16 %v407, %v405
  %v664 = vpack.c.b16 %v408, %v406
  %v665 = vpack.c.b16 %v411, %v409
  %v666 = vpack.c.b16 %v412, %v410
  %v667 = vpack.c.b16 %v415, %v413
  %v668 = vpack.c.b16 %v416, %v414
  %v669 = vpack.c.b16 %v419, %v417
  %v670 = vpack.c.b16 %v420, %v418
  %v671 = vpack.c.b16 %v423, %v421
  %v672 = vpack.c.b16 %v424, %v422
  %v673 = vpack.c.b16 %v427, %v425
  %v674 = vpack.c.b16 %v428, %v426
  %v675 = vpack.c.b16 %v431, %v429
  %v676 = vpack.c.b16 %v432, %v430
  %v677 = vpack.c.b16 %v435, %v433
  %v678 = vpack.c.b16 %v436, %v434
  %v679 = vpack.c.b16 %v439, %v437
  %v680 = vpack.c.b16 %v440, %v438
  %v681 = vpack.c.b16 %v443, %v441
  %v682 = vpack.c.b16 %v444, %v442
  %v683 = vpack.c.b16 %v447, %v445
  %v684 = vpack.c.b16 %v448, %v446
  %v685 = vpack.c.b16 %v451, %v449
  %v686 = vpack.c.b16 %v452, %v450
  %v687 = vpack.c.b16 %v455, %v453
  %v688 = vpack.c.b16 %v456, %v454
  %v689 = vpack.c.b16 %v459, %v457
  %v690 = vpack.c.b16 %v460, %v458
  %v691 = vpack.c.b16 %v463, %v461
  %v692 = vpack.c.b16 %v464, %v462
  %v693 = vpack.c.b16 %v467, %v465
  %v694 = vpack.c.b16 %v468, %v466
  %v695 = vpack.c.b16 %v471, %v469
  %v696 = vpack.c.b16 %v472, %v470
  %v697 = vpack.c.b16 %v475, %v473
  %v698 = vpack.c.b16 %v476, %v474
  %v699 = vpack.c.b16 %v479, %v477
  %v700 = vpack.c.b16 %v480, %v478
  %v701 = vpack.c.b16 %v483, %v481
  %v702 = vpack.c.b16 %v484, %v482
  %v703 = vpack.c.b16 %v487, %v485
  %v704 = vpack.c.b16 %v488, %v486
  %v705 = vpack.c.b16 %v491, %v489
  %v706 = vpack.c.b16 %v492, %v490
  %v707 = vpack.c.b16 %v495, %v493
  %v708 = vpack.c.b16 %v496, %v494
  %v709 = vpack.c.b16 %v499, %v497
  %v710 = vpack.c.b16 %v500, %v498
  %v711 = vpack.c.b16 %v503, %v501
  %v712 = vpack.c.b16 %v504, %v502
  %v713 = vpack.c.b16 %v507, %v505
  %v714 = vpack.c.b16 %v508, %v506
  %v715 = vpack.c.b16 %v511, %v509
  %v716 = vpack.c.b16 %v512, %v510
  %v717 = vpack.c.b16 %v515, %v513
  %v718 = vpack.c.b16 %v516, %v514
  %v719 = vpack.c.b16 %v519, %v517
  %v720 = vpack.c.b16 %v520, %v518
  %v721 = vpack.c.b16 %v523, %v521
  %v722 = vpack.c.b16 %v524, %v522
  %v723 = vpack.c.b16 %v527, %v525
  %v724 = vpack.c.b16 %v528, %v526
  %v725 = vpack.c.b16 %v531, %v529
  %v726 = vpack.c.b16 %v532, %v530
  %v727 = vpack.c.b16 %v535, %v533
  %v728 = vpack.c.b16 %v536, %v534
  %v729 = vpack.c.b16 %v539, %v537
  %v730 = vpack.c.b16 %v540, %v538
  %v731 = vpack.c.b16 %v543, %v541
  %v732 = vpack.c.b16 %v544, %v542
  %v733 = vpack.c.b16 %v547, %v545
  %v734 = vpack.c.b16 %v548, %v546
  %v735 = vpack.c.b16 %v551, %v549
  %v736 = vpack.c.b16 %v552, %v550
  %v737 = vpack.c.b16 %v555, %v553
  %v738 = vpack.c.b16 %v556, %v554
  %v739 = vpack.c.b16 %v559, %v557
  %v740 = vpack.c.b16 %v560, %v558
  %v741 = vpack.c.b16 %v563, %v561
  %v742 = vpack.c.b16 %v564, %v562
  %v743 = vpack.c.b16 %v567, %v565
  %v744 = vpack.c.b16 %v568, %v566
  %v745 = vpack.c.b16 %v571, %v569
  %v746 = vpack.c.b16 %v572, %v570
  %v747 = vpack.c.b16 %v575, %v573
  %v748 = vpack.c.b16 %v576, %v574
  %v749 = vpack.c.b16 %v579, %v577
  %v750 = vpack.c.b16 %v580, %v578
  %v751 = vpack.c.b16 %v583, %v581
  %v752 = vpack.c.b16 %v584, %v582
  %v753 = vpack.c.b16 %v587, %v585
  %v754 = vpack.c.b16 %v588, %v586
  %v755 = vpack.c.b16 %v591, %v589
  %v756 = vpack.c.b16 %v592, %v590
  %v757 = vpack.c.b16 %v595, %v593
  %v758 = vpack.c.b16 %v596, %v594
  %v759 = vpack.c.b16 %v599, %v597
  %v760 = vpack.c.b16 %v600, %v598
  %v761 = vpack.c.b16 %v603, %v601
  %v762 = vpack.c.b16 %v604, %v602
  %v763 = vpack.c.b16 %v607, %v605
  %v764 = vpack.c.b16 %v608, %v606
  %v765 = vpack.c.b16 %v611, %v609
  %v766 = vpack.c.b16 %v612, %v610
  %v767 = vpack.c.b16 %v615, %v613
  %v768 = vpack.c.b16 %v616, %v614
  %v769 = vpack.c.b16 %v619, %v617
  %v770 = vpack.c.b16 %v620, %v618
  %v771 = vpack.c.b16 %v623, %v621
  %v772 = vpack.c.b16 %v624, %v622
  %v773 = vpack.c.b16 %v627, %v625
  %v774 = vpack.c.b16 %v628, %v626
  %v775 = vpack.c.b16 %v631, %v629
  %v776 = vpack.c.b16 %v632, %v630
  %921 = vmatpush.bf16.msra.mxu0 %v647
  %922 = vmatpush.bf16.msra.mxu0 %v645
  %923 = vmatpush.bf16.msra.mxu0 %v643
  %924 = vmatpush.bf16.msra.mxu0 %v641
  %925 = vmatpush.bf16.msra.mxu0 %v639
  %926 = vmatpush.bf16.msra.mxu0 %v637
  %927 = vmatpush.bf16.msra.mxu0 %v635
  %928 = vmatpush.bf16.msra.mxu0 %v633
  %929 = vmatmul.bf16.gmra.mxu0 %v183
  %v930 = vpop.f32.mrf.mxu0
  %v931 = vadd.f32 %v165, %v930
  %v932 = vpop.f32.mrf.mxu0
  %933 = vdwg.mxu0
  %934 = vmatpush.bf16.msra.mxu0 %v663
  %935 = vmatpush.bf16.msra.mxu0 %v661
  %936 = vmatpush.bf16.msra.mxu0 %v659
  %937 = vmatpush.bf16.msra.mxu0 %v657
  %938 = vmatpush.bf16.msra.mxu0 %v655
  %939 = vmatpush.bf16.msra.mxu0 %v653
  %940 = vmatpush.bf16.msra.mxu0 %v651
  %941 = vmatpush.bf16.msra.mxu0 %v649
  %942 = vmatmul.bf16.gmra.mxu0 %v184
  %v943 = vpop.f32.mrf.mxu0
  %v944 = vadd.f32 %v931, %v943
  %v945 = vpop.f32.mrf.mxu0
  %946 = vdwg.mxu0
  %947 = vmatpush.bf16.msra.mxu0 %v679
  %948 = vmatpush.bf16.msra.mxu0 %v677
  %949 = vmatpush.bf16.msra.mxu0 %v675
  %950 = vmatpush.bf16.msra.mxu0 %v673
  %951 = vmatpush.bf16.msra.mxu0 %v671
  %952 = vmatpush.bf16.msra.mxu0 %v669
  %953 = vmatpush.bf16.msra.mxu0 %v667
  %954 = vmatpush.bf16.msra.mxu0 %v665
  %955 = vmatmul.bf16.gmra.mxu0 %v185
  %v956 = vpop.f32.mrf.mxu0
  %v957 = vadd.f32 %v944, %v956
  %v958 = vpop.f32.mrf.mxu0
  %959 = vdwg.mxu0
  %960 = vmatpush.bf16.msra.mxu0 %v695
  %961 = vmatpush.bf16.msra.mxu0 %v693
  %962 = vmatpush.bf16.msra.mxu0 %v691
  %963 = vmatpush.bf16.msra.mxu0 %v689
  %964 = vmatpush.bf16.msra.mxu0 %v687
  %965 = vmatpush.bf16.msra.mxu0 %v685
  %966 = vmatpush.bf16.msra.mxu0 %v683
  %967 = vmatpush.bf16.msra.mxu0 %v681
  %968 = vmatmul.bf16.gmra.mxu0 %v186
  %v969 = vpop.f32.mrf.mxu0
  %v970 = vadd.f32 %v957, %v969
  %v971 = vpop.f32.mrf.mxu0
  %972 = vdwg.mxu0
  %973 = vmatpush.bf16.msra.mxu0 %v711
  %974 = vmatpush.bf16.msra.mxu0 %v709
  %975 = vmatpush.bf16.msra.mxu0 %v707
  %976 = vmatpush.bf16.msra.mxu0 %v705
  %977 = vmatpush.bf16.msra.mxu0 %v703
  %978 = vmatpush.bf16.msra.mxu0 %v701
  %979 = vmatpush.bf16.msra.mxu0 %v699
  %980 = vmatpush.bf16.msra.mxu0 %v697
  %981 = vmatmul.bf16.gmra.mxu0 %v187
  %v982 = vpop.f32.mrf.mxu0
  %v983 = vadd.f32 %v970, %v982
  %v984 = vpop.f32.mrf.mxu0
  %985 = vdwg.mxu0
  %986 = vmatpush.bf16.msra.mxu0 %v727
  %987 = vmatpush.bf16.msra.mxu0 %v725
  %988 = vmatpush.bf16.msra.mxu0 %v723
  %989 = vmatpush.bf16.msra.mxu0 %v721
  %990 = vmatpush.bf16.msra.mxu0 %v719
  %991 = vmatpush.bf16.msra.mxu0 %v717
  %992 = vmatpush.bf16.msra.mxu0 %v715
  %993 = vmatpush.bf16.msra.mxu0 %v713
  %994 = vmatmul.bf16.gmra.mxu0 %v188
  %v995 = vpop.f32.mrf.mxu0
  %v996 = vadd.f32 %v983, %v995
  %v997 = vpop.f32.mrf.mxu0
  %998 = vdwg.mxu0
  %999 = vmatpush.bf16.msra.mxu0 %v743
  %1000 = vmatpush.bf16.msra.mxu0 %v741
  %1001 = vmatpush.bf16.msra.mxu0 %v739
  %1002 = vmatpush.bf16.msra.mxu0 %v737
  %1003 = vmatpush.bf16.msra.mxu0 %v735
  %1004 = vmatpush.bf16.msra.mxu0 %v733
  %1005 = vmatpush.bf16.msra.mxu0 %v731
  %1006 = vmatpush.bf16.msra.mxu0 %v729
  %1007 = vmatmul.bf16.gmra.mxu0 %v189
  %v1008 = vpop.f32.mrf.mxu0
  %v1009 = vadd.f32 %v996, %v1008
  %v1010 = vpop.f32.mrf.mxu0
  %1011 = vdwg.mxu0
  %1012 = vmatpush.bf16.msra.mxu0 %v759
  %1013 = vmatpush.bf16.msra.mxu0 %v757
  %1014 = vmatpush.bf16.msra.mxu0 %v755
  %1015 = vmatpush.bf16.msra.mxu0 %v753
  %1016 = vmatpush.bf16.msra.mxu0 %v751
  %1017 = vmatpush.bf16.msra.mxu0 %v749
  %1018 = vmatpush.bf16.msra.mxu0 %v747
  %1019 = vmatpush.bf16.msra.mxu0 %v745
  %1020 = vmatmul.bf16.gmra.mxu0 %v190
  %v1021 = vpop.f32.mrf.mxu0
  %v1022 = vadd.f32 %v1009, %v1021
  %v1023 = vpop.f32.mrf.mxu0
  %1024 = vdwg.mxu0
  %1025 = vmatpush.bf16.msra.mxu0 %v775
  %1026 = vmatpush.bf16.msra.mxu0 %v773
  %1027 = vmatpush.bf16.msra.mxu0 %v771
  %1028 = vmatpush.bf16.msra.mxu0 %v769
  %1029 = vmatpush.bf16.msra.mxu0 %v767
  %1030 = vmatpush.bf16.msra.mxu0 %v765
  %1031 = vmatpush.bf16.msra.mxu0 %v763
  %1032 = vmatpush.bf16.msra.mxu0 %v761
  %1033 = vmatmul.bf16.gmra.mxu0 %v191
  %v1034 = vpop.f32.mrf.mxu0
  %v1035 = vadd.f32 %v1022, %v1034
  %v1036 = vpop.f32.mrf.mxu0
  %1037 = vdwg.mxu0
  %1038 = vmatpush.bf16.msra.mxu0 %v648
  %1039 = vmatpush.bf16.msra.mxu0 %v646
  %1040 = vmatpush.bf16.msra.mxu0 %v644
  %1041 = vmatpush.bf16.msra.mxu0 %v642
  %1042 = vmatpush.bf16.msra.mxu0 %v640
  %1043 = vmatpush.bf16.msra.mxu0 %v638
  %1044 = vmatpush.bf16.msra.mxu0 %v636
  %1045 = vmatpush.bf16.msra.mxu0 %v634
  %1046 = vmatmul.bf16.gmra.mxu0 %v183
  %v1047 = vpop.f32.mrf.mxu0
  %v1048 = vadd.f32 %v166, %v1047
  %v1049 = vpop.f32.mrf.mxu0
  %1050 = vdwg.mxu0
  %1051 = vmatpush.bf16.msra.mxu0 %v664
  %1052 = vmatpush.bf16.msra.mxu0 %v662
  %1053 = vmatpush.bf16.msra.mxu0 %v660
  %1054 = vmatpush.bf16.msra.mxu0 %v658
  %1055 = vmatpush.bf16.msra.mxu0 %v656
  %1056 = vmatpush.bf16.msra.mxu0 %v654
  %1057 = vmatpush.bf16.msra.mxu0 %v652
  %1058 = vmatpush.bf16.msra.mxu0 %v650
  %1059 = vmatmul.bf16.gmra.mxu0 %v184
  %v1060 = vpop.f32.mrf.mxu0
  %v1061 = vadd.f32 %v1048, %v1060
  %v1062 = vpop.f32.mrf.mxu0
  %1063 = vdwg.mxu0
  %1064 = vmatpush.bf16.msra.mxu0 %v680
  %1065 = vmatpush.bf16.msra.mxu0 %v678
  %1066 = vmatpush.bf16.msra.mxu0 %v676
  %1067 = vmatpush.bf16.msra.mxu0 %v674
  %1068 = vmatpush.bf16.msra.mxu0 %v672
  %1069 = vmatpush.bf16.msra.mxu0 %v670
  %1070 = vmatpush.bf16.msra.mxu0 %v668
  %1071 = vmatpush.bf16.msra.mxu0 %v666
  %1072 = vmatmul.bf16.gmra.mxu0 %v185
  %v1073 = vpop.f32.mrf.mxu0
  %v1074 = vadd.f32 %v1061, %v1073
  %v1075 = vpop.f32.mrf.mxu0
  %1076 = vdwg.mxu0
  %1077 = vmatpush.bf16.msra.mxu0 %v696
  %1078 = vmatpush.bf16.msra.mxu0 %v694
  %1079 = vmatpush.bf16.msra.mxu0 %v692
  %1080 = vmatpush.bf16.msra.mxu0 %v690
  %1081 = vmatpush.bf16.msra.mxu0 %v688
  %1082 = vmatpush.bf16.msra.mxu0 %v686
  %1083 = vmatpush.bf16.msra.mxu0 %v684
  %1084 = vmatpush.bf16.msra.mxu0 %v682
  %1085 = vmatmul.bf16.gmra.mxu0 %v186
  %v1086 = vpop.f32.mrf.mxu0
  %v1087 = vadd.f32 %v1074, %v1086
  %v1088 = vpop.f32.mrf.mxu0
  %1089 = vdwg.mxu0
  %1090 = vmatpush.bf16.msra.mxu0 %v712
  %1091 = vmatpush.bf16.msra.mxu0 %v710
  %1092 = vmatpush.bf16.msra.mxu0 %v708
  %1093 = vmatpush.bf16.msra.mxu0 %v706
  %1094 = vmatpush.bf16.msra.mxu0 %v704
  %1095 = vmatpush.bf16.msra.mxu0 %v702
  %1096 = vmatpush.bf16.msra.mxu0 %v700
  %1097 = vmatpush.bf16.msra.mxu0 %v698
  %1098 = vmatmul.bf16.gmra.mxu0 %v187
  %v1099 = vpop.f32.mrf.mxu0
  %v1100 = vadd.f32 %v1087, %v1099
  %v1101 = vpop.f32.mrf.mxu0
  %1102 = vdwg.mxu0
  %1103 = vmatpush.bf16.msra.mxu0 %v728
  %1104 = vmatpush.bf16.msra.mxu0 %v726
  %1105 = vmatpush.bf16.msra.mxu0 %v724
  %1106 = vmatpush.bf16.msra.mxu0 %v722
  %1107 = vmatpush.bf16.msra.mxu0 %v720
  %1108 = vmatpush.bf16.msra.mxu0 %v718
  %1109 = vmatpush.bf16.msra.mxu0 %v716
  %1110 = vmatpush.bf16.msra.mxu0 %v714
  %1111 = vmatmul.bf16.gmra.mxu0 %v188
  %v1112 = vpop.f32.mrf.mxu0
  %v1113 = vadd.f32 %v1100, %v1112
  %v1114 = vpop.f32.mrf.mxu0
  %1115 = vdwg.mxu0
  %1116 = vmatpush.bf16.msra.mxu0 %v744
  %1117 = vmatpush.bf16.msra.mxu0 %v742
  %1118 = vmatpush.bf16.msra.mxu0 %v740
  %1119 = vmatpush.bf16.msra.mxu0 %v738
  %1120 = vmatpush.bf16.msra.mxu0 %v736
  %1121 = vmatpush.bf16.msra.mxu0 %v734
  %1122 = vmatpush.bf16.msra.mxu0 %v732
  %1123 = vmatpush.bf16.msra.mxu0 %v730
  %1124 = vmatmul.bf16.gmra.mxu0 %v189
  %v1125 = vpop.f32.mrf.mxu0
  %v1126 = vadd.f32 %v1113, %v1125
  %v1127 = vpop.f32.mrf.mxu0
  %1128 = vdwg.mxu0
  %1129 = vmatpush.bf16.msra.mxu0 %v760
  %1130 = vmatpush.bf16.msra.mxu0 %v758
  %1131 = vmatpush.bf16.msra.mxu0 %v756
  %1132 = vmatpush.bf16.msra.mxu0 %v754
  %1133 = vmatpush.bf16.msra.mxu0 %v752
  %1134 = vmatpush.bf16.msra.mxu0 %v750
  %1135 = vmatpush.bf16.msra.mxu0 %v748
  %1136 = vmatpush.bf16.msra.mxu0 %v746
  %1137 = vmatmul.bf16.gmra.mxu0 %v190
  %v1138 = vpop.f32.mrf.mxu0
  %v1139 = vadd.f32 %v1126, %v1138
  %v1140 = vpop.f32.mrf.mxu0
  %1141 = vdwg.mxu0
  %1142 = vmatpush.bf16.msra.mxu0 %v776
  %1143 = vmatpush.bf16.msra.mxu0 %v774
  %1144 = vmatpush.bf16.msra.mxu0 %v772
  %1145 = vmatpush.bf16.msra.mxu0 %v770
  %1146 = vmatpush.bf16.msra.mxu0 %v768
  %1147 = vmatpush.bf16.msra.mxu0 %v766
  %1148 = vmatpush.bf16.msra.mxu0 %v764
  %1149 = vmatpush.bf16.msra.mxu0 %v762
  %1150 = vmatmul.bf16.gmra.mxu0 %v191
  %v1151 = vpop.f32.mrf.mxu0
  %v1152 = vadd.f32 %v1139, %v1151
  %v1153 = vpop.f32.mrf.mxu0
  %1154 = vdwg.mxu0
  %v1155 = vmax.f32 %v1035, 0.0
  %v1156 = vmax.f32 %v1152, 0.0
  %1157 = vst [vmem:[%s3] sm:$0xff] %v1155
  %1158 = vst [vmem:[%s3 + $0x8] sm:$0xff] %v1156
  // Predicated region
  $region14: #{autoencoder_forward.8} parent=0 // pred_check
    _
  $region15: #{autoencoder_forward.8} parent=0 // pred_check_branch
    %1160 = sbr.rel (0) target = $region17
  $region16: #{autoencoder_forward.8} parent=0 // pred_region
    _
  $region17: #{autoencoder_forward.8} parent=0 // pred_fallthru
    _
  // Predicated region
  $region18: #{autoencoder_forward.8} parent=0 // pred_check
    _
  $region19: #{autoencoder_forward.8} parent=0 // pred_check_branch
    %1162 = sbr.rel (0) target = $region21
  $region20: #{autoencoder_forward.8} parent=0 // pred_region
    _
  $region21: #{autoencoder_forward.8} parent=0 // pred_fallthru
    _

// kernel: tile.18
$region0: #{tile.18}
  #allocation0 [shape = 's32[1]{0}', space=sflag, size = 0x4, scoped, tag = 'scoped memory for tile.18']
  %s0 = inlined_call_operand.vmem [shape: f32[128], index: 0, kind: input, shape index: {}]
  %s1 = inlined_call_operand.vmem [shape: f32[4,128], index: 1, kind: output, shape index: {}]
  // Predicated region
  $region2: #{tile.18} parent=0 // pred_check
    _
  $region3: #{tile.18} parent=0 // pred_check_branch
    %3 = sbr.rel (0) target = $region5
  $region4: #{tile.18} parent=0 // pred_region
    _
  $region5: #{tile.18} parent=0 // pred_fallthru
    _
  %v4 = vld [vmem:[%s0] ss:$0 sm:$0xff]
  %5 = vst [vmem:[%s1] sm:$0xf] %v4

// kernel: autoencoder_forward.9
$region0: #{autoencoder_forward.9}
  #allocation0 [shape = 'u32[]', space=smem, size = 0x4, offset = 0x4, fixed_abs, tag = 'smem constant byte address 0x4 - core index']
  #allocation1 [shape = 'u32[72,128]{1,0:T(1,128)}', space=vmem, size = 0x9000, scoped, tag = 'internal scratch']
  %s0 = inlined_call_operand.vmem [shape: bf16[8,1024], index: 0, kind: input, shape index: {}]
  %s1 = inlined_call_operand.vmem [shape: bf16[1024,512], index: 1, kind: input, shape index: {}]
  %s2 = inlined_call_operand.vmem [shape: f32[1,512], index: 2, kind: input, shape index: {}]
  %s3 = inlined_call_operand.vmem [shape: f32[8,512], index: 3, kind: output, shape index: {}]
  %s4 = sld [smem:[#allocation0]]
  $region22: #{autoencoder_forward.9} parent=0
    _
  %s6 = ssub.s32 1, %s4
  %s7 = scalar_select 0, %s6, %s4
  // Predicated region
  $region2: #{autoencoder_forward.9} parent=0 // pred_check
    _
  $region3: #{autoencoder_forward.9} parent=0 // pred_check_branch
    %9 = sbr.rel (0) target = $region5
  $region4: #{autoencoder_forward.9} parent=0 // pred_region
    _
  $region5: #{autoencoder_forward.9} parent=0 // pred_fallthru
    _
  // Predicated region
  $region6: #{autoencoder_forward.9} parent=0 // pred_check
    _
  $region7: #{autoencoder_forward.9} parent=0 // pred_check_branch
    %11 = sbr.rel (0) target = $region9
  $region8: #{autoencoder_forward.9} parent=0 // pred_region
    _
  $region9: #{autoencoder_forward.9} parent=0 // pred_fallthru
    _
  // Predicated region
  $region10: #{autoencoder_forward.9} parent=0 // pred_check
    _
  $region11: #{autoencoder_forward.9} parent=0 // pred_check_branch
    %13 = sbr.rel (0) target = $region13
  $region12: #{autoencoder_forward.9} parent=0 // pred_region
    _
  $region13: #{autoencoder_forward.9} parent=0 // pred_fallthru
    _
  %v14 = vld [vmem:[%s0] sm:$0xff]
  %v15 = vld [vmem:[%s0 + $0x8] sm:$0xff]
  %v16 = vld [vmem:[%s0 + $0x10] sm:$0xff]
  %v17 = vld [vmem:[%s0 + $0x18] sm:$0xff]
  %v18 = vld [vmem:[%s1] sm:$0xff]
  %v19 = vld [vmem:[%s1 + $0x8] sm:$0xff]
  %v20 = vld [vmem:[%s1 + $0x10] sm:$0xff]
  %v21 = vld [vmem:[%s1 + $0x18] sm:$0xff]
  %v22 = vld [vmem:[%s1 + $0x20] sm:$0xff]
  %v23 = vld [vmem:[%s1 + $0x28] sm:$0xff]
  %v24 = vld [vmem:[%s1 + $0x30] sm:$0xff]
  %v25 = vld [vmem:[%s1 + $0x38] sm:$0xff]
  %v26 = vld [vmem:[%s1 + $0x40] sm:$0xff]
  %v27 = vld [vmem:[%s1 + $0x48] sm:$0xff]
  %v28 = vld [vmem:[%s1 + $0x50] sm:$0xff]
  %v29 = vld [vmem:[%s1 + $0x58] sm:$0xff]
  %v30 = vld [vmem:[%s1 + $0x60] sm:$0xff]
  %v31 = vld [vmem:[%s1 + $0x68] sm:$0xff]
  %v32 = vld [vmem:[%s1 + $0x70] sm:$0xff]
  %v33 = vld [vmem:[%s1 + $0x78] sm:$0xff]
  %v34 = vld [vmem:[%s1 + $0x80] sm:$0xff]
  %v35 = vld [vmem:[%s1 + $0x88] sm:$0xff]
  %v36 = vld [vmem:[%s1 + $0x90] sm:$0xff]
  %v37 = vld [vmem:[%s1 + $0x98] sm:$0xff]
  %v38 = vld [vmem:[%s1 + $0xa0] sm:$0xff]
  %v39 = vld [vmem:[%s1 + $0xa8] sm:$0xff]
  %v40 = vld [vmem:[%s1 + $0xb0] sm:$0xff]
  %v41 = vld [vmem:[%s1 + $0xb8] sm:$0xff]
  %v42 = vld [vmem:[%s1 + $0xc0] sm:$0xff]
  %v43 = vld [vmem:[%s1 + $0xc8] sm:$0xff]
  %v44 = vld [vmem:[%s1 + $0xd0] sm:$0xff]
  %v45 = vld [vmem:[%s1 + $0xd8] sm:$0xff]
  %v46 = vld [vmem:[%s1 + $0xe0] sm:$0xff]
  %v47 = vld [vmem:[%s1 + $0xe8] sm:$0xff]
  %v48 = vld [vmem:[%s1 + $0xf0] sm:$0xff]
  %v49 = vld [vmem:[%s1 + $0xf8] sm:$0xff]
  %v50 = vld [vmem:[%s1 + $0x100] sm:$0xff]
  %v51 = vld [vmem:[%s1 + $0x108] sm:$0xff]
  %v52 = vld [vmem:[%s1 + $0x110] sm:$0xff]
  %v53 = vld [vmem:[%s1 + $0x118] sm:$0xff]
  %v54 = vld [vmem:[%s1 + $0x120] sm:$0xff]
  %v55 = vld [vmem:[%s1 + $0x128] sm:$0xff]
  %v56 = vld [vmem:[%s1 + $0x130] sm:$0xff]
  %v57 = vld [vmem:[%s1 + $0x138] sm:$0xff]
  %v58 = vld [vmem:[%s1 + $0x140] sm:$0xff]
  %v59 = vld [vmem:[%s1 + $0x148] sm:$0xff]
  %v60 = vld [vmem:[%s1 + $0x150] sm:$0xff]
  %v61 = vld [vmem:[%s1 + $0x158] sm:$0xff]
  %v62 = vld [vmem:[%s1 + $0x160] sm:$0xff]
  %v63 = vld [vmem:[%s1 + $0x168] sm:$0xff]
  %v64 = vld [vmem:[%s1 + $0x170] sm:$0xff]
  %v65 = vld [vmem:[%s1 + $0x178] sm:$0xff]
  %v66 = vld [vmem:[%s1 + $0x180] sm:$0xff]
  %v67 = vld [vmem:[%s1 + $0x188] sm:$0xff]
  %v68 = vld [vmem:[%s1 + $0x190] sm:$0xff]
  %v69 = vld [vmem:[%s1 + $0x198] sm:$0xff]
  %v70 = vld [vmem:[%s1 + $0x1a0] sm:$0xff]
  %v71 = vld [vmem:[%s1 + $0x1a8] sm:$0xff]
  %v72 = vld [vmem:[%s1 + $0x1b0] sm:$0xff]
  %v73 = vld [vmem:[%s1 + $0x1b8] sm:$0xff]
  %v74 = vld [vmem:[%s1 + $0x1c0] sm:$0xff]
  %v75 = vld [vmem:[%s1 + $0x1c8] sm:$0xff]
  %v76 = vld [vmem:[%s1 + $0x1d0] sm:$0xff]
  %v77 = vld [vmem:[%s1 + $0x1d8] sm:$0xff]
  %v78 = vld [vmem:[%s1 + $0x1e0] sm:$0xff]
  %v79 = vld [vmem:[%s1 + $0x1e8] sm:$0xff]
  %v80 = vld [vmem:[%s1 + $0x1f0] sm:$0xff]
  %v81 = vld [vmem:[%s1 + $0x1f8] sm:$0xff]
  %v82 = vld [vmem:[%s1 + $0x200] sm:$0xff]
  %v83 = vld [vmem:[%s1 + $0x208] sm:$0xff]
  %v84 = vld [vmem:[%s1 + $0x210] sm:$0xff]
  %v85 = vld [vmem:[%s1 + $0x218] sm:$0xff]
  %v86 = vld [vmem:[%s1 + $0x220] sm:$0xff]
  %v87 = vld [vmem:[%s1 + $0x228] sm:$0xff]
  %v88 = vld [vmem:[%s1 + $0x230] sm:$0xff]
  %v89 = vld [vmem:[%s1 + $0x238] sm:$0xff]
  %v90 = vld [vmem:[%s1 + $0x240] sm:$0xff]
  %v91 = vld [vmem:[%s1 + $0x248] sm:$0xff]
  %v92 = vld [vmem:[%s1 + $0x250] sm:$0xff]
  %v93 = vld [vmem:[%s1 + $0x258] sm:$0xff]
  %v94 = vld [vmem:[%s1 + $0x260] sm:$0xff]
  %v95 = vld [vmem:[%s1 + $0x268] sm:$0xff]
  %v96 = vld [vmem:[%s1 + $0x270] sm:$0xff]
  %v97 = vld [vmem:[%s1 + $0x278] sm:$0xff]
  %v98 = vld [vmem:[%s1 + $0x280] sm:$0xff]
  %v99 = vld [vmem:[%s1 + $0x288] sm:$0xff]
  %v100 = vld [vmem:[%s1 + $0x290] sm:$0xff]
  %v101 = vld [vmem:[%s1 + $0x298] sm:$0xff]
  %v102 = vld [vmem:[%s1 + $0x2a0] sm:$0xff]
  %v103 = vld [vmem:[%s1 + $0x2a8] sm:$0xff]
  %v104 = vld [vmem:[%s1 + $0x2b0] sm:$0xff]
  %v105 = vld [vmem:[%s1 + $0x2b8] sm:$0xff]
  %v106 = vld [vmem:[%s1 + $0x2c0] sm:$0xff]
  %v107 = vld [vmem:[%s1 + $0x2c8] sm:$0xff]
  %v108 = vld [vmem:[%s1 + $0x2d0] sm:$0xff]
  %v109 = vld [vmem:[%s1 + $0x2d8] sm:$0xff]
  %v110 = vld [vmem:[%s1 + $0x2e0] sm:$0xff]
  %v111 = vld [vmem:[%s1 + $0x2e8] sm:$0xff]
  %v112 = vld [vmem:[%s1 + $0x2f0] sm:$0xff]
  %v113 = vld [vmem:[%s1 + $0x2f8] sm:$0xff]
  %v114 = vld [vmem:[%s1 + $0x300] sm:$0xff]
  %v115 = vld [vmem:[%s1 + $0x308] sm:$0xff]
  %v116 = vld [vmem:[%s1 + $0x310] sm:$0xff]
  %v117 = vld [vmem:[%s1 + $0x318] sm:$0xff]
  %v118 = vld [vmem:[%s1 + $0x320] sm:$0xff]
  %v119 = vld [vmem:[%s1 + $0x328] sm:$0xff]
  %v120 = vld [vmem:[%s1 + $0x330] sm:$0xff]
  %v121 = vld [vmem:[%s1 + $0x338] sm:$0xff]
  %v122 = vld [vmem:[%s1 + $0x340] sm:$0xff]
  %v123 = vld [vmem:[%s1 + $0x348] sm:$0xff]
  %v124 = vld [vmem:[%s1 + $0x350] sm:$0xff]
  %v125 = vld [vmem:[%s1 + $0x358] sm:$0xff]
  %v126 = vld [vmem:[%s1 + $0x360] sm:$0xff]
  %v127 = vld [vmem:[%s1 + $0x368] sm:$0xff]
  %v128 = vld [vmem:[%s1 + $0x370] sm:$0xff]
  %v129 = vld [vmem:[%s1 + $0x378] sm:$0xff]
  %v130 = vld [vmem:[%s1 + $0x380] sm:$0xff]
  %v131 = vld [vmem:[%s1 + $0x388] sm:$0xff]
  %v132 = vld [vmem:[%s1 + $0x390] sm:$0xff]
  %v133 = vld [vmem:[%s1 + $0x398] sm:$0xff]
  %v134 = vld [vmem:[%s1 + $0x3a0] sm:$0xff]
  %v135 = vld [vmem:[%s1 + $0x3a8] sm:$0xff]
  %v136 = vld [vmem:[%s1 + $0x3b0] sm:$0xff]
  %v137 = vld [vmem:[%s1 + $0x3b8] sm:$0xff]
  %v138 = vld [vmem:[%s1 + $0x3c0] sm:$0xff]
  %v139 = vld [vmem:[%s1 + $0x3c8] sm:$0xff]
  %v140 = vld [vmem:[%s1 + $0x3d0] sm:$0xff]
  %v141 = vld [vmem:[%s1 + $0x3d8] sm:$0xff]
  %v142 = vld [vmem:[%s1 + $0x3e0] sm:$0xff]
  %v143 = vld [vmem:[%s1 + $0x3e8] sm:$0xff]
  %v144 = vld [vmem:[%s1 + $0x3f0] sm:$0xff]
  %v145 = vld [vmem:[%s1 + $0x3f8] sm:$0xff]
  %v146 = vld [vmem:[%s1 + $0x400] sm:$0xff]
  %v147 = vld [vmem:[%s1 + $0x408] sm:$0xff]
  %v148 = vld [vmem:[%s1 + $0x410] sm:$0xff]
  %v149 = vld [vmem:[%s1 + $0x418] sm:$0xff]
  %v150 = vld [vmem:[%s1 + $0x420] sm:$0xff]
  %v151 = vld [vmem:[%s1 + $0x428] sm:$0xff]
  %v152 = vld [vmem:[%s1 + $0x430] sm:$0xff]
  %v153 = vld [vmem:[%s1 + $0x438] sm:$0xff]
  %v154 = vld [vmem:[%s1 + $0x440] sm:$0xff]
  %v155 = vld [vmem:[%s1 + $0x448] sm:$0xff]
  %v156 = vld [vmem:[%s1 + $0x450] sm:$0xff]
  %v157 = vld [vmem:[%s1 + $0x458] sm:$0xff]
  %v158 = vld [vmem:[%s1 + $0x460] sm:$0xff]
  %v159 = vld [vmem:[%s1 + $0x468] sm:$0xff]
  %v160 = vld [vmem:[%s1 + $0x470] sm:$0xff]
  %v161 = vld [vmem:[%s1 + $0x478] sm:$0xff]
  %v162 = vld [vmem:[%s1 + $0x480] sm:$0xff]
  %v163 = vld [vmem:[%s1 + $0x488] sm:$0xff]
  %v164 = vld [vmem:[%s1 + $0x490] sm:$0xff]
  %v165 = vld [vmem:[%s1 + $0x498] sm:$0xff]
  %v166 = vld [vmem:[%s1 + $0x4a0] sm:$0xff]
  %v167 = vld [vmem:[%s1 + $0x4a8] sm:$0xff]
  %v168 = vld [vmem:[%s1 + $0x4b0] sm:$0xff]
  %v169 = vld [vmem:[%s1 + $0x4b8] sm:$0xff]
  %v170 = vld [vmem:[%s1 + $0x4c0] sm:$0xff]
  %v171 = vld [vmem:[%s1 + $0x4c8] sm:$0xff]
  %v172 = vld [vmem:[%s1 + $0x4d0] sm:$0xff]
  %v173 = vld [vmem:[%s1 + $0x4d8] sm:$0xff]
  %v174 = vld [vmem:[%s1 + $0x4e0] sm:$0xff]
  %v175 = vld [vmem:[%s1 + $0x4e8] sm:$0xff]
  %v176 = vld [vmem:[%s1 + $0x4f0] sm:$0xff]
  %v177 = vld [vmem:[%s1 + $0x4f8] sm:$0xff]
  %v178 = vld [vmem:[%s1 + $0x500] sm:$0xff]
  %v179 = vld [vmem:[%s1 + $0x508] sm:$0xff]
  %v180 = vld [vmem:[%s1 + $0x510] sm:$0xff]
  %v181 = vld [vmem:[%s1 + $0x518] sm:$0xff]
  %v182 = vld [vmem:[%s1 + $0x520] sm:$0xff]
  %v183 = vld [vmem:[%s1 + $0x528] sm:$0xff]
  %v184 = vld [vmem:[%s1 + $0x530] sm:$0xff]
  %v185 = vld [vmem:[%s1 + $0x538] sm:$0xff]
  %v186 = vld [vmem:[%s1 + $0x540] sm:$0xff]
  %v187 = vld [vmem:[%s1 + $0x548] sm:$0xff]
  %v188 = vld [vmem:[%s1 + $0x550] sm:$0xff]
  %v189 = vld [vmem:[%s1 + $0x558] sm:$0xff]
  %v190 = vld [vmem:[%s1 + $0x560] sm:$0xff]
  %v191 = vld [vmem:[%s1 + $0x568] sm:$0xff]
  %v192 = vld [vmem:[%s1 + $0x570] sm:$0xff]
  %v193 = vld [vmem:[%s1 + $0x578] sm:$0xff]
  %v194 = vld [vmem:[%s1 + $0x580] sm:$0xff]
  %v195 = vld [vmem:[%s1 + $0x588] sm:$0xff]
  %v196 = vld [vmem:[%s1 + $0x590] sm:$0xff]
  %v197 = vld [vmem:[%s1 + $0x598] sm:$0xff]
  %v198 = vld [vmem:[%s1 + $0x5a0] sm:$0xff]
  %v199 = vld [vmem:[%s1 + $0x5a8] sm:$0xff]
  %v200 = vld [vmem:[%s1 + $0x5b0] sm:$0xff]
  %v201 = vld [vmem:[%s1 + $0x5b8] sm:$0xff]
  %v202 = vld [vmem:[%s1 + $0x5c0] sm:$0xff]
  %v203 = vld [vmem:[%s1 + $0x5c8] sm:$0xff]
  %v204 = vld [vmem:[%s1 + $0x5d0] sm:$0xff]
  %v205 = vld [vmem:[%s1 + $0x5d8] sm:$0xff]
  %v206 = vld [vmem:[%s1 + $0x5e0] sm:$0xff]
  %v207 = vld [vmem:[%s1 + $0x5e8] sm:$0xff]
  %v208 = vld [vmem:[%s1 + $0x5f0] sm:$0xff]
  %v209 = vld [vmem:[%s1 + $0x5f8] sm:$0xff]
  %v210 = vld [vmem:[%s1 + $0x600] sm:$0xff]
  %v211 = vld [vmem:[%s1 + $0x608] sm:$0xff]
  %v212 = vld [vmem:[%s1 + $0x610] sm:$0xff]
  %v213 = vld [vmem:[%s1 + $0x618] sm:$0xff]
  %v214 = vld [vmem:[%s1 + $0x620] sm:$0xff]
  %v215 = vld [vmem:[%s1 + $0x628] sm:$0xff]
  %v216 = vld [vmem:[%s1 + $0x630] sm:$0xff]
  %v217 = vld [vmem:[%s1 + $0x638] sm:$0xff]
  %v218 = vld [vmem:[%s1 + $0x640] sm:$0xff]
  %v219 = vld [vmem:[%s1 + $0x648] sm:$0xff]
  %v220 = vld [vmem:[%s1 + $0x650] sm:$0xff]
  %v221 = vld [vmem:[%s1 + $0x658] sm:$0xff]
  %v222 = vld [vmem:[%s1 + $0x660] sm:$0xff]
  %v223 = vld [vmem:[%s1 + $0x668] sm:$0xff]
  %v224 = vld [vmem:[%s1 + $0x670] sm:$0xff]
  %v225 = vld [vmem:[%s1 + $0x678] sm:$0xff]
  %v226 = vld [vmem:[%s1 + $0x680] sm:$0xff]
  %v227 = vld [vmem:[%s1 + $0x688] sm:$0xff]
  %v228 = vld [vmem:[%s1 + $0x690] sm:$0xff]
  %v229 = vld [vmem:[%s1 + $0x698] sm:$0xff]
  %v230 = vld [vmem:[%s1 + $0x6a0] sm:$0xff]
  %v231 = vld [vmem:[%s1 + $0x6a8] sm:$0xff]
  %v232 = vld [vmem:[%s1 + $0x6b0] sm:$0xff]
  %v233 = vld [vmem:[%s1 + $0x6b8] sm:$0xff]
  %v234 = vld [vmem:[%s1 + $0x6c0] sm:$0xff]
  %v235 = vld [vmem:[%s1 + $0x6c8] sm:$0xff]
  %v236 = vld [vmem:[%s1 + $0x6d0] sm:$0xff]
  %v237 = vld [vmem:[%s1 + $0x6d8] sm:$0xff]
  %v238 = vld [vmem:[%s1 + $0x6e0] sm:$0xff]
  %v239 = vld [vmem:[%s1 + $0x6e8] sm:$0xff]
  %v240 = vld [vmem:[%s1 + $0x6f0] sm:$0xff]
  %v241 = vld [vmem:[%s1 + $0x6f8] sm:$0xff]
  %v242 = vld [vmem:[%s1 + $0x700] sm:$0xff]
  %v243 = vld [vmem:[%s1 + $0x708] sm:$0xff]
  %v244 = vld [vmem:[%s1 + $0x710] sm:$0xff]
  %v245 = vld [vmem:[%s1 + $0x718] sm:$0xff]
  %v246 = vld [vmem:[%s1 + $0x720] sm:$0xff]
  %v247 = vld [vmem:[%s1 + $0x728] sm:$0xff]
  %v248 = vld [vmem:[%s1 + $0x730] sm:$0xff]
  %v249 = vld [vmem:[%s1 + $0x738] sm:$0xff]
  %v250 = vld [vmem:[%s1 + $0x740] sm:$0xff]
  %v251 = vld [vmem:[%s1 + $0x748] sm:$0xff]
  %v252 = vld [vmem:[%s1 + $0x750] sm:$0xff]
  %v253 = vld [vmem:[%s1 + $0x758] sm:$0xff]
  %v254 = vld [vmem:[%s1 + $0x760] sm:$0xff]
  %v255 = vld [vmem:[%s1 + $0x768] sm:$0xff]
  %v256 = vld [vmem:[%s1 + $0x770] sm:$0xff]
  %v257 = vld [vmem:[%s1 + $0x778] sm:$0xff]
  %v258 = vld [vmem:[%s1 + $0x780] sm:$0xff]
  %v259 = vld [vmem:[%s1 + $0x788] sm:$0xff]
  %v260 = vld [vmem:[%s1 + $0x790] sm:$0xff]
  %v261 = vld [vmem:[%s1 + $0x798] sm:$0xff]
  %v262 = vld [vmem:[%s1 + $0x7a0] sm:$0xff]
  %v263 = vld [vmem:[%s1 + $0x7a8] sm:$0xff]
  %v264 = vld [vmem:[%s1 + $0x7b0] sm:$0xff]
  %v265 = vld [vmem:[%s1 + $0x7b8] sm:$0xff]
  %v266 = vld [vmem:[%s1 + $0x7c0] sm:$0xff]
  %v267 = vld [vmem:[%s1 + $0x7c8] sm:$0xff]
  %v268 = vld [vmem:[%s1 + $0x7d0] sm:$0xff]
  %v269 = vld [vmem:[%s1 + $0x7d8] sm:$0xff]
  %v270 = vld [vmem:[%s1 + $0x7e0] sm:$0xff]
  %v271 = vld [vmem:[%s1 + $0x7e8] sm:$0xff]
  %v272 = vld [vmem:[%s1 + $0x7f0] sm:$0xff]
  %v273 = vld [vmem:[%s1 + $0x7f8] sm:$0xff]
  %v274 = vld [vmem:[%s2] sm:$0xf]
  %v276 = vperm.slane %v274, 0
  %v277 = vperm.slane %v274, 1
  %v278 = vperm.slane %v274, 2
  %v279 = vperm.slane %v274, 3
  %v288 = vunpack.c.l.b16 %v14
  %v289 = vunpack.c.h.b16 %v14
  %v290 = vunpack.c.l.b16 %v15
  %v291 = vunpack.c.h.b16 %v15
  %v292 = vunpack.c.l.b16 %v16
  %v293 = vunpack.c.h.b16 %v16
  %v294 = vunpack.c.l.b16 %v17
  %v295 = vunpack.c.h.b16 %v17
  %v296 = vpack.c.b16 %v288, %v288
  %v297 = vpack.c.b16 %v289, %v289
  %v298 = vpack.c.b16 %v290, %v290
  %v299 = vpack.c.b16 %v291, %v291
  %v300 = vpack.c.b16 %v292, %v292
  %v301 = vpack.c.b16 %v293, %v293
  %v302 = vpack.c.b16 %v294, %v294
  %v303 = vpack.c.b16 %v295, %v295
  %v568 = vunpack.c.l.b16 %v18
  %v569 = vunpack.c.h.b16 %v18
  %v570 = vunpack.c.l.b16 %v19
  %v571 = vunpack.c.h.b16 %v19
  %v572 = vunpack.c.l.b16 %v20
  %v573 = vunpack.c.h.b16 %v20
  %v574 = vunpack.c.l.b16 %v21
  %v575 = vunpack.c.h.b16 %v21
  %v576 = vunpack.c.l.b16 %v22
  %v577 = vunpack.c.h.b16 %v22
  %v578 = vunpack.c.l.b16 %v23
  %v579 = vunpack.c.h.b16 %v23
  %v580 = vunpack.c.l.b16 %v24
  %v581 = vunpack.c.h.b16 %v24
  %v582 = vunpack.c.l.b16 %v25
  %v583 = vunpack.c.h.b16 %v25
  %v584 = vunpack.c.l.b16 %v26
  %v585 = vunpack.c.h.b16 %v26
  %v586 = vunpack.c.l.b16 %v27
  %v587 = vunpack.c.h.b16 %v27
  %v588 = vunpack.c.l.b16 %v28
  %v589 = vunpack.c.h.b16 %v28
  %v590 = vunpack.c.l.b16 %v29
  %v591 = vunpack.c.h.b16 %v29
  %v592 = vunpack.c.l.b16 %v30
  %v593 = vunpack.c.h.b16 %v30
  %v594 = vunpack.c.l.b16 %v31
  %v595 = vunpack.c.h.b16 %v31
  %v596 = vunpack.c.l.b16 %v32
  %v597 = vunpack.c.h.b16 %v32
  %v598 = vunpack.c.l.b16 %v33
  %v599 = vunpack.c.h.b16 %v33
  %v600 = vunpack.c.l.b16 %v34
  %v601 = vunpack.c.h.b16 %v34
  %v602 = vunpack.c.l.b16 %v35
  %v603 = vunpack.c.h.b16 %v35
  %v604 = vunpack.c.l.b16 %v36
  %v605 = vunpack.c.h.b16 %v36
  %v606 = vunpack.c.l.b16 %v37
  %v607 = vunpack.c.h.b16 %v37
  %v608 = vunpack.c.l.b16 %v38
  %v609 = vunpack.c.h.b16 %v38
  %v610 = vunpack.c.l.b16 %v39
  %v611 = vunpack.c.h.b16 %v39
  %v612 = vunpack.c.l.b16 %v40
  %v613 = vunpack.c.h.b16 %v40
  %v614 = vunpack.c.l.b16 %v41
  %v615 = vunpack.c.h.b16 %v41
  %v616 = vunpack.c.l.b16 %v42
  %v617 = vunpack.c.h.b16 %v42
  %v618 = vunpack.c.l.b16 %v43
  %v619 = vunpack.c.h.b16 %v43
  %v620 = vunpack.c.l.b16 %v44
  %v621 = vunpack.c.h.b16 %v44
  %v622 = vunpack.c.l.b16 %v45
  %v623 = vunpack.c.h.b16 %v45
  %v624 = vunpack.c.l.b16 %v46
  %v625 = vunpack.c.h.b16 %v46
  %v626 = vunpack.c.l.b16 %v47
  %v627 = vunpack.c.h.b16 %v47
  %v628 = vunpack.c.l.b16 %v48
  %v629 = vunpack.c.h.b16 %v48
  %v630 = vunpack.c.l.b16 %v49
  %v631 = vunpack.c.h.b16 %v49
  %v632 = vunpack.c.l.b16 %v50
  %v633 = vunpack.c.h.b16 %v50
  %v634 = vunpack.c.l.b16 %v51
  %v635 = vunpack.c.h.b16 %v51
  %v636 = vunpack.c.l.b16 %v52
  %v637 = vunpack.c.h.b16 %v52
  %v638 = vunpack.c.l.b16 %v53
  %v639 = vunpack.c.h.b16 %v53
  %v640 = vunpack.c.l.b16 %v54
  %v641 = vunpack.c.h.b16 %v54
  %v642 = vunpack.c.l.b16 %v55
  %v643 = vunpack.c.h.b16 %v55
  %v644 = vunpack.c.l.b16 %v56
  %v645 = vunpack.c.h.b16 %v56
  %v646 = vunpack.c.l.b16 %v57
  %v647 = vunpack.c.h.b16 %v57
  %v648 = vunpack.c.l.b16 %v58
  %v649 = vunpack.c.h.b16 %v58
  %v650 = vunpack.c.l.b16 %v59
  %v651 = vunpack.c.h.b16 %v59
  %v652 = vunpack.c.l.b16 %v60
  %v653 = vunpack.c.h.b16 %v60
  %v654 = vunpack.c.l.b16 %v61
  %v655 = vunpack.c.h.b16 %v61
  %v656 = vunpack.c.l.b16 %v62
  %v657 = vunpack.c.h.b16 %v62
  %v658 = vunpack.c.l.b16 %v63
  %v659 = vunpack.c.h.b16 %v63
  %v660 = vunpack.c.l.b16 %v64
  %v661 = vunpack.c.h.b16 %v64
  %v662 = vunpack.c.l.b16 %v65
  %v663 = vunpack.c.h.b16 %v65
  %v664 = vunpack.c.l.b16 %v66
  %v665 = vunpack.c.h.b16 %v66
  %v666 = vunpack.c.l.b16 %v67
  %v667 = vunpack.c.h.b16 %v67
  %v668 = vunpack.c.l.b16 %v68
  %v669 = vunpack.c.h.b16 %v68
  %v670 = vunpack.c.l.b16 %v69
  %v671 = vunpack.c.h.b16 %v69
  %v672 = vunpack.c.l.b16 %v70
  %v673 = vunpack.c.h.b16 %v70
  %v674 = vunpack.c.l.b16 %v71
  %v675 = vunpack.c.h.b16 %v71
  %v676 = vunpack.c.l.b16 %v72
  %v677 = vunpack.c.h.b16 %v72
  %v678 = vunpack.c.l.b16 %v73
  %v679 = vunpack.c.h.b16 %v73
  %v680 = vunpack.c.l.b16 %v74
  %v681 = vunpack.c.h.b16 %v74
  %v682 = vunpack.c.l.b16 %v75
  %v683 = vunpack.c.h.b16 %v75
  %v684 = vunpack.c.l.b16 %v76
  %v685 = vunpack.c.h.b16 %v76
  %v686 = vunpack.c.l.b16 %v77
  %v687 = vunpack.c.h.b16 %v77
  %v688 = vunpack.c.l.b16 %v78
  %v689 = vunpack.c.h.b16 %v78
  %v690 = vunpack.c.l.b16 %v79
  %v691 = vunpack.c.h.b16 %v79
  %v692 = vunpack.c.l.b16 %v80
  %v693 = vunpack.c.h.b16 %v80
  %v694 = vunpack.c.l.b16 %v81
  %v695 = vunpack.c.h.b16 %v81
  %v696 = vunpack.c.l.b16 %v82
  %v697 = vunpack.c.h.b16 %v82
  %v698 = vunpack.c.l.b16 %v83
  %v699 = vunpack.c.h.b16 %v83
  %v700 = vunpack.c.l.b16 %v84
  %v701 = vunpack.c.h.b16 %v84
  %v702 = vunpack.c.l.b16 %v85
  %v703 = vunpack.c.h.b16 %v85
  %v704 = vunpack.c.l.b16 %v86
  %v705 = vunpack.c.h.b16 %v86
  %v706 = vunpack.c.l.b16 %v87
  %v707 = vunpack.c.h.b16 %v87
  %v708 = vunpack.c.l.b16 %v88
  %v709 = vunpack.c.h.b16 %v88
  %v710 = vunpack.c.l.b16 %v89
  %v711 = vunpack.c.h.b16 %v89
  %v712 = vunpack.c.l.b16 %v90
  %v713 = vunpack.c.h.b16 %v90
  %v714 = vunpack.c.l.b16 %v91
  %v715 = vunpack.c.h.b16 %v91
  %v716 = vunpack.c.l.b16 %v92
  %v717 = vunpack.c.h.b16 %v92
  %v718 = vunpack.c.l.b16 %v93
  %v719 = vunpack.c.h.b16 %v93
  %v720 = vunpack.c.l.b16 %v94
  %v721 = vunpack.c.h.b16 %v94
  %v722 = vunpack.c.l.b16 %v95
  %v723 = vunpack.c.h.b16 %v95
  %v724 = vunpack.c.l.b16 %v96
  %v725 = vunpack.c.h.b16 %v96
  %v726 = vunpack.c.l.b16 %v97
  %v727 = vunpack.c.h.b16 %v97
  %v728 = vunpack.c.l.b16 %v98
  %v729 = vunpack.c.h.b16 %v98
  %v730 = vunpack.c.l.b16 %v99
  %v731 = vunpack.c.h.b16 %v99
  %v732 = vunpack.c.l.b16 %v100
  %v733 = vunpack.c.h.b16 %v100
  %v734 = vunpack.c.l.b16 %v101
  %v735 = vunpack.c.h.b16 %v101
  %v736 = vunpack.c.l.b16 %v102
  %v737 = vunpack.c.h.b16 %v102
  %v738 = vunpack.c.l.b16 %v103
  %v739 = vunpack.c.h.b16 %v103
  %v740 = vunpack.c.l.b16 %v104
  %v741 = vunpack.c.h.b16 %v104
  %v742 = vunpack.c.l.b16 %v105
  %v743 = vunpack.c.h.b16 %v105
  %v744 = vunpack.c.l.b16 %v106
  %v745 = vunpack.c.h.b16 %v106
  %v746 = vunpack.c.l.b16 %v107
  %v747 = vunpack.c.h.b16 %v107
  %v748 = vunpack.c.l.b16 %v108
  %v749 = vunpack.c.h.b16 %v108
  %v750 = vunpack.c.l.b16 %v109
  %v751 = vunpack.c.h.b16 %v109
  %v752 = vunpack.c.l.b16 %v110
  %v753 = vunpack.c.h.b16 %v110
  %v754 = vunpack.c.l.b16 %v111
  %v755 = vunpack.c.h.b16 %v111
  %v756 = vunpack.c.l.b16 %v112
  %v757 = vunpack.c.h.b16 %v112
  %v758 = vunpack.c.l.b16 %v113
  %v759 = vunpack.c.h.b16 %v113
  %v760 = vunpack.c.l.b16 %v114
  %v761 = vunpack.c.h.b16 %v114
  %v762 = vunpack.c.l.b16 %v115
  %v763 = vunpack.c.h.b16 %v115
  %v764 = vunpack.c.l.b16 %v116
  %v765 = vunpack.c.h.b16 %v116
  %v766 = vunpack.c.l.b16 %v117
  %v767 = vunpack.c.h.b16 %v117
  %v768 = vunpack.c.l.b16 %v118
  %v769 = vunpack.c.h.b16 %v118
  %v770 = vunpack.c.l.b16 %v119
  %v771 = vunpack.c.h.b16 %v119
  %v772 = vunpack.c.l.b16 %v120
  %v773 = vunpack.c.h.b16 %v120
  %v774 = vunpack.c.l.b16 %v121
  %v775 = vunpack.c.h.b16 %v121
  %v776 = vunpack.c.l.b16 %v122
  %v777 = vunpack.c.h.b16 %v122
  %v778 = vunpack.c.l.b16 %v123
  %v779 = vunpack.c.h.b16 %v123
  %v780 = vunpack.c.l.b16 %v124
  %v781 = vunpack.c.h.b16 %v124
  %v782 = vunpack.c.l.b16 %v125
  %v783 = vunpack.c.h.b16 %v125
  %v784 = vunpack.c.l.b16 %v126
  %v785 = vunpack.c.h.b16 %v126
  %v786 = vunpack.c.l.b16 %v127
  %v787 = vunpack.c.h.b16 %v127
  %v788 = vunpack.c.l.b16 %v128
  %v789 = vunpack.c.h.b16 %v128
  %v790 = vunpack.c.l.b16 %v129
  %v791 = vunpack.c.h.b16 %v129
  %v792 = vunpack.c.l.b16 %v130
  %v793 = vunpack.c.h.b16 %v130
  %v794 = vunpack.c.l.b16 %v131
  %v795 = vunpack.c.h.b16 %v131
  %v796 = vunpack.c.l.b16 %v132
  %v797 = vunpack.c.h.b16 %v132
  %v798 = vunpack.c.l.b16 %v133
  %v799 = vunpack.c.h.b16 %v133
  %v800 = vunpack.c.l.b16 %v134
  %v801 = vunpack.c.h.b16 %v134
  %v802 = vunpack.c.l.b16 %v135
  %v803 = vunpack.c.h.b16 %v135
  %v804 = vunpack.c.l.b16 %v136
  %v805 = vunpack.c.h.b16 %v136
  %v806 = vunpack.c.l.b16 %v137
  %v807 = vunpack.c.h.b16 %v137
  %v808 = vunpack.c.l.b16 %v138
  %v809 = vunpack.c.h.b16 %v138
  %v810 = vunpack.c.l.b16 %v139
  %v811 = vunpack.c.h.b16 %v139
  %v812 = vunpack.c.l.b16 %v140
  %v813 = vunpack.c.h.b16 %v140
  %v814 = vunpack.c.l.b16 %v141
  %v815 = vunpack.c.h.b16 %v141
  %v816 = vunpack.c.l.b16 %v142
  %v817 = vunpack.c.h.b16 %v142
  %v818 = vunpack.c.l.b16 %v143
  %v819 = vunpack.c.h.b16 %v143
  %v820 = vunpack.c.l.b16 %v144
  %v821 = vunpack.c.h.b16 %v144
  %v822 = vunpack.c.l.b16 %v145
  %v823 = vunpack.c.h.b16 %v145
  %v824 = vunpack.c.l.b16 %v146
  %v825 = vunpack.c.h.b16 %v146
  %v826 = vunpack.c.l.b16 %v147
  %v827 = vunpack.c.h.b16 %v147
  %v828 = vunpack.c.l.b16 %v148
  %v829 = vunpack.c.h.b16 %v148
  %v830 = vunpack.c.l.b16 %v149
  %v831 = vunpack.c.h.b16 %v149
  %v832 = vunpack.c.l.b16 %v150
  %v833 = vunpack.c.h.b16 %v150
  %v834 = vunpack.c.l.b16 %v151
  %v835 = vunpack.c.h.b16 %v151
  %v836 = vunpack.c.l.b16 %v152
  %v837 = vunpack.c.h.b16 %v152
  %v838 = vunpack.c.l.b16 %v153
  %v839 = vunpack.c.h.b16 %v153
  %v840 = vunpack.c.l.b16 %v154
  %v841 = vunpack.c.h.b16 %v154
  %v842 = vunpack.c.l.b16 %v155
  %v843 = vunpack.c.h.b16 %v155
  %v844 = vunpack.c.l.b16 %v156
  %v845 = vunpack.c.h.b16 %v156
  %v846 = vunpack.c.l.b16 %v157
  %v847 = vunpack.c.h.b16 %v157
  %v848 = vunpack.c.l.b16 %v158
  %v849 = vunpack.c.h.b16 %v158
  %v850 = vunpack.c.l.b16 %v159
  %v851 = vunpack.c.h.b16 %v159
  %v852 = vunpack.c.l.b16 %v160
  %v853 = vunpack.c.h.b16 %v160
  %v854 = vunpack.c.l.b16 %v161
  %v855 = vunpack.c.h.b16 %v161
  %v856 = vunpack.c.l.b16 %v162
  %v857 = vunpack.c.h.b16 %v162
  %v858 = vunpack.c.l.b16 %v163
  %v859 = vunpack.c.h.b16 %v163
  %v860 = vunpack.c.l.b16 %v164
  %v861 = vunpack.c.h.b16 %v164
  %v862 = vunpack.c.l.b16 %v165
  %v863 = vunpack.c.h.b16 %v165
  %v864 = vunpack.c.l.b16 %v166
  %v865 = vunpack.c.h.b16 %v166
  %v866 = vunpack.c.l.b16 %v167
  %v867 = vunpack.c.h.b16 %v167
  %v868 = vunpack.c.l.b16 %v168
  %v869 = vunpack.c.h.b16 %v168
  %v870 = vunpack.c.l.b16 %v169
  %v871 = vunpack.c.h.b16 %v169
  %v872 = vunpack.c.l.b16 %v170
  %v873 = vunpack.c.h.b16 %v170
  %v874 = vunpack.c.l.b16 %v171
  %v875 = vunpack.c.h.b16 %v171
  %v876 = vunpack.c.l.b16 %v172
  %v877 = vunpack.c.h.b16 %v172
  %v878 = vunpack.c.l.b16 %v173
  %v879 = vunpack.c.h.b16 %v173
  %v880 = vunpack.c.l.b16 %v174
  %v881 = vunpack.c.h.b16 %v174
  %v882 = vunpack.c.l.b16 %v175
  %v883 = vunpack.c.h.b16 %v175
  %v884 = vunpack.c.l.b16 %v176
  %v885 = vunpack.c.h.b16 %v176
  %v886 = vunpack.c.l.b16 %v177
  %v887 = vunpack.c.h.b16 %v177
  %v888 = vunpack.c.l.b16 %v178
  %v889 = vunpack.c.h.b16 %v178
  %v890 = vunpack.c.l.b16 %v179
  %v891 = vunpack.c.h.b16 %v179
  %v892 = vunpack.c.l.b16 %v180
  %v893 = vunpack.c.h.b16 %v180
  %v894 = vunpack.c.l.b16 %v181
  %v895 = vunpack.c.h.b16 %v181
  %v896 = vunpack.c.l.b16 %v182
  %v897 = vunpack.c.h.b16 %v182
  %v898 = vunpack.c.l.b16 %v183
  %v899 = vunpack.c.h.b16 %v183
  %v900 = vunpack.c.l.b16 %v184
  %v901 = vunpack.c.h.b16 %v184
  %v902 = vunpack.c.l.b16 %v185
  %v903 = vunpack.c.h.b16 %v185
  %v904 = vunpack.c.l.b16 %v186
  %v905 = vunpack.c.h.b16 %v186
  %v906 = vunpack.c.l.b16 %v187
  %v907 = vunpack.c.h.b16 %v187
  %v908 = vunpack.c.l.b16 %v188
  %v909 = vunpack.c.h.b16 %v188
  %v910 = vunpack.c.l.b16 %v189
  %v911 = vunpack.c.h.b16 %v189
  %v912 = vunpack.c.l.b16 %v190
  %v913 = vunpack.c.h.b16 %v190
  %v914 = vunpack.c.l.b16 %v191
  %v915 = vunpack.c.h.b16 %v191
  %v916 = vunpack.c.l.b16 %v192
  %v917 = vunpack.c.h.b16 %v192
  %v918 = vunpack.c.l.b16 %v193
  %v919 = vunpack.c.h.b16 %v193
  %v920 = vunpack.c.l.b16 %v194
  %v921 = vunpack.c.h.b16 %v194
  %v922 = vunpack.c.l.b16 %v195
  %v923 = vunpack.c.h.b16 %v195
  %v924 = vunpack.c.l.b16 %v196
  %v925 = vunpack.c.h.b16 %v196
  %v926 = vunpack.c.l.b16 %v197
  %v927 = vunpack.c.h.b16 %v197
  %v928 = vunpack.c.l.b16 %v198
  %v929 = vunpack.c.h.b16 %v198
  %v930 = vunpack.c.l.b16 %v199
  %v931 = vunpack.c.h.b16 %v199
  %v932 = vunpack.c.l.b16 %v200
  %v933 = vunpack.c.h.b16 %v200
  %v934 = vunpack.c.l.b16 %v201
  %v935 = vunpack.c.h.b16 %v201
  %v936 = vunpack.c.l.b16 %v202
  %v937 = vunpack.c.h.b16 %v202
  %v938 = vunpack.c.l.b16 %v203
  %v939 = vunpack.c.h.b16 %v203
  %v940 = vunpack.c.l.b16 %v204
  %v941 = vunpack.c.h.b16 %v204
  %v942 = vunpack.c.l.b16 %v205
  %v943 = vunpack.c.h.b16 %v205
  %v944 = vunpack.c.l.b16 %v206
  %v945 = vunpack.c.h.b16 %v206
  %v946 = vunpack.c.l.b16 %v207
  %v947 = vunpack.c.h.b16 %v207
  %v948 = vunpack.c.l.b16 %v208
  %v949 = vunpack.c.h.b16 %v208
  %v950 = vunpack.c.l.b16 %v209
  %v951 = vunpack.c.h.b16 %v209
  %v952 = vunpack.c.l.b16 %v210
  %v953 = vunpack.c.h.b16 %v210
  %v954 = vunpack.c.l.b16 %v211
  %v955 = vunpack.c.h.b16 %v211
  %v956 = vunpack.c.l.b16 %v212
  %v957 = vunpack.c.h.b16 %v212
  %v958 = vunpack.c.l.b16 %v213
  %v959 = vunpack.c.h.b16 %v213
  %v960 = vunpack.c.l.b16 %v214
  %v961 = vunpack.c.h.b16 %v214
  %v962 = vunpack.c.l.b16 %v215
  %v963 = vunpack.c.h.b16 %v215
  %v964 = vunpack.c.l.b16 %v216
  %v965 = vunpack.c.h.b16 %v216
  %v966 = vunpack.c.l.b16 %v217
  %v967 = vunpack.c.h.b16 %v217
  %v968 = vunpack.c.l.b16 %v218
  %v969 = vunpack.c.h.b16 %v218
  %v970 = vunpack.c.l.b16 %v219
  %v971 = vunpack.c.h.b16 %v219
  %v972 = vunpack.c.l.b16 %v220
  %v973 = vunpack.c.h.b16 %v220
  %v974 = vunpack.c.l.b16 %v221
  %v975 = vunpack.c.h.b16 %v221
  %v976 = vunpack.c.l.b16 %v222
  %v977 = vunpack.c.h.b16 %v222
  %v978 = vunpack.c.l.b16 %v223
  %v979 = vunpack.c.h.b16 %v223
  %v980 = vunpack.c.l.b16 %v224
  %v981 = vunpack.c.h.b16 %v224
  %v982 = vunpack.c.l.b16 %v225
  %v983 = vunpack.c.h.b16 %v225
  %v984 = vunpack.c.l.b16 %v226
  %v985 = vunpack.c.h.b16 %v226
  %v986 = vunpack.c.l.b16 %v227
  %v987 = vunpack.c.h.b16 %v227
  %v988 = vunpack.c.l.b16 %v228
  %v989 = vunpack.c.h.b16 %v228
  %v990 = vunpack.c.l.b16 %v229
  %v991 = vunpack.c.h.b16 %v229
  %v992 = vunpack.c.l.b16 %v230
  %v993 = vunpack.c.h.b16 %v230
  %v994 = vunpack.c.l.b16 %v231
  %v995 = vunpack.c.h.b16 %v231
  %v996 = vunpack.c.l.b16 %v232
  %v997 = vunpack.c.h.b16 %v232
  %v998 = vunpack.c.l.b16 %v233
  %v999 = vunpack.c.h.b16 %v233
  %v1000 = vunpack.c.l.b16 %v234
  %v1001 = vunpack.c.h.b16 %v234
  %v1002 = vunpack.c.l.b16 %v235
  %v1003 = vunpack.c.h.b16 %v235
  %v1004 = vunpack.c.l.b16 %v236
  %v1005 = vunpack.c.h.b16 %v236
  %v1006 = vunpack.c.l.b16 %v237
  %v1007 = vunpack.c.h.b16 %v237
  %v1008 = vunpack.c.l.b16 %v238
  %v1009 = vunpack.c.h.b16 %v238
  %v1010 = vunpack.c.l.b16 %v239
  %v1011 = vunpack.c.h.b16 %v239
  %v1012 = vunpack.c.l.b16 %v240
  %v1013 = vunpack.c.h.b16 %v240
  %v1014 = vunpack.c.l.b16 %v241
  %v1015 = vunpack.c.h.b16 %v241
  %v1016 = vunpack.c.l.b16 %v242
  %v1017 = vunpack.c.h.b16 %v242
  %v1018 = vunpack.c.l.b16 %v243
  %v1019 = vunpack.c.h.b16 %v243
  %v1020 = vunpack.c.l.b16 %v244
  %v1021 = vunpack.c.h.b16 %v244
  %v1022 = vunpack.c.l.b16 %v245
  %v1023 = vunpack.c.h.b16 %v245
  %v1024 = vunpack.c.l.b16 %v246
  %v1025 = vunpack.c.h.b16 %v246
  %v1026 = vunpack.c.l.b16 %v247
  %v1027 = vunpack.c.h.b16 %v247
  %v1028 = vunpack.c.l.b16 %v248
  %v1029 = vunpack.c.h.b16 %v248
  %v1030 = vunpack.c.l.b16 %v249
  %v1031 = vunpack.c.h.b16 %v249
  %v1032 = vunpack.c.l.b16 %v250
  %v1033 = vunpack.c.h.b16 %v250
  %v1034 = vunpack.c.l.b16 %v251
  %v1035 = vunpack.c.h.b16 %v251
  %v1036 = vunpack.c.l.b16 %v252
  %v1037 = vunpack.c.h.b16 %v252
  %v1038 = vunpack.c.l.b16 %v253
  %v1039 = vunpack.c.h.b16 %v253
  %v1040 = vunpack.c.l.b16 %v254
  %v1041 = vunpack.c.h.b16 %v254
  %v1042 = vunpack.c.l.b16 %v255
  %v1043 = vunpack.c.h.b16 %v255
  %v1044 = vunpack.c.l.b16 %v256
  %v1045 = vunpack.c.h.b16 %v256
  %v1046 = vunpack.c.l.b16 %v257
  %v1047 = vunpack.c.h.b16 %v257
  %v1048 = vunpack.c.l.b16 %v258
  %v1049 = vunpack.c.h.b16 %v258
  %v1050 = vunpack.c.l.b16 %v259
  %v1051 = vunpack.c.h.b16 %v259
  %v1052 = vunpack.c.l.b16 %v260
  %v1053 = vunpack.c.h.b16 %v260
  %v1054 = vunpack.c.l.b16 %v261
  %v1055 = vunpack.c.h.b16 %v261
  %v1056 = vunpack.c.l.b16 %v262
  %v1057 = vunpack.c.h.b16 %v262
  %v1058 = vunpack.c.l.b16 %v263
  %v1059 = vunpack.c.h.b16 %v263
  %v1060 = vunpack.c.l.b16 %v264
  %v1061 = vunpack.c.h.b16 %v264
  %v1062 = vunpack.c.l.b16 %v265
  %v1063 = vunpack.c.h.b16 %v265
  %v1064 = vunpack.c.l.b16 %v266
  %v1065 = vunpack.c.h.b16 %v266
  %v1066 = vunpack.c.l.b16 %v267
  %v1067 = vunpack.c.h.b16 %v267
  %v1068 = vunpack.c.l.b16 %v268
  %v1069 = vunpack.c.h.b16 %v268
  %v1070 = vunpack.c.l.b16 %v269
  %v1071 = vunpack.c.h.b16 %v269
  %v1072 = vunpack.c.l.b16 %v270
  %v1073 = vunpack.c.h.b16 %v270
  %v1074 = vunpack.c.l.b16 %v271
  %v1075 = vunpack.c.h.b16 %v271
  %v1076 = vunpack.c.l.b16 %v272
  %v1077 = vunpack.c.h.b16 %v272
  %v1078 = vunpack.c.l.b16 %v273
  %v1079 = vunpack.c.h.b16 %v273
  %v1080 = vpack.c.b16 %v572, %v568
  %v1081 = vpack.c.b16 %v573, %v569
  %v1082 = vpack.c.b16 %v574, %v570
  %v1083 = vpack.c.b16 %v575, %v571
  %v1084 = vpack.c.b16 %v580, %v576
  %v1085 = vpack.c.b16 %v581, %v577
  %v1086 = vpack.c.b16 %v582, %v578
  %v1087 = vpack.c.b16 %v583, %v579
  %v1088 = vpack.c.b16 %v588, %v584
  %v1089 = vpack.c.b16 %v589, %v585
  %v1090 = vpack.c.b16 %v590, %v586
  %v1091 = vpack.c.b16 %v591, %v587
  %v1092 = vpack.c.b16 %v596, %v592
  %v1093 = vpack.c.b16 %v597, %v593
  %v1094 = vpack.c.b16 %v598, %v594
  %v1095 = vpack.c.b16 %v599, %v595
  %v1096 = vpack.c.b16 %v604, %v600
  %v1097 = vpack.c.b16 %v605, %v601
  %v1098 = vpack.c.b16 %v606, %v602
  %v1099 = vpack.c.b16 %v607, %v603
  %v1100 = vpack.c.b16 %v612, %v608
  %v1101 = vpack.c.b16 %v613, %v609
  %v1102 = vpack.c.b16 %v614, %v610
  %v1103 = vpack.c.b16 %v615, %v611
  %v1104 = vpack.c.b16 %v620, %v616
  %v1105 = vpack.c.b16 %v621, %v617
  %v1106 = vpack.c.b16 %v622, %v618
  %v1107 = vpack.c.b16 %v623, %v619
  %v1108 = vpack.c.b16 %v628, %v624
  %v1109 = vpack.c.b16 %v629, %v625
  %v1110 = vpack.c.b16 %v630, %v626
  %v1111 = vpack.c.b16 %v631, %v627
  %v1112 = vpack.c.b16 %v636, %v632
  %v1113 = vpack.c.b16 %v637, %v633
  %v1114 = vpack.c.b16 %v638, %v634
  %v1115 = vpack.c.b16 %v639, %v635
  %v1116 = vpack.c.b16 %v644, %v640
  %v1117 = vpack.c.b16 %v645, %v641
  %v1118 = vpack.c.b16 %v646, %v642
  %v1119 = vpack.c.b16 %v647, %v643
  %v1120 = vpack.c.b16 %v652, %v648
  %v1121 = vpack.c.b16 %v653, %v649
  %v1122 = vpack.c.b16 %v654, %v650
  %v1123 = vpack.c.b16 %v655, %v651
  %v1124 = vpack.c.b16 %v660, %v656
  %v1125 = vpack.c.b16 %v661, %v657
  %v1126 = vpack.c.b16 %v662, %v658
  %v1127 = vpack.c.b16 %v663, %v659
  %v1128 = vpack.c.b16 %v668, %v664
  %v1129 = vpack.c.b16 %v669, %v665
  %v1130 = vpack.c.b16 %v670, %v666
  %v1131 = vpack.c.b16 %v671, %v667
  %v1132 = vpack.c.b16 %v676, %v672
  %v1133 = vpack.c.b16 %v677, %v673
  %v1134 = vpack.c.b16 %v678, %v674
  %v1135 = vpack.c.b16 %v679, %v675
  %v1136 = vpack.c.b16 %v684, %v680
  %v1137 = vpack.c.b16 %v685, %v681
  %v1138 = vpack.c.b16 %v686, %v682
  %v1139 = vpack.c.b16 %v687, %v683
  %v1140 = vpack.c.b16 %v692, %v688
  %v1141 = vpack.c.b16 %v693, %v689
  %v1142 = vpack.c.b16 %v694, %v690
  %v1143 = vpack.c.b16 %v695, %v691
  %v1144 = vpack.c.b16 %v700, %v696
  %v1145 = vpack.c.b16 %v701, %v697
  %v1146 = vpack.c.b16 %v702, %v698
  %v1147 = vpack.c.b16 %v703, %v699
  %v1148 = vpack.c.b16 %v708, %v704
  %v1149 = vpack.c.b16 %v709, %v705
  %v1150 = vpack.c.b16 %v710, %v706
  %v1151 = vpack.c.b16 %v711, %v707
  %v1152 = vpack.c.b16 %v716, %v712
  %v1153 = vpack.c.b16 %v717, %v713
  %v1154 = vpack.c.b16 %v718, %v714
  %v1155 = vpack.c.b16 %v719, %v715
  %v1156 = vpack.c.b16 %v724, %v720
  %v1157 = vpack.c.b16 %v725, %v721
  %v1158 = vpack.c.b16 %v726, %v722
  %v1159 = vpack.c.b16 %v727, %v723
  %v1160 = vpack.c.b16 %v732, %v728
  %v1161 = vpack.c.b16 %v733, %v729
  %v1162 = vpack.c.b16 %v734, %v730
  %v1163 = vpack.c.b16 %v735, %v731
  %v1164 = vpack.c.b16 %v740, %v736
  %v1165 = vpack.c.b16 %v741, %v737
  %v1166 = vpack.c.b16 %v742, %v738
  %v1167 = vpack.c.b16 %v743, %v739
  %v1168 = vpack.c.b16 %v748, %v744
  %v1169 = vpack.c.b16 %v749, %v745
  %v1170 = vpack.c.b16 %v750, %v746
  %v1171 = vpack.c.b16 %v751, %v747
  %v1172 = vpack.c.b16 %v756, %v752
  %v1173 = vpack.c.b16 %v757, %v753
  %v1174 = vpack.c.b16 %v758, %v754
  %v1175 = vpack.c.b16 %v759, %v755
  %v1176 = vpack.c.b16 %v764, %v760
  %v1177 = vpack.c.b16 %v765, %v761
  %v1178 = vpack.c.b16 %v766, %v762
  %v1179 = vpack.c.b16 %v767, %v763
  %v1180 = vpack.c.b16 %v772, %v768
  %v1181 = vpack.c.b16 %v773, %v769
  %v1182 = vpack.c.b16 %v774, %v770
  %v1183 = vpack.c.b16 %v775, %v771
  %v1184 = vpack.c.b16 %v780, %v776
  %v1185 = vpack.c.b16 %v781, %v777
  %v1186 = vpack.c.b16 %v782, %v778
  %v1187 = vpack.c.b16 %v783, %v779
  %v1188 = vpack.c.b16 %v788, %v784
  %v1189 = vpack.c.b16 %v789, %v785
  %v1190 = vpack.c.b16 %v790, %v786
  %v1191 = vpack.c.b16 %v791, %v787
  %v1192 = vpack.c.b16 %v796, %v792
  %v1193 = vpack.c.b16 %v797, %v793
  %v1194 = vpack.c.b16 %v798, %v794
  %v1195 = vpack.c.b16 %v799, %v795
  %v1196 = vpack.c.b16 %v804, %v800
  %v1197 = vpack.c.b16 %v805, %v801
  %v1198 = vpack.c.b16 %v806, %v802
  %v1199 = vpack.c.b16 %v807, %v803
  %v1200 = vpack.c.b16 %v812, %v808
  %v1201 = vpack.c.b16 %v813, %v809
  %v1202 = vpack.c.b16 %v814, %v810
  %v1203 = vpack.c.b16 %v815, %v811
  %v1204 = vpack.c.b16 %v820, %v816
  %v1205 = vpack.c.b16 %v821, %v817
  %v1206 = vpack.c.b16 %v822, %v818
  %v1207 = vpack.c.b16 %v823, %v819
  %v1208 = vpack.c.b16 %v828, %v824
  %v1209 = vpack.c.b16 %v829, %v825
  %v1210 = vpack.c.b16 %v830, %v826
  %v1211 = vpack.c.b16 %v831, %v827
  %v1212 = vpack.c.b16 %v836, %v832
  %v1213 = vpack.c.b16 %v837, %v833
  %v1214 = vpack.c.b16 %v838, %v834
  %v1215 = vpack.c.b16 %v839, %v835
  %v1216 = vpack.c.b16 %v844, %v840
  %v1217 = vpack.c.b16 %v845, %v841
  %v1218 = vpack.c.b16 %v846, %v842
  %v1219 = vpack.c.b16 %v847, %v843
  %v1220 = vpack.c.b16 %v852, %v848
  %v1221 = vpack.c.b16 %v853, %v849
  %v1222 = vpack.c.b16 %v854, %v850
  %v1223 = vpack.c.b16 %v855, %v851
  %v1224 = vpack.c.b16 %v860, %v856
  %v1225 = vpack.c.b16 %v861, %v857
  %v1226 = vpack.c.b16 %v862, %v858
  %v1227 = vpack.c.b16 %v863, %v859
  %v1228 = vpack.c.b16 %v868, %v864
  %v1229 = vpack.c.b16 %v869, %v865
  %v1230 = vpack.c.b16 %v870, %v866
  %v1231 = vpack.c.b16 %v871, %v867
  %v1232 = vpack.c.b16 %v876, %v872
  %v1233 = vpack.c.b16 %v877, %v873
  %v1234 = vpack.c.b16 %v878, %v874
  %v1235 = vpack.c.b16 %v879, %v875
  %v1236 = vpack.c.b16 %v884, %v880
  %v1237 = vpack.c.b16 %v885, %v881
  %v1238 = vpack.c.b16 %v886, %v882
  %v1239 = vpack.c.b16 %v887, %v883
  %v1240 = vpack.c.b16 %v892, %v888
  %v1241 = vpack.c.b16 %v893, %v889
  %v1242 = vpack.c.b16 %v894, %v890
  %v1243 = vpack.c.b16 %v895, %v891
  %v1244 = vpack.c.b16 %v900, %v896
  %v1245 = vpack.c.b16 %v901, %v897
  %v1246 = vpack.c.b16 %v902, %v898
  %v1247 = vpack.c.b16 %v903, %v899
  %v1248 = vpack.c.b16 %v908, %v904
  %v1249 = vpack.c.b16 %v909, %v905
  %v1250 = vpack.c.b16 %v910, %v906
  %v1251 = vpack.c.b16 %v911, %v907
  %v1252 = vpack.c.b16 %v916, %v912
  %v1253 = vpack.c.b16 %v917, %v913
  %v1254 = vpack.c.b16 %v918, %v914
  %v1255 = vpack.c.b16 %v919, %v915
  %v1256 = vpack.c.b16 %v924, %v920
  %v1257 = vpack.c.b16 %v925, %v921
  %v1258 = vpack.c.b16 %v926, %v922
  %v1259 = vpack.c.b16 %v927, %v923
  %v1260 = vpack.c.b16 %v932, %v928
  %v1261 = vpack.c.b16 %v933, %v929
  %v1262 = vpack.c.b16 %v934, %v930
  %v1263 = vpack.c.b16 %v935, %v931
  %v1264 = vpack.c.b16 %v940, %v936
  %v1265 = vpack.c.b16 %v941, %v937
  %v1266 = vpack.c.b16 %v942, %v938
  %v1267 = vpack.c.b16 %v943, %v939
  %v1268 = vpack.c.b16 %v948, %v944
  %v1269 = vpack.c.b16 %v949, %v945
  %v1270 = vpack.c.b16 %v950, %v946
  %v1271 = vpack.c.b16 %v951, %v947
  %v1272 = vpack.c.b16 %v956, %v952
  %v1273 = vpack.c.b16 %v957, %v953
  %v1274 = vpack.c.b16 %v958, %v954
  %v1275 = vpack.c.b16 %v959, %v955
  %v1276 = vpack.c.b16 %v964, %v960
  %v1277 = vpack.c.b16 %v965, %v961
  %v1278 = vpack.c.b16 %v966, %v962
  %v1279 = vpack.c.b16 %v967, %v963
  %v1280 = vpack.c.b16 %v972, %v968
  %v1281 = vpack.c.b16 %v973, %v969
  %v1282 = vpack.c.b16 %v974, %v970
  %v1283 = vpack.c.b16 %v975, %v971
  %v1284 = vpack.c.b16 %v980, %v976
  %v1285 = vpack.c.b16 %v981, %v977
  %v1286 = vpack.c.b16 %v982, %v978
  %v1287 = vpack.c.b16 %v983, %v979
  %v1288 = vpack.c.b16 %v988, %v984
  %v1289 = vpack.c.b16 %v989, %v985
  %v1290 = vpack.c.b16 %v990, %v986
  %v1291 = vpack.c.b16 %v991, %v987
  %v1292 = vpack.c.b16 %v996, %v992
  %v1293 = vpack.c.b16 %v997, %v993
  %v1294 = vpack.c.b16 %v998, %v994
  %v1295 = vpack.c.b16 %v999, %v995
  %v1296 = vpack.c.b16 %v1004, %v1000
  %v1297 = vpack.c.b16 %v1005, %v1001
  %v1298 = vpack.c.b16 %v1006, %v1002
  %v1299 = vpack.c.b16 %v1007, %v1003
  %v1300 = vpack.c.b16 %v1012, %v1008
  %v1301 = vpack.c.b16 %v1013, %v1009
  %v1302 = vpack.c.b16 %v1014, %v1010
  %v1303 = vpack.c.b16 %v1015, %v1011
  %v1304 = vpack.c.b16 %v1020, %v1016
  %v1305 = vpack.c.b16 %v1021, %v1017
  %v1306 = vpack.c.b16 %v1022, %v1018
  %v1307 = vpack.c.b16 %v1023, %v1019
  %v1308 = vpack.c.b16 %v1028, %v1024
  %v1309 = vpack.c.b16 %v1029, %v1025
  %v1310 = vpack.c.b16 %v1030, %v1026
  %v1311 = vpack.c.b16 %v1031, %v1027
  %v1312 = vpack.c.b16 %v1036, %v1032
  %v1313 = vpack.c.b16 %v1037, %v1033
  %v1314 = vpack.c.b16 %v1038, %v1034
  %v1315 = vpack.c.b16 %v1039, %v1035
  %v1316 = vpack.c.b16 %v1044, %v1040
  %v1317 = vpack.c.b16 %v1045, %v1041
  %v1318 = vpack.c.b16 %v1046, %v1042
  %v1319 = vpack.c.b16 %v1047, %v1043
  %v1320 = vpack.c.b16 %v1052, %v1048
  %v1321 = vpack.c.b16 %v1053, %v1049
  %v1322 = vpack.c.b16 %v1054, %v1050
  %v1323 = vpack.c.b16 %v1055, %v1051
  %v1324 = vpack.c.b16 %v1060, %v1056
  %v1325 = vpack.c.b16 %v1061, %v1057
  %v1326 = vpack.c.b16 %v1062, %v1058
  %v1327 = vpack.c.b16 %v1063, %v1059
  %v1328 = vpack.c.b16 %v1068, %v1064
  %v1329 = vpack.c.b16 %v1069, %v1065
  %v1330 = vpack.c.b16 %v1070, %v1066
  %v1331 = vpack.c.b16 %v1071, %v1067
  %v1332 = vpack.c.b16 %v1076, %v1072
  %v1333 = vpack.c.b16 %v1077, %v1073
  %v1334 = vpack.c.b16 %v1078, %v1074
  %v1335 = vpack.c.b16 %v1079, %v1075
  %1592 = vmatpush.bf16.msra.mxu0 %v1108
  %1593 = vmatpush.bf16.msra.mxu0 %v1104
  %1594 = vmatpush.bf16.msra.mxu0 %v1100
  %1595 = vmatpush.bf16.msra.mxu0 %v1096
  %1596 = vmatpush.bf16.msra.mxu0 %v1092
  %1597 = vmatpush.bf16.msra.mxu0 %v1088
  %1598 = vmatpush.bf16.msra.mxu0 %v1084
  %1599 = vmatpush.bf16.msra.mxu0 %v1080
  %1600 = vmatmul.bf16.gmra.mxu0 %v296
  %v1601 = vpop.f32.mrf.mxu0
  %v1602 = vadd.f32 %v276, %v1601
  %v1603 = vpop.f32.mrf.mxu0
  %1604 = vdwg.mxu0
  %1605 = vmatpush.bf16.msra.mxu0 %v1140
  %1606 = vmatpush.bf16.msra.mxu0 %v1136
  %1607 = vmatpush.bf16.msra.mxu0 %v1132
  %1608 = vmatpush.bf16.msra.mxu0 %v1128
  %1609 = vmatpush.bf16.msra.mxu0 %v1124
  %1610 = vmatpush.bf16.msra.mxu0 %v1120
  %1611 = vmatpush.bf16.msra.mxu0 %v1116
  %1612 = vmatpush.bf16.msra.mxu0 %v1112
  %1613 = vmatmul.bf16.gmra.mxu0 %v297
  %v1614 = vpop.f32.mrf.mxu0
  %v1615 = vadd.f32 %v1602, %v1614
  %v1616 = vpop.f32.mrf.mxu0
  %1617 = vdwg.mxu0
  %1618 = vmatpush.bf16.msra.mxu0 %v1172
  %1619 = vmatpush.bf16.msra.mxu0 %v1168
  %1620 = vmatpush.bf16.msra.mxu0 %v1164
  %1621 = vmatpush.bf16.msra.mxu0 %v1160
  %1622 = vmatpush.bf16.msra.mxu0 %v1156
  %1623 = vmatpush.bf16.msra.mxu0 %v1152
  %1624 = vmatpush.bf16.msra.mxu0 %v1148
  %1625 = vmatpush.bf16.msra.mxu0 %v1144
  %1626 = vmatmul.bf16.gmra.mxu0 %v298
  %v1627 = vpop.f32.mrf.mxu0
  %v1628 = vadd.f32 %v1615, %v1627
  %v1629 = vpop.f32.mrf.mxu0
  %1630 = vdwg.mxu0
  %1631 = vmatpush.bf16.msra.mxu0 %v1204
  %1632 = vmatpush.bf16.msra.mxu0 %v1200
  %1633 = vmatpush.bf16.msra.mxu0 %v1196
  %1634 = vmatpush.bf16.msra.mxu0 %v1192
  %1635 = vmatpush.bf16.msra.mxu0 %v1188
  %1636 = vmatpush.bf16.msra.mxu0 %v1184
  %1637 = vmatpush.bf16.msra.mxu0 %v1180
  %1638 = vmatpush.bf16.msra.mxu0 %v1176
  %1639 = vmatmul.bf16.gmra.mxu0 %v299
  %v1640 = vpop.f32.mrf.mxu0
  %v1641 = vadd.f32 %v1628, %v1640
  %v1642 = vpop.f32.mrf.mxu0
  %1643 = vdwg.mxu0
  %1644 = vmatpush.bf16.msra.mxu0 %v1236
  %1645 = vmatpush.bf16.msra.mxu0 %v1232
  %1646 = vmatpush.bf16.msra.mxu0 %v1228
  %1647 = vmatpush.bf16.msra.mxu0 %v1224
  %1648 = vmatpush.bf16.msra.mxu0 %v1220
  %1649 = vmatpush.bf16.msra.mxu0 %v1216
  %1650 = vmatpush.bf16.msra.mxu0 %v1212
  %1651 = vmatpush.bf16.msra.mxu0 %v1208
  %1652 = vmatmul.bf16.gmra.mxu0 %v300
  %v1653 = vpop.f32.mrf.mxu0
  %v1654 = vadd.f32 %v1641, %v1653
  %v1655 = vpop.f32.mrf.mxu0
  %1656 = vdwg.mxu0
  %1657 = vmatpush.bf16.msra.mxu0 %v1268
  %1658 = vmatpush.bf16.msra.mxu0 %v1264
  %1659 = vmatpush.bf16.msra.mxu0 %v1260
  %1660 = vmatpush.bf16.msra.mxu0 %v1256
  %1661 = vmatpush.bf16.msra.mxu0 %v1252
  %1662 = vmatpush.bf16.msra.mxu0 %v1248
  %1663 = vmatpush.bf16.msra.mxu0 %v1244
  %1664 = vmatpush.bf16.msra.mxu0 %v1240
  %1665 = vmatmul.bf16.gmra.mxu0 %v301
  %v1666 = vpop.f32.mrf.mxu0
  %v1667 = vadd.f32 %v1654, %v1666
  %v1668 = vpop.f32.mrf.mxu0
  %1669 = vdwg.mxu0
  %1670 = vmatpush.bf16.msra.mxu0 %v1300
  %1671 = vmatpush.bf16.msra.mxu0 %v1296
  %1672 = vmatpush.bf16.msra.mxu0 %v1292
  %1673 = vmatpush.bf16.msra.mxu0 %v1288
  %1674 = vmatpush.bf16.msra.mxu0 %v1284
  %1675 = vmatpush.bf16.msra.mxu0 %v1280
  %1676 = vmatpush.bf16.msra.mxu0 %v1276
  %1677 = vmatpush.bf16.msra.mxu0 %v1272
  %1678 = vmatmul.bf16.gmra.mxu0 %v302
  %v1679 = vpop.f32.mrf.mxu0
  %v1680 = vadd.f32 %v1667, %v1679
  %v1681 = vpop.f32.mrf.mxu0
  %1682 = vdwg.mxu0
  %1683 = vmatpush.bf16.msra.mxu0 %v1332
  %1684 = vmatpush.bf16.msra.mxu0 %v1328
  %1685 = vmatpush.bf16.msra.mxu0 %v1324
  %1686 = vmatpush.bf16.msra.mxu0 %v1320
  %1687 = vmatpush.bf16.msra.mxu0 %v1316
  %1688 = vmatpush.bf16.msra.mxu0 %v1312
  %1689 = vmatpush.bf16.msra.mxu0 %v1308
  %1690 = vmatpush.bf16.msra.mxu0 %v1304
  %1691 = vmatmul.bf16.gmra.mxu0 %v303
  %v1692 = vpop.f32.mrf.mxu0
  %v1693 = vadd.f32 %v1680, %v1692
  %v1694 = vpop.f32.mrf.mxu0
  %1695 = vdwg.mxu0
  %1696 = vmatpush.bf16.msra.mxu0 %v1109
  %1697 = vmatpush.bf16.msra.mxu0 %v1105
  %1698 = vmatpush.bf16.msra.mxu0 %v1101
  %1699 = vmatpush.bf16.msra.mxu0 %v1097
  %1700 = vmatpush.bf16.msra.mxu0 %v1093
  %1701 = vmatpush.bf16.msra.mxu0 %v1089
  %1702 = vmatpush.bf16.msra.mxu0 %v1085
  %1703 = vmatpush.bf16.msra.mxu0 %v1081
  %1704 = vmatmul.bf16.gmra.mxu0 %v296
  %v1705 = vpop.f32.mrf.mxu0
  %v1706 = vadd.f32 %v277, %v1705
  %v1707 = vpop.f32.mrf.mxu0
  %1708 = vdwg.mxu0
  %1709 = vmatpush.bf16.msra.mxu0 %v1141
  %1710 = vmatpush.bf16.msra.mxu0 %v1137
  %1711 = vmatpush.bf16.msra.mxu0 %v1133
  %1712 = vmatpush.bf16.msra.mxu0 %v1129
  %1713 = vmatpush.bf16.msra.mxu0 %v1125
  %1714 = vmatpush.bf16.msra.mxu0 %v1121
  %1715 = vmatpush.bf16.msra.mxu0 %v1117
  %1716 = vmatpush.bf16.msra.mxu0 %v1113
  %1717 = vmatmul.bf16.gmra.mxu0 %v297
  %v1718 = vpop.f32.mrf.mxu0
  %v1719 = vadd.f32 %v1706, %v1718
  %v1720 = vpop.f32.mrf.mxu0
  %1721 = vdwg.mxu0
  %1722 = vmatpush.bf16.msra.mxu0 %v1173
  %1723 = vmatpush.bf16.msra.mxu0 %v1169
  %1724 = vmatpush.bf16.msra.mxu0 %v1165
  %1725 = vmatpush.bf16.msra.mxu0 %v1161
  %1726 = vmatpush.bf16.msra.mxu0 %v1157
  %1727 = vmatpush.bf16.msra.mxu0 %v1153
  %1728 = vmatpush.bf16.msra.mxu0 %v1149
  %1729 = vmatpush.bf16.msra.mxu0 %v1145
  %1730 = vmatmul.bf16.gmra.mxu0 %v298
  %v1731 = vpop.f32.mrf.mxu0
  %v1732 = vadd.f32 %v1719, %v1731
  %v1733 = vpop.f32.mrf.mxu0
  %1734 = vdwg.mxu0
  %1735 = vmatpush.bf16.msra.mxu0 %v1205
  %1736 = vmatpush.bf16.msra.mxu0 %v1201
  %1737 = vmatpush.bf16.msra.mxu0 %v1197
  %1738 = vmatpush.bf16.msra.mxu0 %v1193
  %1739 = vmatpush.bf16.msra.mxu0 %v1189
  %1740 = vmatpush.bf16.msra.mxu0 %v1185
  %1741 = vmatpush.bf16.msra.mxu0 %v1181
  %1742 = vmatpush.bf16.msra.mxu0 %v1177
  %1743 = vmatmul.bf16.gmra.mxu0 %v299
  %v1744 = vpop.f32.mrf.mxu0
  %v1745 = vadd.f32 %v1732, %v1744
  %v1746 = vpop.f32.mrf.mxu0
  %1747 = vdwg.mxu0
  %1748 = vmatpush.bf16.msra.mxu0 %v1237
  %1749 = vmatpush.bf16.msra.mxu0 %v1233
  %1750 = vmatpush.bf16.msra.mxu0 %v1229
  %1751 = vmatpush.bf16.msra.mxu0 %v1225
  %1752 = vmatpush.bf16.msra.mxu0 %v1221
  %1753 = vmatpush.bf16.msra.mxu0 %v1217
  %1754 = vmatpush.bf16.msra.mxu0 %v1213
  %1755 = vmatpush.bf16.msra.mxu0 %v1209
  %1756 = vmatmul.bf16.gmra.mxu0 %v300
  %v1757 = vpop.f32.mrf.mxu0
  %v1758 = vadd.f32 %v1745, %v1757
  %v1759 = vpop.f32.mrf.mxu0
  %1760 = vdwg.mxu0
  %1761 = vmatpush.bf16.msra.mxu0 %v1269
  %1762 = vmatpush.bf16.msra.mxu0 %v1265
  %1763 = vmatpush.bf16.msra.mxu0 %v1261
  %1764 = vmatpush.bf16.msra.mxu0 %v1257
  %1765 = vmatpush.bf16.msra.mxu0 %v1253
  %1766 = vmatpush.bf16.msra.mxu0 %v1249
  %1767 = vmatpush.bf16.msra.mxu0 %v1245
  %1768 = vmatpush.bf16.msra.mxu0 %v1241
  %1769 = vmatmul.bf16.gmra.mxu0 %v301
  %v1770 = vpop.f32.mrf.mxu0
  %v1771 = vadd.f32 %v1758, %v1770
  %v1772 = vpop.f32.mrf.mxu0
  %1773 = vdwg.mxu0
  %1774 = vmatpush.bf16.msra.mxu0 %v1301
  %1775 = vmatpush.bf16.msra.mxu0 %v1297
  %1776 = vmatpush.bf16.msra.mxu0 %v1293
  %1777 = vmatpush.bf16.msra.mxu0 %v1289
  %1778 = vmatpush.bf16.msra.mxu0 %v1285
  %1779 = vmatpush.bf16.msra.mxu0 %v1281
  %1780 = vmatpush.bf16.msra.mxu0 %v1277
  %1781 = vmatpush.bf16.msra.mxu0 %v1273
  %1782 = vmatmul.bf16.gmra.mxu0 %v302
  %v1783 = vpop.f32.mrf.mxu0
  %v1784 = vadd.f32 %v1771, %v1783
  %v1785 = vpop.f32.mrf.mxu0
  %1786 = vdwg.mxu0
  %1787 = vmatpush.bf16.msra.mxu0 %v1333
  %1788 = vmatpush.bf16.msra.mxu0 %v1329
  %1789 = vmatpush.bf16.msra.mxu0 %v1325
  %1790 = vmatpush.bf16.msra.mxu0 %v1321
  %1791 = vmatpush.bf16.msra.mxu0 %v1317
  %1792 = vmatpush.bf16.msra.mxu0 %v1313
  %1793 = vmatpush.bf16.msra.mxu0 %v1309
  %1794 = vmatpush.bf16.msra.mxu0 %v1305
  %1795 = vmatmul.bf16.gmra.mxu0 %v303
  %v1796 = vpop.f32.mrf.mxu0
  %v1797 = vadd.f32 %v1784, %v1796
  %v1798 = vpop.f32.mrf.mxu0
  %1799 = vdwg.mxu0
  %1800 = vmatpush.bf16.msra.mxu0 %v1110
  %1801 = vmatpush.bf16.msra.mxu0 %v1106
  %1802 = vmatpush.bf16.msra.mxu0 %v1102
  %1803 = vmatpush.bf16.msra.mxu0 %v1098
  %1804 = vmatpush.bf16.msra.mxu0 %v1094
  %1805 = vmatpush.bf16.msra.mxu0 %v1090
  %1806 = vmatpush.bf16.msra.mxu0 %v1086
  %1807 = vmatpush.bf16.msra.mxu0 %v1082
  %1808 = vmatmul.bf16.gmra.mxu0 %v296
  %v1809 = vpop.f32.mrf.mxu0
  %v1810 = vadd.f32 %v278, %v1809
  %v1811 = vpop.f32.mrf.mxu0
  %1812 = vdwg.mxu0
  %1813 = vmatpush.bf16.msra.mxu0 %v1142
  %1814 = vmatpush.bf16.msra.mxu0 %v1138
  %1815 = vmatpush.bf16.msra.mxu0 %v1134
  %1816 = vmatpush.bf16.msra.mxu0 %v1130
  %1817 = vmatpush.bf16.msra.mxu0 %v1126
  %1818 = vmatpush.bf16.msra.mxu0 %v1122
  %1819 = vmatpush.bf16.msra.mxu0 %v1118
  %1820 = vmatpush.bf16.msra.mxu0 %v1114
  %1821 = vmatmul.bf16.gmra.mxu0 %v297
  %v1822 = vpop.f32.mrf.mxu0
  %v1823 = vadd.f32 %v1810, %v1822
  %v1824 = vpop.f32.mrf.mxu0
  %1825 = vdwg.mxu0
  %1826 = vmatpush.bf16.msra.mxu0 %v1174
  %1827 = vmatpush.bf16.msra.mxu0 %v1170
  %1828 = vmatpush.bf16.msra.mxu0 %v1166
  %1829 = vmatpush.bf16.msra.mxu0 %v1162
  %1830 = vmatpush.bf16.msra.mxu0 %v1158
  %1831 = vmatpush.bf16.msra.mxu0 %v1154
  %1832 = vmatpush.bf16.msra.mxu0 %v1150
  %1833 = vmatpush.bf16.msra.mxu0 %v1146
  %1834 = vmatmul.bf16.gmra.mxu0 %v298
  %v1835 = vpop.f32.mrf.mxu0
  %v1836 = vadd.f32 %v1823, %v1835
  %v1837 = vpop.f32.mrf.mxu0
  %1838 = vdwg.mxu0
  %1839 = vmatpush.bf16.msra.mxu0 %v1206
  %1840 = vmatpush.bf16.msra.mxu0 %v1202
  %1841 = vmatpush.bf16.msra.mxu0 %v1198
  %1842 = vmatpush.bf16.msra.mxu0 %v1194
  %1843 = vmatpush.bf16.msra.mxu0 %v1190
  %1844 = vmatpush.bf16.msra.mxu0 %v1186
  %1845 = vmatpush.bf16.msra.mxu0 %v1182
  %1846 = vmatpush.bf16.msra.mxu0 %v1178
  %1847 = vmatmul.bf16.gmra.mxu0 %v299
  %v1848 = vpop.f32.mrf.mxu0
  %v1849 = vadd.f32 %v1836, %v1848
  %v1850 = vpop.f32.mrf.mxu0
  %1851 = vdwg.mxu0
  %1852 = vmatpush.bf16.msra.mxu0 %v1238
  %1853 = vmatpush.bf16.msra.mxu0 %v1234
  %1854 = vmatpush.bf16.msra.mxu0 %v1230
  %1855 = vmatpush.bf16.msra.mxu0 %v1226
  %1856 = vmatpush.bf16.msra.mxu0 %v1222
  %1857 = vmatpush.bf16.msra.mxu0 %v1218
  %1858 = vmatpush.bf16.msra.mxu0 %v1214
  %1859 = vmatpush.bf16.msra.mxu0 %v1210
  %1860 = vmatmul.bf16.gmra.mxu0 %v300
  %v1861 = vpop.f32.mrf.mxu0
  %v1862 = vadd.f32 %v1849, %v1861
  %v1863 = vpop.f32.mrf.mxu0
  %1864 = vdwg.mxu0
  %1865 = vmatpush.bf16.msra.mxu0 %v1270
  %1866 = vmatpush.bf16.msra.mxu0 %v1266
  %1867 = vmatpush.bf16.msra.mxu0 %v1262
  %1868 = vmatpush.bf16.msra.mxu0 %v1258
  %1869 = vmatpush.bf16.msra.mxu0 %v1254
  %1870 = vmatpush.bf16.msra.mxu0 %v1250
  %1871 = vmatpush.bf16.msra.mxu0 %v1246
  %1872 = vmatpush.bf16.msra.mxu0 %v1242
  %1873 = vmatmul.bf16.gmra.mxu0 %v301
  %v1874 = vpop.f32.mrf.mxu0
  %v1875 = vadd.f32 %v1862, %v1874
  %v1876 = vpop.f32.mrf.mxu0
  %1877 = vdwg.mxu0
  %1878 = vmatpush.bf16.msra.mxu0 %v1302
  %1879 = vmatpush.bf16.msra.mxu0 %v1298
  %1880 = vmatpush.bf16.msra.mxu0 %v1294
  %1881 = vmatpush.bf16.msra.mxu0 %v1290
  %1882 = vmatpush.bf16.msra.mxu0 %v1286
  %1883 = vmatpush.bf16.msra.mxu0 %v1282
  %1884 = vmatpush.bf16.msra.mxu0 %v1278
  %1885 = vmatpush.bf16.msra.mxu0 %v1274
  %1886 = vmatmul.bf16.gmra.mxu0 %v302
  %v1887 = vpop.f32.mrf.mxu0
  %v1888 = vadd.f32 %v1875, %v1887
  %v1889 = vpop.f32.mrf.mxu0
  %1890 = vdwg.mxu0
  %1891 = vmatpush.bf16.msra.mxu0 %v1334
  %1892 = vmatpush.bf16.msra.mxu0 %v1330
  %1893 = vmatpush.bf16.msra.mxu0 %v1326
  %1894 = vmatpush.bf16.msra.mxu0 %v1322
  %1895 = vmatpush.bf16.msra.mxu0 %v1318
  %1896 = vmatpush.bf16.msra.mxu0 %v1314
  %1897 = vmatpush.bf16.msra.mxu0 %v1310
  %1898 = vmatpush.bf16.msra.mxu0 %v1306
  %1899 = vmatmul.bf16.gmra.mxu0 %v303
  %v1900 = vpop.f32.mrf.mxu0
  %v1901 = vadd.f32 %v1888, %v1900
  %v1902 = vpop.f32.mrf.mxu0
  %1903 = vdwg.mxu0
  %1904 = vmatpush.bf16.msra.mxu0 %v1111
  %1905 = vmatpush.bf16.msra.mxu0 %v1107
  %1906 = vmatpush.bf16.msra.mxu0 %v1103
  %1907 = vmatpush.bf16.msra.mxu0 %v1099
  %1908 = vmatpush.bf16.msra.mxu0 %v1095
  %1909 = vmatpush.bf16.msra.mxu0 %v1091
  %1910 = vmatpush.bf16.msra.mxu0 %v1087
  %1911 = vmatpush.bf16.msra.mxu0 %v1083
  %1912 = vmatmul.bf16.gmra.mxu0 %v296
  %v1913 = vpop.f32.mrf.mxu0
  %v1914 = vadd.f32 %v279, %v1913
  %v1915 = vpop.f32.mrf.mxu0
  %1916 = vdwg.mxu0
  %1917 = vmatpush.bf16.msra.mxu0 %v1143
  %1918 = vmatpush.bf16.msra.mxu0 %v1139
  %1919 = vmatpush.bf16.msra.mxu0 %v1135
  %1920 = vmatpush.bf16.msra.mxu0 %v1131
  %1921 = vmatpush.bf16.msra.mxu0 %v1127
  %1922 = vmatpush.bf16.msra.mxu0 %v1123
  %1923 = vmatpush.bf16.msra.mxu0 %v1119
  %1924 = vmatpush.bf16.msra.mxu0 %v1115
  %1925 = vmatmul.bf16.gmra.mxu0 %v297
  %v1926 = vpop.f32.mrf.mxu0
  %v1927 = vadd.f32 %v1914, %v1926
  %v1928 = vpop.f32.mrf.mxu0
  %1929 = vdwg.mxu0
  %1930 = vmatpush.bf16.msra.mxu0 %v1175
  %1931 = vmatpush.bf16.msra.mxu0 %v1171
  %1932 = vmatpush.bf16.msra.mxu0 %v1167
  %1933 = vmatpush.bf16.msra.mxu0 %v1163
  %1934 = vmatpush.bf16.msra.mxu0 %v1159
  %1935 = vmatpush.bf16.msra.mxu0 %v1155
  %1936 = vmatpush.bf16.msra.mxu0 %v1151
  %1937 = vmatpush.bf16.msra.mxu0 %v1147
  %1938 = vmatmul.bf16.gmra.mxu0 %v298
  %v1939 = vpop.f32.mrf.mxu0
  %v1940 = vadd.f32 %v1927, %v1939
  %v1941 = vpop.f32.mrf.mxu0
  %1942 = vdwg.mxu0
  %1943 = vmatpush.bf16.msra.mxu0 %v1207
  %1944 = vmatpush.bf16.msra.mxu0 %v1203
  %1945 = vmatpush.bf16.msra.mxu0 %v1199
  %1946 = vmatpush.bf16.msra.mxu0 %v1195
  %1947 = vmatpush.bf16.msra.mxu0 %v1191
  %1948 = vmatpush.bf16.msra.mxu0 %v1187
  %1949 = vmatpush.bf16.msra.mxu0 %v1183
  %1950 = vmatpush.bf16.msra.mxu0 %v1179
  %1951 = vmatmul.bf16.gmra.mxu0 %v299
  %v1952 = vpop.f32.mrf.mxu0
  %v1953 = vadd.f32 %v1940, %v1952
  %v1954 = vpop.f32.mrf.mxu0
  %1955 = vdwg.mxu0
  %1956 = vmatpush.bf16.msra.mxu0 %v1239
  %1957 = vmatpush.bf16.msra.mxu0 %v1235
  %1958 = vmatpush.bf16.msra.mxu0 %v1231
  %1959 = vmatpush.bf16.msra.mxu0 %v1227
  %1960 = vmatpush.bf16.msra.mxu0 %v1223
  %1961 = vmatpush.bf16.msra.mxu0 %v1219
  %1962 = vmatpush.bf16.msra.mxu0 %v1215
  %1963 = vmatpush.bf16.msra.mxu0 %v1211
  %1964 = vmatmul.bf16.gmra.mxu0 %v300
  %v1965 = vpop.f32.mrf.mxu0
  %v1966 = vadd.f32 %v1953, %v1965
  %v1967 = vpop.f32.mrf.mxu0
  %1968 = vdwg.mxu0
  %1969 = vmatpush.bf16.msra.mxu0 %v1271
  %1970 = vmatpush.bf16.msra.mxu0 %v1267
  %1971 = vmatpush.bf16.msra.mxu0 %v1263
  %1972 = vmatpush.bf16.msra.mxu0 %v1259
  %1973 = vmatpush.bf16.msra.mxu0 %v1255
  %1974 = vmatpush.bf16.msra.mxu0 %v1251
  %1975 = vmatpush.bf16.msra.mxu0 %v1247
  %1976 = vmatpush.bf16.msra.mxu0 %v1243
  %1977 = vmatmul.bf16.gmra.mxu0 %v301
  %v1978 = vpop.f32.mrf.mxu0
  %v1979 = vadd.f32 %v1966, %v1978
  %v1980 = vpop.f32.mrf.mxu0
  %1981 = vdwg.mxu0
  %1982 = vmatpush.bf16.msra.mxu0 %v1303
  %1983 = vmatpush.bf16.msra.mxu0 %v1299
  %1984 = vmatpush.bf16.msra.mxu0 %v1295
  %1985 = vmatpush.bf16.msra.mxu0 %v1291
  %1986 = vmatpush.bf16.msra.mxu0 %v1287
  %1987 = vmatpush.bf16.msra.mxu0 %v1283
  %1988 = vmatpush.bf16.msra.mxu0 %v1279
  %1989 = vmatpush.bf16.msra.mxu0 %v1275
  %1990 = vmatmul.bf16.gmra.mxu0 %v302
  %v1991 = vpop.f32.mrf.mxu0
  %v1992 = vadd.f32 %v1979, %v1991
  %v1993 = vpop.f32.mrf.mxu0
  %1994 = vdwg.mxu0
  %1995 = vmatpush.bf16.msra.mxu0 %v1335
  %1996 = vmatpush.bf16.msra.mxu0 %v1331
  %1997 = vmatpush.bf16.msra.mxu0 %v1327
  %1998 = vmatpush.bf16.msra.mxu0 %v1323
  %1999 = vmatpush.bf16.msra.mxu0 %v1319
  %2000 = vmatpush.bf16.msra.mxu0 %v1315
  %2001 = vmatpush.bf16.msra.mxu0 %v1311
  %2002 = vmatpush.bf16.msra.mxu0 %v1307
  %2003 = vmatmul.bf16.gmra.mxu0 %v303
  %v2004 = vpop.f32.mrf.mxu0
  %v2005 = vadd.f32 %v1992, %v2004
  %v2006 = vpop.f32.mrf.mxu0
  %2007 = vdwg.mxu0
  %v2008 = vmax.f32 %v1693, 0.0
  %v2009 = vmax.f32 %v1797, 0.0
  %v2010 = vmax.f32 %v1901, 0.0
  %v2011 = vmax.f32 %v2005, 0.0
  %2012 = vst [vmem:[%s3] sm:$0xff] %v2008
  %2013 = vst [vmem:[%s3 + $0x8] sm:$0xff] %v2009
  %2014 = vst [vmem:[%s3 + $0x10] sm:$0xff] %v2010
  %2015 = vst [vmem:[%s3 + $0x18] sm:$0xff] %v2011
  // Predicated region
  $region14: #{autoencoder_forward.9} parent=0 // pred_check
    _
  $region15: #{autoencoder_forward.9} parent=0 // pred_check_branch
    %2017 = sbr.rel (0) target = $region17
  $region16: #{autoencoder_forward.9} parent=0 // pred_region
    _
  $region17: #{autoencoder_forward.9} parent=0 // pred_fallthru
    _
  // Predicated region
  $region18: #{autoencoder_forward.9} parent=0 // pred_check
    _
  $region19: #{autoencoder_forward.9} parent=0 // pred_check_branch
    %2019 = sbr.rel (0) target = $region21
  $region20: #{autoencoder_forward.9} parent=0 // pred_region
    _
  $region21: #{autoencoder_forward.9} parent=0 // pred_fallthru
    _

// kernel: tile.23
$region0: #{tile.23}
  #allocation0 [shape = 's32[1]{0}', space=sflag, size = 0x4, scoped, tag = 'scoped memory for tile.23']
  %s0 = inlined_call_operand.vmem [shape: f32[64], index: 0, kind: input, shape index: {}]
  %s1 = inlined_call_operand.vmem [shape: f32[4,64], index: 1, kind: output, shape index: {}]
  // Predicated region
  $region2: #{tile.23} parent=0 // pred_check
    _
  $region3: #{tile.23} parent=0 // pred_check_branch
    %3 = sbr.rel (0) target = $region5
  $region4: #{tile.23} parent=0 // pred_region
    _
  $region5: #{tile.23} parent=0 // pred_fallthru
    _
  %v4 = vld [vmem:[%s0] ss:$0 sm:$0xff]
  %5 = vst [vmem:[%s1] sm:$0xf] %v4

// kernel: tile.24
$region0: #{tile.24}
  %s0 = inlined_call_operand.vmem [shape: f32[4,64], index: 0, kind: input, shape index: {}]
  %s1 = inlined_call_operand.vmem [shape: f32[1,256], index: 1, kind: output, shape index: {}]
  $region1: #{tile.24} parent=0
    #allocation0 [shape = 'u8[8192]{0}', space=vmem, size = 0x2000, scoped, tag = 'scoped mem for output reshape']
    #allocation1 [shape = 'u8[4096]{0}', space=vmem, size = 0x1000, scoped, tag = 'scoped mem for input reshape']
    %s3 = ssub.s32 16, 1
    %v4 = vld [vmem:[%s0] sm:%s3]
    %5 = vst [vmem:[#allocation1] sm:%s3] %v4
    %s6 = smov 3
    %v7 = vld [vmem:[#allocation1] ss:$2 sm:%s6]
    %vm8 = vcmask 523264
    %9 = vst.msk [vmem:[#allocation0] ss:$8 sm:$0x3] %vm8, %v7
    %s10 = scalar_lea.vmem [#allocation1], 1
    %s11 = smov 3
    %v12 = vld [vmem:[%s10] ss:$2 sm:%s11]
    %13 = vrot.lane.b32.xlu0 %v12, 64
    %v14 = vpop.permute.xlu0 %13
    %vm15 = vcmask 1048064
    %16 = vst.msk [vmem:[#allocation0] ss:$8 sm:$0x3] %vm15, %v14
    %s18 = ssub.s32 2, 1
    %v19 = vld [vmem:[#allocation0] sm:%s18]
    %s21 = ssub.s32 2, 1
    %22 = vst [vmem:[%s1] sm:%s21] %v19
    %s23 = scalar_lea.vmem [#allocation0], 8
    %v24 = vld [vmem:[%s23] sm:%s18]
    %s26 = ssub.s32 2, 1
    %s27 = scalar_lea.vmem %s1, 1
    %28 = vst [vmem:[%s27] sm:%s26] %v24

// kernel: autoencoder_forward.10
$region0: #{autoencoder_forward.10}
  #allocation0 [shape = 'u32[]', space=smem, size = 0x4, offset = 0x4, fixed_abs, tag = 'smem constant byte address 0x4 - core index']
  #allocation1 [shape = 'u32[72,128]{1,0:T(1,128)}', space=vmem, size = 0x9000, scoped, tag = 'internal scratch']
  %s0 = inlined_call_operand.vmem [shape: bf16[32,512], index: 0, kind: input, shape index: {}]
  %s1 = inlined_call_operand.vmem [shape: bf16[512,256], index: 1, kind: input, shape index: {}]
  %s2 = inlined_call_operand.vmem [shape: f32[1,256], index: 2, kind: input, shape index: {}]
  %s3 = inlined_call_operand.vmem [shape: f32[32,256], index: 3, kind: output, shape index: {}]
  %s4 = sld [smem:[#allocation0]]
  $region22: #{autoencoder_forward.10} parent=0
    _
  %s6 = ssub.s32 1, %s4
  %s7 = scalar_select 0, %s6, %s4
  // Predicated region
  $region2: #{autoencoder_forward.10} parent=0 // pred_check
    _
  $region3: #{autoencoder_forward.10} parent=0 // pred_check_branch
    %9 = sbr.rel (0) target = $region5
  $region4: #{autoencoder_forward.10} parent=0 // pred_region
    _
  $region5: #{autoencoder_forward.10} parent=0 // pred_fallthru
    _
  // Predicated region
  $region6: #{autoencoder_forward.10} parent=0 // pred_check
    _
  $region7: #{autoencoder_forward.10} parent=0 // pred_check_branch
    %11 = sbr.rel (0) target = $region9
  $region8: #{autoencoder_forward.10} parent=0 // pred_region
    _
  $region9: #{autoencoder_forward.10} parent=0 // pred_fallthru
    _
  // Predicated region
  $region10: #{autoencoder_forward.10} parent=0 // pred_check
    _
  $region11: #{autoencoder_forward.10} parent=0 // pred_check_branch
    %13 = sbr.rel (0) target = $region13
  $region12: #{autoencoder_forward.10} parent=0 // pred_region
    _
  $region13: #{autoencoder_forward.10} parent=0 // pred_fallthru
    _
  %v14 = vld [vmem:[%s0] sm:$0xff]
  %v15 = vld [vmem:[%s0 + $0x8] sm:$0xff]
  %v16 = vld [vmem:[%s0 + $0x10] sm:$0xff]
  %v17 = vld [vmem:[%s0 + $0x18] sm:$0xff]
  %v18 = vld [vmem:[%s0 + $0x20] sm:$0xff]
  %v19 = vld [vmem:[%s0 + $0x28] sm:$0xff]
  %v20 = vld [vmem:[%s0 + $0x30] sm:$0xff]
  %v21 = vld [vmem:[%s0 + $0x38] sm:$0xff]
  %v22 = vld [vmem:[%s1] sm:$0xff]
  %v23 = vld [vmem:[%s1 + $0x8] sm:$0xff]
  %v24 = vld [vmem:[%s1 + $0x10] sm:$0xff]
  %v25 = vld [vmem:[%s1 + $0x18] sm:$0xff]
  %v26 = vld [vmem:[%s1 + $0x20] sm:$0xff]
  %v27 = vld [vmem:[%s1 + $0x28] sm:$0xff]
  %v28 = vld [vmem:[%s1 + $0x30] sm:$0xff]
  %v29 = vld [vmem:[%s1 + $0x38] sm:$0xff]
  %v30 = vld [vmem:[%s1 + $0x40] sm:$0xff]
  %v31 = vld [vmem:[%s1 + $0x48] sm:$0xff]
  %v32 = vld [vmem:[%s1 + $0x50] sm:$0xff]
  %v33 = vld [vmem:[%s1 + $0x58] sm:$0xff]
  %v34 = vld [vmem:[%s1 + $0x60] sm:$0xff]
  %v35 = vld [vmem:[%s1 + $0x68] sm:$0xff]
  %v36 = vld [vmem:[%s1 + $0x70] sm:$0xff]
  %v37 = vld [vmem:[%s1 + $0x78] sm:$0xff]
  %v38 = vld [vmem:[%s1 + $0x80] sm:$0xff]
  %v39 = vld [vmem:[%s1 + $0x88] sm:$0xff]
  %v40 = vld [vmem:[%s1 + $0x90] sm:$0xff]
  %v41 = vld [vmem:[%s1 + $0x98] sm:$0xff]
  %v42 = vld [vmem:[%s1 + $0xa0] sm:$0xff]
  %v43 = vld [vmem:[%s1 + $0xa8] sm:$0xff]
  %v44 = vld [vmem:[%s1 + $0xb0] sm:$0xff]
  %v45 = vld [vmem:[%s1 + $0xb8] sm:$0xff]
  %v46 = vld [vmem:[%s1 + $0xc0] sm:$0xff]
  %v47 = vld [vmem:[%s1 + $0xc8] sm:$0xff]
  %v48 = vld [vmem:[%s1 + $0xd0] sm:$0xff]
  %v49 = vld [vmem:[%s1 + $0xd8] sm:$0xff]
  %v50 = vld [vmem:[%s1 + $0xe0] sm:$0xff]
  %v51 = vld [vmem:[%s1 + $0xe8] sm:$0xff]
  %v52 = vld [vmem:[%s1 + $0xf0] sm:$0xff]
  %v53 = vld [vmem:[%s1 + $0xf8] sm:$0xff]
  %v54 = vld [vmem:[%s1 + $0x100] sm:$0xff]
  %v55 = vld [vmem:[%s1 + $0x108] sm:$0xff]
  %v56 = vld [vmem:[%s1 + $0x110] sm:$0xff]
  %v57 = vld [vmem:[%s1 + $0x118] sm:$0xff]
  %v58 = vld [vmem:[%s1 + $0x120] sm:$0xff]
  %v59 = vld [vmem:[%s1 + $0x128] sm:$0xff]
  %v60 = vld [vmem:[%s1 + $0x130] sm:$0xff]
  %v61 = vld [vmem:[%s1 + $0x138] sm:$0xff]
  %v62 = vld [vmem:[%s1 + $0x140] sm:$0xff]
  %v63 = vld [vmem:[%s1 + $0x148] sm:$0xff]
  %v64 = vld [vmem:[%s1 + $0x150] sm:$0xff]
  %v65 = vld [vmem:[%s1 + $0x158] sm:$0xff]
  %v66 = vld [vmem:[%s1 + $0x160] sm:$0xff]
  %v67 = vld [vmem:[%s1 + $0x168] sm:$0xff]
  %v68 = vld [vmem:[%s1 + $0x170] sm:$0xff]
  %v69 = vld [vmem:[%s1 + $0x178] sm:$0xff]
  %v70 = vld [vmem:[%s1 + $0x180] sm:$0xff]
  %v71 = vld [vmem:[%s1 + $0x188] sm:$0xff]
  %v72 = vld [vmem:[%s1 + $0x190] sm:$0xff]
  %v73 = vld [vmem:[%s1 + $0x198] sm:$0xff]
  %v74 = vld [vmem:[%s1 + $0x1a0] sm:$0xff]
  %v75 = vld [vmem:[%s1 + $0x1a8] sm:$0xff]
  %v76 = vld [vmem:[%s1 + $0x1b0] sm:$0xff]
  %v77 = vld [vmem:[%s1 + $0x1b8] sm:$0xff]
  %v78 = vld [vmem:[%s1 + $0x1c0] sm:$0xff]
  %v79 = vld [vmem:[%s1 + $0x1c8] sm:$0xff]
  %v80 = vld [vmem:[%s1 + $0x1d0] sm:$0xff]
  %v81 = vld [vmem:[%s1 + $0x1d8] sm:$0xff]
  %v82 = vld [vmem:[%s1 + $0x1e0] sm:$0xff]
  %v83 = vld [vmem:[%s1 + $0x1e8] sm:$0xff]
  %v84 = vld [vmem:[%s1 + $0x1f0] sm:$0xff]
  %v85 = vld [vmem:[%s1 + $0x1f8] sm:$0xff]
  %v86 = vld [vmem:[%s2] sm:$0x3]
  %v88 = vperm.slane %v86, 0
  %v89 = vperm.slane %v86, 1
  %v100 = vunpack.c.l.b16 %v14
  %v101 = vunpack.c.h.b16 %v14
  %v102 = vunpack.c.l.b16 %v15
  %v103 = vunpack.c.h.b16 %v15
  %v104 = vunpack.c.l.b16 %v16
  %v105 = vunpack.c.h.b16 %v16
  %v106 = vunpack.c.l.b16 %v17
  %v107 = vunpack.c.h.b16 %v17
  %v108 = vunpack.c.l.b16 %v18
  %v109 = vunpack.c.h.b16 %v18
  %v110 = vunpack.c.l.b16 %v19
  %v111 = vunpack.c.h.b16 %v19
  %v112 = vunpack.c.l.b16 %v20
  %v113 = vunpack.c.h.b16 %v20
  %v114 = vunpack.c.l.b16 %v21
  %v115 = vunpack.c.h.b16 %v21
  %v116 = vpack.c.b16 %v104, %v100
  %v117 = vpack.c.b16 %v105, %v101
  %v118 = vpack.c.b16 %v106, %v102
  %v119 = vpack.c.b16 %v107, %v103
  %v120 = vpack.c.b16 %v112, %v108
  %v121 = vpack.c.b16 %v113, %v109
  %v122 = vpack.c.b16 %v114, %v110
  %v123 = vpack.c.b16 %v115, %v111
  %v196 = vunpack.c.l.b16 %v22
  %v197 = vunpack.c.h.b16 %v22
  %v198 = vunpack.c.l.b16 %v23
  %v199 = vunpack.c.h.b16 %v23
  %v200 = vunpack.c.l.b16 %v24
  %v201 = vunpack.c.h.b16 %v24
  %v202 = vunpack.c.l.b16 %v25
  %v203 = vunpack.c.h.b16 %v25
  %v204 = vunpack.c.l.b16 %v26
  %v205 = vunpack.c.h.b16 %v26
  %v206 = vunpack.c.l.b16 %v27
  %v207 = vunpack.c.h.b16 %v27
  %v208 = vunpack.c.l.b16 %v28
  %v209 = vunpack.c.h.b16 %v28
  %v210 = vunpack.c.l.b16 %v29
  %v211 = vunpack.c.h.b16 %v29
  %v212 = vunpack.c.l.b16 %v30
  %v213 = vunpack.c.h.b16 %v30
  %v214 = vunpack.c.l.b16 %v31
  %v215 = vunpack.c.h.b16 %v31
  %v216 = vunpack.c.l.b16 %v32
  %v217 = vunpack.c.h.b16 %v32
  %v218 = vunpack.c.l.b16 %v33
  %v219 = vunpack.c.h.b16 %v33
  %v220 = vunpack.c.l.b16 %v34
  %v221 = vunpack.c.h.b16 %v34
  %v222 = vunpack.c.l.b16 %v35
  %v223 = vunpack.c.h.b16 %v35
  %v224 = vunpack.c.l.b16 %v36
  %v225 = vunpack.c.h.b16 %v36
  %v226 = vunpack.c.l.b16 %v37
  %v227 = vunpack.c.h.b16 %v37
  %v228 = vunpack.c.l.b16 %v38
  %v229 = vunpack.c.h.b16 %v38
  %v230 = vunpack.c.l.b16 %v39
  %v231 = vunpack.c.h.b16 %v39
  %v232 = vunpack.c.l.b16 %v40
  %v233 = vunpack.c.h.b16 %v40
  %v234 = vunpack.c.l.b16 %v41
  %v235 = vunpack.c.h.b16 %v41
  %v236 = vunpack.c.l.b16 %v42
  %v237 = vunpack.c.h.b16 %v42
  %v238 = vunpack.c.l.b16 %v43
  %v239 = vunpack.c.h.b16 %v43
  %v240 = vunpack.c.l.b16 %v44
  %v241 = vunpack.c.h.b16 %v44
  %v242 = vunpack.c.l.b16 %v45
  %v243 = vunpack.c.h.b16 %v45
  %v244 = vunpack.c.l.b16 %v46
  %v245 = vunpack.c.h.b16 %v46
  %v246 = vunpack.c.l.b16 %v47
  %v247 = vunpack.c.h.b16 %v47
  %v248 = vunpack.c.l.b16 %v48
  %v249 = vunpack.c.h.b16 %v48
  %v250 = vunpack.c.l.b16 %v49
  %v251 = vunpack.c.h.b16 %v49
  %v252 = vunpack.c.l.b16 %v50
  %v253 = vunpack.c.h.b16 %v50
  %v254 = vunpack.c.l.b16 %v51
  %v255 = vunpack.c.h.b16 %v51
  %v256 = vunpack.c.l.b16 %v52
  %v257 = vunpack.c.h.b16 %v52
  %v258 = vunpack.c.l.b16 %v53
  %v259 = vunpack.c.h.b16 %v53
  %v260 = vunpack.c.l.b16 %v54
  %v261 = vunpack.c.h.b16 %v54
  %v262 = vunpack.c.l.b16 %v55
  %v263 = vunpack.c.h.b16 %v55
  %v264 = vunpack.c.l.b16 %v56
  %v265 = vunpack.c.h.b16 %v56
  %v266 = vunpack.c.l.b16 %v57
  %v267 = vunpack.c.h.b16 %v57
  %v268 = vunpack.c.l.b16 %v58
  %v269 = vunpack.c.h.b16 %v58
  %v270 = vunpack.c.l.b16 %v59
  %v271 = vunpack.c.h.b16 %v59
  %v272 = vunpack.c.l.b16 %v60
  %v273 = vunpack.c.h.b16 %v60
  %v274 = vunpack.c.l.b16 %v61
  %v275 = vunpack.c.h.b16 %v61
  %v276 = vunpack.c.l.b16 %v62
  %v277 = vunpack.c.h.b16 %v62
  %v278 = vunpack.c.l.b16 %v63
  %v279 = vunpack.c.h.b16 %v63
  %v280 = vunpack.c.l.b16 %v64
  %v281 = vunpack.c.h.b16 %v64
  %v282 = vunpack.c.l.b16 %v65
  %v283 = vunpack.c.h.b16 %v65
  %v284 = vunpack.c.l.b16 %v66
  %v285 = vunpack.c.h.b16 %v66
  %v286 = vunpack.c.l.b16 %v67
  %v287 = vunpack.c.h.b16 %v67
  %v288 = vunpack.c.l.b16 %v68
  %v289 = vunpack.c.h.b16 %v68
  %v290 = vunpack.c.l.b16 %v69
  %v291 = vunpack.c.h.b16 %v69
  %v292 = vunpack.c.l.b16 %v70
  %v293 = vunpack.c.h.b16 %v70
  %v294 = vunpack.c.l.b16 %v71
  %v295 = vunpack.c.h.b16 %v71
  %v296 = vunpack.c.l.b16 %v72
  %v297 = vunpack.c.h.b16 %v72
  %v298 = vunpack.c.l.b16 %v73
  %v299 = vunpack.c.h.b16 %v73
  %v300 = vunpack.c.l.b16 %v74
  %v301 = vunpack.c.h.b16 %v74
  %v302 = vunpack.c.l.b16 %v75
  %v303 = vunpack.c.h.b16 %v75
  %v304 = vunpack.c.l.b16 %v76
  %v305 = vunpack.c.h.b16 %v76
  %v306 = vunpack.c.l.b16 %v77
  %v307 = vunpack.c.h.b16 %v77
  %v308 = vunpack.c.l.b16 %v78
  %v309 = vunpack.c.h.b16 %v78
  %v310 = vunpack.c.l.b16 %v79
  %v311 = vunpack.c.h.b16 %v79
  %v312 = vunpack.c.l.b16 %v80
  %v313 = vunpack.c.h.b16 %v80
  %v314 = vunpack.c.l.b16 %v81
  %v315 = vunpack.c.h.b16 %v81
  %v316 = vunpack.c.l.b16 %v82
  %v317 = vunpack.c.h.b16 %v82
  %v318 = vunpack.c.l.b16 %v83
  %v319 = vunpack.c.h.b16 %v83
  %v320 = vunpack.c.l.b16 %v84
  %v321 = vunpack.c.h.b16 %v84
  %v322 = vunpack.c.l.b16 %v85
  %v323 = vunpack.c.h.b16 %v85
  %v324 = vpack.c.b16 %v198, %v196
  %v325 = vpack.c.b16 %v199, %v197
  %v326 = vpack.c.b16 %v202, %v200
  %v327 = vpack.c.b16 %v203, %v201
  %v328 = vpack.c.b16 %v206, %v204
  %v329 = vpack.c.b16 %v207, %v205
  %v330 = vpack.c.b16 %v210, %v208
  %v331 = vpack.c.b16 %v211, %v209
  %v332 = vpack.c.b16 %v214, %v212
  %v333 = vpack.c.b16 %v215, %v213
  %v334 = vpack.c.b16 %v218, %v216
  %v335 = vpack.c.b16 %v219, %v217
  %v336 = vpack.c.b16 %v222, %v220
  %v337 = vpack.c.b16 %v223, %v221
  %v338 = vpack.c.b16 %v226, %v224
  %v339 = vpack.c.b16 %v227, %v225
  %v340 = vpack.c.b16 %v230, %v228
  %v341 = vpack.c.b16 %v231, %v229
  %v342 = vpack.c.b16 %v234, %v232
  %v343 = vpack.c.b16 %v235, %v233
  %v344 = vpack.c.b16 %v238, %v236
  %v345 = vpack.c.b16 %v239, %v237
  %v346 = vpack.c.b16 %v242, %v240
  %v347 = vpack.c.b16 %v243, %v241
  %v348 = vpack.c.b16 %v246, %v244
  %v349 = vpack.c.b16 %v247, %v245
  %v350 = vpack.c.b16 %v250, %v248
  %v351 = vpack.c.b16 %v251, %v249
  %v352 = vpack.c.b16 %v254, %v252
  %v353 = vpack.c.b16 %v255, %v253
  %v354 = vpack.c.b16 %v258, %v256
  %v355 = vpack.c.b16 %v259, %v257
  %v356 = vpack.c.b16 %v262, %v260
  %v357 = vpack.c.b16 %v263, %v261
  %v358 = vpack.c.b16 %v266, %v264
  %v359 = vpack.c.b16 %v267, %v265
  %v360 = vpack.c.b16 %v270, %v268
  %v361 = vpack.c.b16 %v271, %v269
  %v362 = vpack.c.b16 %v274, %v272
  %v363 = vpack.c.b16 %v275, %v273
  %v364 = vpack.c.b16 %v278, %v276
  %v365 = vpack.c.b16 %v279, %v277
  %v366 = vpack.c.b16 %v282, %v280
  %v367 = vpack.c.b16 %v283, %v281
  %v368 = vpack.c.b16 %v286, %v284
  %v369 = vpack.c.b16 %v287, %v285
  %v370 = vpack.c.b16 %v290, %v288
  %v371 = vpack.c.b16 %v291, %v289
  %v372 = vpack.c.b16 %v294, %v292
  %v373 = vpack.c.b16 %v295, %v293
  %v374 = vpack.c.b16 %v298, %v296
  %v375 = vpack.c.b16 %v299, %v297
  %v376 = vpack.c.b16 %v302, %v300
  %v377 = vpack.c.b16 %v303, %v301
  %v378 = vpack.c.b16 %v306, %v304
  %v379 = vpack.c.b16 %v307, %v305
  %v380 = vpack.c.b16 %v310, %v308
  %v381 = vpack.c.b16 %v311, %v309
  %v382 = vpack.c.b16 %v314, %v312
  %v383 = vpack.c.b16 %v315, %v313
  %v384 = vpack.c.b16 %v318, %v316
  %v385 = vpack.c.b16 %v319, %v317
  %v386 = vpack.c.b16 %v322, %v320
  %v387 = vpack.c.b16 %v323, %v321
  %452 = vmatpush.bf16.msra.mxu0 %v338
  %453 = vmatpush.bf16.msra.mxu0 %v336
  %454 = vmatpush.bf16.msra.mxu0 %v334
  %455 = vmatpush.bf16.msra.mxu0 %v332
  %456 = vmatpush.bf16.msra.mxu0 %v330
  %457 = vmatpush.bf16.msra.mxu0 %v328
  %458 = vmatpush.bf16.msra.mxu0 %v326
  %459 = vmatpush.bf16.msra.mxu0 %v324
  %460 = vmatmul.bf16.gmra.mxu0 %v116
  %v461 = vpop.f32.mrf.mxu0
  %v462 = vadd.f32 %v88, %v461
  %v463 = vpop.f32.mrf.mxu0
  %v464 = vadd.f32 %v88, %v463
  %465 = vmatmul.bf16.gmra.mxu0 %v120
  %v466 = vpop.f32.mrf.mxu0
  %v467 = vadd.f32 %v88, %v466
  %v468 = vpop.f32.mrf.mxu0
  %v469 = vadd.f32 %v88, %v468
  %470 = vdwg.mxu0
  %471 = vmatpush.bf16.msra.mxu0 %v354
  %472 = vmatpush.bf16.msra.mxu0 %v352
  %473 = vmatpush.bf16.msra.mxu0 %v350
  %474 = vmatpush.bf16.msra.mxu0 %v348
  %475 = vmatpush.bf16.msra.mxu0 %v346
  %476 = vmatpush.bf16.msra.mxu0 %v344
  %477 = vmatpush.bf16.msra.mxu0 %v342
  %478 = vmatpush.bf16.msra.mxu0 %v340
  %479 = vmatmul.bf16.gmra.mxu0 %v117
  %v480 = vpop.f32.mrf.mxu0
  %v481 = vadd.f32 %v462, %v480
  %v482 = vpop.f32.mrf.mxu0
  %v483 = vadd.f32 %v464, %v482
  %484 = vmatmul.bf16.gmra.mxu0 %v121
  %v485 = vpop.f32.mrf.mxu0
  %v486 = vadd.f32 %v467, %v485
  %v487 = vpop.f32.mrf.mxu0
  %v488 = vadd.f32 %v469, %v487
  %489 = vdwg.mxu0
  %490 = vmatpush.bf16.msra.mxu0 %v370
  %491 = vmatpush.bf16.msra.mxu0 %v368
  %492 = vmatpush.bf16.msra.mxu0 %v366
  %493 = vmatpush.bf16.msra.mxu0 %v364
  %494 = vmatpush.bf16.msra.mxu0 %v362
  %495 = vmatpush.bf16.msra.mxu0 %v360
  %496 = vmatpush.bf16.msra.mxu0 %v358
  %497 = vmatpush.bf16.msra.mxu0 %v356
  %498 = vmatmul.bf16.gmra.mxu0 %v118
  %v499 = vpop.f32.mrf.mxu0
  %v500 = vadd.f32 %v481, %v499
  %v501 = vpop.f32.mrf.mxu0
  %v502 = vadd.f32 %v483, %v501
  %503 = vmatmul.bf16.gmra.mxu0 %v122
  %v504 = vpop.f32.mrf.mxu0
  %v505 = vadd.f32 %v486, %v504
  %v506 = vpop.f32.mrf.mxu0
  %v507 = vadd.f32 %v488, %v506
  %508 = vdwg.mxu0
  %509 = vmatpush.bf16.msra.mxu0 %v386
  %510 = vmatpush.bf16.msra.mxu0 %v384
  %511 = vmatpush.bf16.msra.mxu0 %v382
  %512 = vmatpush.bf16.msra.mxu0 %v380
  %513 = vmatpush.bf16.msra.mxu0 %v378
  %514 = vmatpush.bf16.msra.mxu0 %v376
  %515 = vmatpush.bf16.msra.mxu0 %v374
  %516 = vmatpush.bf16.msra.mxu0 %v372
  %517 = vmatmul.bf16.gmra.mxu0 %v119
  %v518 = vpop.f32.mrf.mxu0
  %v519 = vadd.f32 %v500, %v518
  %v520 = vpop.f32.mrf.mxu0
  %v521 = vadd.f32 %v502, %v520
  %522 = vmatmul.bf16.gmra.mxu0 %v123
  %v523 = vpop.f32.mrf.mxu0
  %v524 = vadd.f32 %v505, %v523
  %v525 = vpop.f32.mrf.mxu0
  %v526 = vadd.f32 %v507, %v525
  %527 = vdwg.mxu0
  %528 = vmatpush.bf16.msra.mxu0 %v339
  %529 = vmatpush.bf16.msra.mxu0 %v337
  %530 = vmatpush.bf16.msra.mxu0 %v335
  %531 = vmatpush.bf16.msra.mxu0 %v333
  %532 = vmatpush.bf16.msra.mxu0 %v331
  %533 = vmatpush.bf16.msra.mxu0 %v329
  %534 = vmatpush.bf16.msra.mxu0 %v327
  %535 = vmatpush.bf16.msra.mxu0 %v325
  %536 = vmatmul.bf16.gmra.mxu0 %v116
  %v537 = vpop.f32.mrf.mxu0
  %v538 = vadd.f32 %v89, %v537
  %v539 = vpop.f32.mrf.mxu0
  %v540 = vadd.f32 %v89, %v539
  %541 = vmatmul.bf16.gmra.mxu0 %v120
  %v542 = vpop.f32.mrf.mxu0
  %v543 = vadd.f32 %v89, %v542
  %v544 = vpop.f32.mrf.mxu0
  %v545 = vadd.f32 %v89, %v544
  %546 = vdwg.mxu0
  %547 = vmatpush.bf16.msra.mxu0 %v355
  %548 = vmatpush.bf16.msra.mxu0 %v353
  %549 = vmatpush.bf16.msra.mxu0 %v351
  %550 = vmatpush.bf16.msra.mxu0 %v349
  %551 = vmatpush.bf16.msra.mxu0 %v347
  %552 = vmatpush.bf16.msra.mxu0 %v345
  %553 = vmatpush.bf16.msra.mxu0 %v343
  %554 = vmatpush.bf16.msra.mxu0 %v341
  %555 = vmatmul.bf16.gmra.mxu0 %v117
  %v556 = vpop.f32.mrf.mxu0
  %v557 = vadd.f32 %v538, %v556
  %v558 = vpop.f32.mrf.mxu0
  %v559 = vadd.f32 %v540, %v558
  %560 = vmatmul.bf16.gmra.mxu0 %v121
  %v561 = vpop.f32.mrf.mxu0
  %v562 = vadd.f32 %v543, %v561
  %v563 = vpop.f32.mrf.mxu0
  %v564 = vadd.f32 %v545, %v563
  %565 = vdwg.mxu0
  %566 = vmatpush.bf16.msra.mxu0 %v371
  %567 = vmatpush.bf16.msra.mxu0 %v369
  %568 = vmatpush.bf16.msra.mxu0 %v367
  %569 = vmatpush.bf16.msra.mxu0 %v365
  %570 = vmatpush.bf16.msra.mxu0 %v363
  %571 = vmatpush.bf16.msra.mxu0 %v361
  %572 = vmatpush.bf16.msra.mxu0 %v359
  %573 = vmatpush.bf16.msra.mxu0 %v357
  %574 = vmatmul.bf16.gmra.mxu0 %v118
  %v575 = vpop.f32.mrf.mxu0
  %v576 = vadd.f32 %v557, %v575
  %v577 = vpop.f32.mrf.mxu0
  %v578 = vadd.f32 %v559, %v577
  %579 = vmatmul.bf16.gmra.mxu0 %v122
  %v580 = vpop.f32.mrf.mxu0
  %v581 = vadd.f32 %v562, %v580
  %v582 = vpop.f32.mrf.mxu0
  %v583 = vadd.f32 %v564, %v582
  %584 = vdwg.mxu0
  %585 = vmatpush.bf16.msra.mxu0 %v387
  %586 = vmatpush.bf16.msra.mxu0 %v385
  %587 = vmatpush.bf16.msra.mxu0 %v383
  %588 = vmatpush.bf16.msra.mxu0 %v381
  %589 = vmatpush.bf16.msra.mxu0 %v379
  %590 = vmatpush.bf16.msra.mxu0 %v377
  %591 = vmatpush.bf16.msra.mxu0 %v375
  %592 = vmatpush.bf16.msra.mxu0 %v373
  %593 = vmatmul.bf16.gmra.mxu0 %v119
  %v594 = vpop.f32.mrf.mxu0
  %v595 = vadd.f32 %v576, %v594
  %v596 = vpop.f32.mrf.mxu0
  %v597 = vadd.f32 %v578, %v596
  %598 = vmatmul.bf16.gmra.mxu0 %v123
  %v599 = vpop.f32.mrf.mxu0
  %v600 = vadd.f32 %v581, %v599
  %v601 = vpop.f32.mrf.mxu0
  %v602 = vadd.f32 %v583, %v601
  %603 = vdwg.mxu0
  %v604 = vmax.f32 %v519, 0.0
  %v605 = vmax.f32 %v595, 0.0
  %v606 = vmax.f32 %v521, 0.0
  %v607 = vmax.f32 %v597, 0.0
  %v608 = vmax.f32 %v524, 0.0
  %v609 = vmax.f32 %v600, 0.0
  %v610 = vmax.f32 %v526, 0.0
  %v611 = vmax.f32 %v602, 0.0
  %612 = vst [vmem:[%s3] sm:$0xff] %v604
  %613 = vst [vmem:[%s3 + $0x8] sm:$0xff] %v605
  %614 = vst [vmem:[%s3 + $0x10] sm:$0xff] %v606
  %615 = vst [vmem:[%s3 + $0x18] sm:$0xff] %v607
  %616 = vst [vmem:[%s3 + $0x20] sm:$0xff] %v608
  %617 = vst [vmem:[%s3 + $0x28] sm:$0xff] %v609
  %618 = vst [vmem:[%s3 + $0x30] sm:$0xff] %v610
  %619 = vst [vmem:[%s3 + $0x38] sm:$0xff] %v611
  // Predicated region
  $region14: #{autoencoder_forward.10} parent=0 // pred_check
    _
  $region15: #{autoencoder_forward.10} parent=0 // pred_check_branch
    %621 = sbr.rel (0) target = $region17
  $region16: #{autoencoder_forward.10} parent=0 // pred_region
    _
  $region17: #{autoencoder_forward.10} parent=0 // pred_fallthru
    _
  // Predicated region
  $region18: #{autoencoder_forward.10} parent=0 // pred_check
    _
  $region19: #{autoencoder_forward.10} parent=0 // pred_check_branch
    %623 = sbr.rel (0) target = $region21
  $region20: #{autoencoder_forward.10} parent=0 // pred_region
    _
  $region21: #{autoencoder_forward.10} parent=0 // pred_fallthru
    _

// kernel: tile.28
$region0: #{tile.28}
  #allocation0 [shape = 's32[1]{0}', space=sflag, size = 0x4, scoped, tag = 'scoped memory for tile.28']
  %s0 = inlined_call_operand.vmem [shape: f32[3], index: 0, kind: input, shape index: {}]
  %s1 = inlined_call_operand.vmem [shape: f32[4,3], index: 1, kind: output, shape index: {}]
  // Predicated region
  $region2: #{tile.28} parent=0 // pred_check
    _
  $region3: #{tile.28} parent=0 // pred_check_branch
    %3 = sbr.rel (0) target = $region5
  $region4: #{tile.28} parent=0 // pred_region
    _
  $region5: #{tile.28} parent=0 // pred_fallthru
    _
  %v4 = vld [vmem:[%s0] ss:$0 sm:$0xff]
  %5 = vst [vmem:[%s1] sm:$0xf] %v4

// kernel: tile.29
$region0: #{tile.29}
  %s0 = inlined_call_operand.vmem [shape: f32[4,3], index: 0, kind: input, shape index: {}]
  %s1 = inlined_call_operand.vmem [shape: f32[12], index: 1, kind: output, shape index: {}]
  $region1: #{tile.29} parent=0
    #allocation0 [shape = 'u8[4096]{0}', space=vmem, size = 0x1000, scoped, tag = 'scoped mem for output reshape']
    #allocation1 [shape = 'u8[4096]{0}', space=vmem, size = 0x1000, scoped, tag = 'scoped mem for input reshape']
    %s3 = ssub.s32 16, 1
    %v4 = vld [vmem:[%s0] sm:%s3]
    %5 = vst [vmem:[#allocation1] sm:%s3] %v4
    %v6 = vld [vmem:[#allocation1] sm:$0x1]
    %vm7 = vcmask 23552
    %8 = vst.msk [vmem:[#allocation0] sm:$0x1] %vm7, %v6
    %s9 = scalar_lea.vmem [#allocation1], 3
    %v10 = vld [vmem:[%s9] sm:$0x1]
    %11 = vrot.lane.b32.xlu0 %v10, 9
    %v12 = vpop.permute.xlu0 %11
    %vm13 = vcmask 97352
    %14 = vst.msk [vmem:[#allocation0] sm:$0x1] %vm13, %v12
    %s15 = scalar_lea.vmem [#allocation1], 2
    %v16 = vld [vmem:[%s15] sm:$0x1]
    %17 = vrot.lane.b32.xlu0 %v16, 6
    %v18 = vpop.permute.xlu0 %17
    %vm19 = vcmask 72752
    %20 = vst.msk [vmem:[#allocation0] sm:$0x1] %vm19, %v18
    %s21 = scalar_lea.vmem [#allocation1], 1
    %v22 = vld [vmem:[%s21] sm:$0x1]
    %23 = vrot.lane.b32.xlu0 %v22, 3
    %v24 = vpop.permute.xlu0 %23
    %vm25 = vcmask 48152
    %26 = vst.msk [vmem:[#allocation0] sm:$0x1] %vm25, %v24
    %s28 = ssub.s32 2, 1
    %v29 = vld [vmem:[#allocation0] sm:%s28]
    %s31 = ssub.s32 2, 1
    %32 = vst [vmem:[%s1] sm:%s31] %v29

// kernel: autoencoder_forward.11
$region0: #{autoencoder_forward.11}
  #allocation0 [shape = 'u32[]', space=smem, size = 0x4, offset = 0x4, fixed_abs, tag = 'smem constant byte address 0x4 - core index']
  #allocation1 [shape = 'u32[72,128]{1,0:T(1,128)}', space=vmem, size = 0x9000, scoped, tag = 'internal scratch']
  %s0 = inlined_call_operand.vmem [shape: bf16[128,256], index: 0, kind: input, shape index: {}]
  %s1 = inlined_call_operand.vmem [shape: bf16[256,128], index: 1, kind: input, shape index: {}]
  %s2 = inlined_call_operand.vmem [shape: f32[1,128], index: 2, kind: input, shape index: {}]
  %s3 = inlined_call_operand.vmem [shape: f32[128,128], index: 3, kind: output, shape index: {}]
  %s4 = sld [smem:[#allocation0]]
  $region22: #{autoencoder_forward.11} parent=0
    _
  %s6 = ssub.s32 1, %s4
  %s7 = scalar_select 0, %s6, %s4
  // Predicated region
  $region2: #{autoencoder_forward.11} parent=0 // pred_check
    _
  $region3: #{autoencoder_forward.11} parent=0 // pred_check_branch
    %9 = sbr.rel (0) target = $region5
  $region4: #{autoencoder_forward.11} parent=0 // pred_region
    _
  $region5: #{autoencoder_forward.11} parent=0 // pred_fallthru
    _
  // Predicated region
  $region6: #{autoencoder_forward.11} parent=0 // pred_check
    _
  $region7: #{autoencoder_forward.11} parent=0 // pred_check_branch
    %11 = sbr.rel (0) target = $region9
  $region8: #{autoencoder_forward.11} parent=0 // pred_region
    _
  $region9: #{autoencoder_forward.11} parent=0 // pred_fallthru
    _
  // Predicated region
  $region10: #{autoencoder_forward.11} parent=0 // pred_check
    _
  $region11: #{autoencoder_forward.11} parent=0 // pred_check_branch
    %13 = sbr.rel (0) target = $region13
  $region12: #{autoencoder_forward.11} parent=0 // pred_region
    _
  $region13: #{autoencoder_forward.11} parent=0 // pred_fallthru
    _
  %v14 = vld [vmem:[%s0] sm:$0xff]
  %v15 = vld [vmem:[%s0 + $0x8] sm:$0xff]
  %v16 = vld [vmem:[%s0 + $0x10] sm:$0xff]
  %v17 = vld [vmem:[%s0 + $0x18] sm:$0xff]
  %v18 = vld [vmem:[%s0 + $0x20] sm:$0xff]
  %v19 = vld [vmem:[%s0 + $0x28] sm:$0xff]
  %v20 = vld [vmem:[%s0 + $0x30] sm:$0xff]
  %v21 = vld [vmem:[%s0 + $0x38] sm:$0xff]
  %v22 = vld [vmem:[%s0 + $0x40] sm:$0xff]
  %v23 = vld [vmem:[%s0 + $0x48] sm:$0xff]
  %v24 = vld [vmem:[%s0 + $0x50] sm:$0xff]
  %v25 = vld [vmem:[%s0 + $0x58] sm:$0xff]
  %v26 = vld [vmem:[%s0 + $0x60] sm:$0xff]
  %v27 = vld [vmem:[%s0 + $0x68] sm:$0xff]
  %v28 = vld [vmem:[%s0 + $0x70] sm:$0xff]
  %v29 = vld [vmem:[%s0 + $0x78] sm:$0xff]
  %v30 = vld [vmem:[%s1] sm:$0xf]
  %v31 = vld [vmem:[%s1 + $0x4] sm:$0xf]
  %v32 = vld [vmem:[%s1 + $0x8] sm:$0xf]
  %v33 = vld [vmem:[%s1 + $0xc] sm:$0xf]
  %v34 = vld [vmem:[%s1 + $0x10] sm:$0xf]
  %v35 = vld [vmem:[%s1 + $0x14] sm:$0xf]
  %v36 = vld [vmem:[%s1 + $0x18] sm:$0xf]
  %v37 = vld [vmem:[%s1 + $0x1c] sm:$0xf]
  %v38 = vld [vmem:[%s1 + $0x20] sm:$0xf]
  %v39 = vld [vmem:[%s1 + $0x24] sm:$0xf]
  %v40 = vld [vmem:[%s1 + $0x28] sm:$0xf]
  %v41 = vld [vmem:[%s1 + $0x2c] sm:$0xf]
  %v42 = vld [vmem:[%s1 + $0x30] sm:$0xf]
  %v43 = vld [vmem:[%s1 + $0x34] sm:$0xf]
  %v44 = vld [vmem:[%s1 + $0x38] sm:$0xf]
  %v45 = vld [vmem:[%s1 + $0x3c] sm:$0xf]
  %v46 = vld [vmem:[%s1 + $0x40] sm:$0xf]
  %v47 = vld [vmem:[%s1 + $0x44] sm:$0xf]
  %v48 = vld [vmem:[%s1 + $0x48] sm:$0xf]
  %v49 = vld [vmem:[%s1 + $0x4c] sm:$0xf]
  %v50 = vld [vmem:[%s1 + $0x50] sm:$0xf]
  %v51 = vld [vmem:[%s1 + $0x54] sm:$0xf]
  %v52 = vld [vmem:[%s1 + $0x58] sm:$0xf]
  %v53 = vld [vmem:[%s1 + $0x5c] sm:$0xf]
  %v54 = vld [vmem:[%s1 + $0x60] sm:$0xf]
  %v55 = vld [vmem:[%s1 + $0x64] sm:$0xf]
  %v56 = vld [vmem:[%s1 + $0x68] sm:$0xf]
  %v57 = vld [vmem:[%s1 + $0x6c] sm:$0xf]
  %v58 = vld [vmem:[%s1 + $0x70] sm:$0xf]
  %v59 = vld [vmem:[%s1 + $0x74] sm:$0xf]
  %v60 = vld [vmem:[%s1 + $0x78] sm:$0xf]
  %v61 = vld [vmem:[%s1 + $0x7c] sm:$0xf]
  %v62 = vld [vmem:[%s2] sm:$0x1]
  %v64 = vperm.slane %v62, 0
  %v82 = vunpack.c.l.b16 %v14
  %v83 = vunpack.c.h.b16 %v14
  %v84 = vunpack.c.l.b16 %v15
  %v85 = vunpack.c.h.b16 %v15
  %v86 = vunpack.c.l.b16 %v16
  %v87 = vunpack.c.h.b16 %v16
  %v88 = vunpack.c.l.b16 %v17
  %v89 = vunpack.c.h.b16 %v17
  %v90 = vunpack.c.l.b16 %v18
  %v91 = vunpack.c.h.b16 %v18
  %v92 = vunpack.c.l.b16 %v19
  %v93 = vunpack.c.h.b16 %v19
  %v94 = vunpack.c.l.b16 %v20
  %v95 = vunpack.c.h.b16 %v20
  %v96 = vunpack.c.l.b16 %v21
  %v97 = vunpack.c.h.b16 %v21
  %v98 = vunpack.c.l.b16 %v22
  %v99 = vunpack.c.h.b16 %v22
  %v100 = vunpack.c.l.b16 %v23
  %v101 = vunpack.c.h.b16 %v23
  %v102 = vunpack.c.l.b16 %v24
  %v103 = vunpack.c.h.b16 %v24
  %v104 = vunpack.c.l.b16 %v25
  %v105 = vunpack.c.h.b16 %v25
  %v106 = vunpack.c.l.b16 %v26
  %v107 = vunpack.c.h.b16 %v26
  %v108 = vunpack.c.l.b16 %v27
  %v109 = vunpack.c.h.b16 %v27
  %v110 = vunpack.c.l.b16 %v28
  %v111 = vunpack.c.h.b16 %v28
  %v112 = vunpack.c.l.b16 %v29
  %v113 = vunpack.c.h.b16 %v29
  %v114 = vpack.c.b16 %v84, %v82
  %v115 = vpack.c.b16 %v85, %v83
  %v116 = vpack.c.b16 %v88, %v86
  %v117 = vpack.c.b16 %v89, %v87
  %v118 = vpack.c.b16 %v92, %v90
  %v119 = vpack.c.b16 %v93, %v91
  %v120 = vpack.c.b16 %v96, %v94
  %v121 = vpack.c.b16 %v97, %v95
  %v122 = vpack.c.b16 %v100, %v98
  %v123 = vpack.c.b16 %v101, %v99
  %v124 = vpack.c.b16 %v104, %v102
  %v125 = vpack.c.b16 %v105, %v103
  %v126 = vpack.c.b16 %v108, %v106
  %v127 = vpack.c.b16 %v109, %v107
  %v128 = vpack.c.b16 %v112, %v110
  %v129 = vpack.c.b16 %v113, %v111
  %v178 = vunpack.c.l.b16 %v30
  %v179 = vunpack.c.l.b16 %v31
  %v180 = vunpack.c.l.b16 %v32
  %v181 = vunpack.c.l.b16 %v33
  %v182 = vunpack.c.l.b16 %v34
  %v183 = vunpack.c.l.b16 %v35
  %v184 = vunpack.c.l.b16 %v36
  %v185 = vunpack.c.l.b16 %v37
  %v186 = vunpack.c.l.b16 %v38
  %v187 = vunpack.c.l.b16 %v39
  %v188 = vunpack.c.l.b16 %v40
  %v189 = vunpack.c.l.b16 %v41
  %v190 = vunpack.c.l.b16 %v42
  %v191 = vunpack.c.l.b16 %v43
  %v192 = vunpack.c.l.b16 %v44
  %v193 = vunpack.c.l.b16 %v45
  %v194 = vunpack.c.l.b16 %v46
  %v195 = vunpack.c.l.b16 %v47
  %v196 = vunpack.c.l.b16 %v48
  %v197 = vunpack.c.l.b16 %v49
  %v198 = vunpack.c.l.b16 %v50
  %v199 = vunpack.c.l.b16 %v51
  %v200 = vunpack.c.l.b16 %v52
  %v201 = vunpack.c.l.b16 %v53
  %v202 = vunpack.c.l.b16 %v54
  %v203 = vunpack.c.l.b16 %v55
  %v204 = vunpack.c.l.b16 %v56
  %v205 = vunpack.c.l.b16 %v57
  %v206 = vunpack.c.l.b16 %v58
  %v207 = vunpack.c.l.b16 %v59
  %v208 = vunpack.c.l.b16 %v60
  %v209 = vunpack.c.l.b16 %v61
  %v210 = vpack.c.b16 %v179, %v178
  %v211 = vpack.c.b16 %v181, %v180
  %v212 = vpack.c.b16 %v183, %v182
  %v213 = vpack.c.b16 %v185, %v184
  %v214 = vpack.c.b16 %v187, %v186
  %v215 = vpack.c.b16 %v189, %v188
  %v216 = vpack.c.b16 %v191, %v190
  %v217 = vpack.c.b16 %v193, %v192
  %v218 = vpack.c.b16 %v195, %v194
  %v219 = vpack.c.b16 %v197, %v196
  %v220 = vpack.c.b16 %v199, %v198
  %v221 = vpack.c.b16 %v201, %v200
  %v222 = vpack.c.b16 %v203, %v202
  %v223 = vpack.c.b16 %v205, %v204
  %v224 = vpack.c.b16 %v207, %v206
  %v225 = vpack.c.b16 %v209, %v208
  %242 = vmatpush.bf16.msra.mxu0 %v217
  %243 = vmatpush.bf16.msra.mxu0 %v216
  %244 = vmatpush.bf16.msra.mxu0 %v215
  %245 = vmatpush.bf16.msra.mxu0 %v214
  %246 = vmatpush.bf16.msra.mxu0 %v213
  %247 = vmatpush.bf16.msra.mxu0 %v212
  %248 = vmatpush.bf16.msra.mxu0 %v211
  %249 = vmatpush.bf16.msra.mxu0 %v210
  %250 = vmatmul.bf16.gmra.mxu0 %v114
  %v251 = vpop.f32.mrf.mxu0
  %v252 = vadd.f32 %v64, %v251
  %v253 = vpop.f32.mrf.mxu0
  %v254 = vadd.f32 %v64, %v253
  %255 = vmatmul.bf16.gmra.mxu0 %v116
  %v256 = vpop.f32.mrf.mxu0
  %v257 = vadd.f32 %v64, %v256
  %v258 = vpop.f32.mrf.mxu0
  %v259 = vadd.f32 %v64, %v258
  %260 = vmatmul.bf16.gmra.mxu0 %v118
  %v261 = vpop.f32.mrf.mxu0
  %v262 = vadd.f32 %v64, %v261
  %v263 = vpop.f32.mrf.mxu0
  %v264 = vadd.f32 %v64, %v263
  %265 = vmatmul.bf16.gmra.mxu0 %v120
  %v266 = vpop.f32.mrf.mxu0
  %v267 = vadd.f32 %v64, %v266
  %v268 = vpop.f32.mrf.mxu0
  %v269 = vadd.f32 %v64, %v268
  %270 = vmatmul.bf16.gmra.mxu0 %v122
  %v271 = vpop.f32.mrf.mxu0
  %v272 = vadd.f32 %v64, %v271
  %v273 = vpop.f32.mrf.mxu0
  %v274 = vadd.f32 %v64, %v273
  %275 = vmatmul.bf16.gmra.mxu0 %v124
  %v276 = vpop.f32.mrf.mxu0
  %v277 = vadd.f32 %v64, %v276
  %v278 = vpop.f32.mrf.mxu0
  %v279 = vadd.f32 %v64, %v278
  %280 = vmatmul.bf16.gmra.mxu0 %v126
  %v281 = vpop.f32.mrf.mxu0
  %v282 = vadd.f32 %v64, %v281
  %v283 = vpop.f32.mrf.mxu0
  %v284 = vadd.f32 %v64, %v283
  %285 = vmatmul.bf16.gmra.mxu0 %v128
  %v286 = vpop.f32.mrf.mxu0
  %v287 = vadd.f32 %v64, %v286
  %v288 = vpop.f32.mrf.mxu0
  %v289 = vadd.f32 %v64, %v288
  %290 = vdwg.mxu0
  %291 = vmatpush.bf16.msra.mxu0 %v225
  %292 = vmatpush.bf16.msra.mxu0 %v224
  %293 = vmatpush.bf16.msra.mxu0 %v223
  %294 = vmatpush.bf16.msra.mxu0 %v222
  %295 = vmatpush.bf16.msra.mxu0 %v221
  %296 = vmatpush.bf16.msra.mxu0 %v220
  %297 = vmatpush.bf16.msra.mxu0 %v219
  %298 = vmatpush.bf16.msra.mxu0 %v218
  %299 = vmatmul.bf16.gmra.mxu0 %v115
  %v300 = vpop.f32.mrf.mxu0
  %v301 = vadd.f32 %v252, %v300
  %v302 = vpop.f32.mrf.mxu0
  %v303 = vadd.f32 %v254, %v302
  %304 = vmatmul.bf16.gmra.mxu0 %v117
  %v305 = vpop.f32.mrf.mxu0
  %v306 = vadd.f32 %v257, %v305
  %v307 = vpop.f32.mrf.mxu0
  %v308 = vadd.f32 %v259, %v307
  %309 = vmatmul.bf16.gmra.mxu0 %v119
  %v310 = vpop.f32.mrf.mxu0
  %v311 = vadd.f32 %v262, %v310
  %v312 = vpop.f32.mrf.mxu0
  %v313 = vadd.f32 %v264, %v312
  %314 = vmatmul.bf16.gmra.mxu0 %v121
  %v315 = vpop.f32.mrf.mxu0
  %v316 = vadd.f32 %v267, %v315
  %v317 = vpop.f32.mrf.mxu0
  %v318 = vadd.f32 %v269, %v317
  %319 = vmatmul.bf16.gmra.mxu0 %v123
  %v320 = vpop.f32.mrf.mxu0
  %v321 = vadd.f32 %v272, %v320
  %v322 = vpop.f32.mrf.mxu0
  %v323 = vadd.f32 %v274, %v322
  %324 = vmatmul.bf16.gmra.mxu0 %v125
  %v325 = vpop.f32.mrf.mxu0
  %v326 = vadd.f32 %v277, %v325
  %v327 = vpop.f32.mrf.mxu0
  %v328 = vadd.f32 %v279, %v327
  %329 = vmatmul.bf16.gmra.mxu0 %v127
  %v330 = vpop.f32.mrf.mxu0
  %v331 = vadd.f32 %v282, %v330
  %v332 = vpop.f32.mrf.mxu0
  %v333 = vadd.f32 %v284, %v332
  %334 = vmatmul.bf16.gmra.mxu0 %v129
  %v335 = vpop.f32.mrf.mxu0
  %v336 = vadd.f32 %v287, %v335
  %v337 = vpop.f32.mrf.mxu0
  %v338 = vadd.f32 %v289, %v337
  %339 = vdwg.mxu0
  %v340 = vtanh.pop %v301
  %v341 = vtanh.pop %v303
  %v342 = vtanh.pop %v306
  %v343 = vtanh.pop %v308
  %v344 = vtanh.pop %v311
  %v345 = vtanh.pop %v313
  %v346 = vtanh.pop %v316
  %v347 = vtanh.pop %v318
  %v348 = vtanh.pop %v321
  %v349 = vtanh.pop %v323
  %v350 = vtanh.pop %v326
  %v351 = vtanh.pop %v328
  %v352 = vtanh.pop %v331
  %v353 = vtanh.pop %v333
  %v354 = vtanh.pop %v336
  %v355 = vtanh.pop %v338
  %356 = vst [vmem:[%s3] sm:$0xff] %v340
  %357 = vst [vmem:[%s3 + $0x8] sm:$0xff] %v341
  %358 = vst [vmem:[%s3 + $0x10] sm:$0xff] %v342
  %359 = vst [vmem:[%s3 + $0x18] sm:$0xff] %v343
  %360 = vst [vmem:[%s3 + $0x20] sm:$0xff] %v344
  %361 = vst [vmem:[%s3 + $0x28] sm:$0xff] %v345
  %362 = vst [vmem:[%s3 + $0x30] sm:$0xff] %v346
  %363 = vst [vmem:[%s3 + $0x38] sm:$0xff] %v347
  %364 = vst [vmem:[%s3 + $0x40] sm:$0xff] %v348
  %365 = vst [vmem:[%s3 + $0x48] sm:$0xff] %v349
  %366 = vst [vmem:[%s3 + $0x50] sm:$0xff] %v350
  %367 = vst [vmem:[%s3 + $0x58] sm:$0xff] %v351
  %368 = vst [vmem:[%s3 + $0x60] sm:$0xff] %v352
  %369 = vst [vmem:[%s3 + $0x68] sm:$0xff] %v353
  %370 = vst [vmem:[%s3 + $0x70] sm:$0xff] %v354
  %371 = vst [vmem:[%s3 + $0x78] sm:$0xff] %v355
  // Predicated region
  $region14: #{autoencoder_forward.11} parent=0 // pred_check
    _
  $region15: #{autoencoder_forward.11} parent=0 // pred_check_branch
    %373 = sbr.rel (0) target = $region17
  $region16: #{autoencoder_forward.11} parent=0 // pred_region
    _
  $region17: #{autoencoder_forward.11} parent=0 // pred_fallthru
    _
  // Predicated region
  $region18: #{autoencoder_forward.11} parent=0 // pred_check
    _
  $region19: #{autoencoder_forward.11} parent=0 // pred_check_branch
    %375 = sbr.rel (0) target = $region21
  $region20: #{autoencoder_forward.11} parent=0 // pred_region
    _
  $region21: #{autoencoder_forward.11} parent=0 // pred_fallthru
    _

</llo_original>
